<compile_context>
chip_gen: v7x
topology: tpu7x:2x2x1
jax: 0.10.0
libtpu: 0.0.40
codegen_flags: <defaults>
</compile_context>

<pallas_src>
import jax
import jax.numpy as jnp
from jax import lax
from jax.experimental import pallas as pl
from jax.experimental.pallas import tpu as pltpu

EPS = 1e-5
K = 3          # kernel_size
P = 1          # padding = (K - 1) // 2
HALO_PAD = 8   # extra rows per sample so the per-sample slab stride is 8-aligned


def residual_block_kernel(x_ref, bn_scale_ref, bn_shift_ref, b1_ref,
                          ln_g_ref, ln_b_ref, b2_ref, bias2_ref,
                          o_ref, pad_ref):
    # x_ref / o_ref blocks are (TB, H, W*C) lane-dense views of TB samples.
    TB, H, WC = x_ref.shape
    S = H + HALO_PAD                 # per-sample row stride in the padded slab
    L = (TB - 1) * S + H             # matmul M dimension (multiple of 8)
    inv_hwc = 1.0 / (H * WC)
    zero_row = jnp.zeros((1, WC), jnp.float32)

    # ---- BatchNorm2d (batch stats pre-folded into scale/shift) + ReLU ------
    # Each sample's activation goes into its own H-row window of the slab; the
    # single zero row above/below implements the conv's H zero padding.  The
    # 2*TB tiny halo stores are kept per-step so the kernel stays correct under
    # megacore partitioning of the parallel grid; rows past the bottom halo of
    # each sample only ever feed discarded matmul rows and are never zeroed.
    for t in range(TB):
        base = t * S
        y_t = jnp.maximum(x_ref[t] * bn_scale_ref[...] + bn_shift_ref[...], 0.0)
        pad_ref[base:base + 1, :] = zero_row
        pad_ref[base + H + 1:base + H + 2, :] = zero_row
        pad_ref[base + 1:base + 1 + H, :] = y_t

    # ---- conv_1 (bias=False): one banded matmul per kernel row dy ----------
    # bf16 operands, f32 accumulation.  Row t*S + h of `a` is sample t, row h.
    a = jnp.dot(pad_ref[0:L, :].astype(jnp.bfloat16), b1_ref[0],
                preferred_element_type=jnp.float32)
    a = a + jnp.dot(pad_ref[1:L + 1, :].astype(jnp.bfloat16), b1_ref[1],
                    preferred_element_type=jnp.float32)
    a = a + jnp.dot(pad_ref[2:L + 2, :].astype(jnp.bfloat16), b1_ref[2],
                    preferred_element_type=jnp.float32)

    # ---- LayerNorm([C,H,W]) per sample (two-pass, f32) + ReLU --------------
    for t in range(TB):
        base = t * S
        a_t = a[base:base + H]                         # 8-aligned value slice
        mu = jnp.sum(a_t, keepdims=True) * inv_hwc
        d = a_t - mu
        var = jnp.sum(d * d, keepdims=True) * inv_hwc
        z_t = d * lax.rsqrt(var + EPS) * ln_g_ref[...] + ln_b_ref[...]
        pad_ref[base + 1:base + 1 + H, :] = jnp.maximum(z_t, 0.0)
    # Halo rows are still zero from above; junk rows are never consumed.

    # ---- conv_2: banded matmuls; bias folded into the residual store -------
    r = jnp.dot(pad_ref[0:L, :].astype(jnp.bfloat16), b2_ref[0],
                preferred_element_type=jnp.float32)
    r = r + jnp.dot(pad_ref[1:L + 1, :].astype(jnp.bfloat16), b2_ref[1],
                    preferred_element_type=jnp.float32)
    r = r + jnp.dot(pad_ref[2:L + 2, :].astype(jnp.bfloat16), b2_ref[2],
                    preferred_element_type=jnp.float32)

    # ---- residual add (identity shortcut: Cin == Cout, resample=None) ------
    for t in range(TB):
        base = t * S
        o_ref[t] = x_ref[t] + r[base:base + H] + bias2_ref[...]


def _banded_conv_weights(w_oihw, width):
    """Pack OIHW KxK conv weights into K banded block-Toeplitz matrices.

    Returns B of shape (K, width*Cin, width*Cout) such that, with lane-dense
    activation rows row_r of shape (width*Cin,) (zero for r outside [0, H)):
        out[h, wo*Cout + co] = sum_dy (row_{h+dy-P} @ B[dy])[wo*Cout + co]
    W-boundary zero padding is implicit: the band is clipped at matrix edges.
    """
    Cout, Cin, K_, _ = w_oihw.shape
    wt = jnp.transpose(w_oihw, (2, 3, 1, 0))            # (Kdy, Kdx, Cin, Cout)
    strip = wt.reshape(K_, K_ * Cin, Cout)              # per dy: dx taps stacked
    cols = []
    for wo in range(width):                             # constant-foldable repack
        cols.append(jnp.pad(strip,
                            ((0, 0), (wo * Cin, (width - 1 - wo) * Cin), (0, 0))))
    full = jnp.concatenate(cols, axis=2)                # (K, (width+K-1)*Cin, width*Cout)
    return full[:, P * Cin:(width + P) * Cin, :]        # clip -> (K, width*Cin, width*Cout)


def residual_block_pallas(x_nchw, bn_g, bn_b, w1_oihw, ln_g_chw, ln_b_chw,
                          w2_oihw, b2):
    N, C, H, W = x_nchw.shape
    Co = w2_oihw.shape[0]
    assert Co == C, "resample=None shortcut path needs input_dim == output_dim"
    assert w1_oihw.shape[2] == K and w2_oihw.shape[2] == K
    WC, WCo = W * C, W * Co
    assert H % 8 == 0 and WC % 128 == 0, "pad H to 8 / W*C to 128 for TPU tiling"

    # Samples per grid step: raises MXU M-occupancy and amortizes the ~0.35us
    # per-step overhead (largest divisor of N up to 8).
    TB = 1
    for cand in range(min(N, 8), 0, -1):
        if N % cand == 0:
            TB = cand
            break

    x_f32 = x_nchw.astype(jnp.float32)

    # BatchNorm2d batch statistics (the only cross-sample reduction) computed
    # once here, two-pass, and folded into a per-channel scale/shift so the
    # Pallas grid below stays fully sample-parallel (megacore / v7x friendly).
    mu = jnp.mean(x_f32, axis=(0, 2, 3))
    var = jnp.var(x_f32, axis=(0, 2, 3))
    bn_scale = bn_g * lax.rsqrt(var + EPS)
    bn_shift = bn_b - mu * bn_scale

    # Layout plumbing: NCHW -> lane-dense (N, H, W*C).  In an NHWC-native model
    # these activation transposes disappear; the weight/affine repacks below
    # are parameter-only constants that should be cached per weight update.
    x = jnp.transpose(x_f32, (0, 2, 3, 1)).reshape(N, H, WC)
    ln_g = jnp.transpose(ln_g_chw, (1, 2, 0)).reshape(H, WC)
    ln_b = jnp.transpose(ln_b_chw, (1, 2, 0)).reshape(H, WC)
    bn_scale_t = jnp.tile(bn_scale, W)[None, :]          # (1, W*C)
    bn_shift_t = jnp.tile(bn_shift, W)[None, :]          # (1, W*C)
    bias2_t = jnp.tile(b2, W)[None, :]                   # (1, W*Co)
    B1 = _banded_conv_weights(w1_oihw, W).astype(jnp.bfloat16)   # (K, W*C, W*C)
    B2 = _banded_conv_weights(w2_oihw, W).astype(jnp.bfloat16)   # (K, W*C, W*Co)

    S = H + HALO_PAD
    slab_rows = (TB - 1) * S + H + HALO_PAD   # >= L + 2, multiple of 8

    out = pl.pallas_call(
        residual_block_kernel,
        out_shape=jax.ShapeDtypeStruct((N, H, WCo), jnp.float32),
        grid=(N // TB,),
        in_specs=[
            pl.BlockSpec((TB, H, WC), lambda n: (n, 0, 0)),     # x (TB samples)
            pl.BlockSpec((1, WC), lambda n: (0, 0)),            # BN scale (tiled)
            pl.BlockSpec((1, WC), lambda n: (0, 0)),            # BN shift (tiled)
            pl.BlockSpec((K, WC, WC), lambda n: (0, 0, 0)),     # conv_1 banded W (bf16)
            pl.BlockSpec((H, WC), lambda n: (0, 0)),            # LN gamma
            pl.BlockSpec((H, WC), lambda n: (0, 0)),            # LN beta
            pl.BlockSpec((K, WC, WCo), lambda n: (0, 0, 0)),    # conv_2 banded W (bf16)
            pl.BlockSpec((1, WCo), lambda n: (0, 0)),           # conv_2 bias (tiled)
        ],
        out_specs=pl.BlockSpec((TB, H, WCo), lambda n: (n, 0, 0)),
        scratch_shapes=[pltpu.VMEM((slab_rows, WC), jnp.float32)],  # row-padded slab
        compiler_params=pltpu.CompilerParams(
            dimension_semantics=("parallel",),
            # Footprint ~6.5 MiB after bf16 weights (double-buffered); 16 MiB
            # fits v5e's default scoped VMEM and leaves v7x (64 MiB/TC) slack.
            vmem_limit_bytes=16 * 1024 * 1024),
    )(x, bn_scale_t, bn_shift_t, B1, ln_g, ln_b, B2, bias2_t)

    return jnp.transpose(out.reshape(N, H, W, Co), (0, 3, 1, 2))   # back to NCHW


def residual_block_ref(x, bn_g, bn_b, w1, ln_g, ln_b, w2, b2):
    # Pure-JAX reference mirroring the PyTorch forward (NCHW, f32 convs).
    dn = ('NCHW', 'OIHW', 'NCHW')
    mu = jnp.mean(x, axis=(0, 2, 3), keepdims=True)
    var = jnp.mean((x - mu) ** 2, axis=(0, 2, 3), keepdims=True)
    y = (x - mu) / jnp.sqrt(var + EPS)
    y = y * bn_g[None, :, None, None] + bn_b[None, :, None, None]
    y = jax.nn.relu(y)
    y = lax.conv_general_dilated(y, w1, (1, 1), 'SAME', dimension_numbers=dn,
                                 precision=lax.Precision.HIGHEST)
    lmu = jnp.mean(y, axis=(1, 2, 3), keepdims=True)
    lvar = jnp.mean((y - lmu) ** 2, axis=(1, 2, 3), keepdims=True)
    z = (y - lmu) / jnp.sqrt(lvar + EPS) * ln_g[None] + ln_b[None]
    z = jax.nn.relu(z)
    z = lax.conv_general_dilated(z, w2, (1, 1), 'SAME', dimension_numbers=dn,
                                 precision=lax.Precision.HIGHEST)
    z = z + b2[None, :, None, None]
    return x + z


if __name__ == "__main__":
    N, C, H, W = 2, 32, 16, 16   # input_dim == output_dim == 32, hw == 16
    Co = C

    key = jax.random.PRNGKey(0)
    ks = jax.random.split(key, 8)
    x = jax.random.normal(ks[0], (N, C, H, W), jnp.float32)
    bn_g = 1.0 + 0.1 * jax.random.normal(ks[1], (C,), jnp.float32)
    bn_b = 0.1 * jax.random.normal(ks[2], (C,), jnp.float32)
    w1 = 0.1 * jax.random.normal(ks[3], (C, C, K, K), jnp.float32)     # OIHW
    ln_g = 1.0 + 0.1 * jax.random.normal(ks[4], (C, H, W), jnp.float32)
    ln_b = 0.1 * jax.random.normal(ks[5], (C, H, W), jnp.float32)
    w2 = 0.1 * jax.random.normal(ks[6], (Co, C, K, K), jnp.float32)    # OIHW
    b2 = 0.1 * jax.random.normal(ks[7], (Co,), jnp.float32)

    fn = jax.jit(residual_block_pallas)
    out = jax.block_until_ready(fn(x, bn_g, bn_b, w1, ln_g, ln_b, w2, b2))

    ref = residual_block_ref(x, bn_g, bn_b, w1, ln_g, ln_b, w2, b2)
    assert out.shape == (N, Co, H, W), out.shape
    # Tolerance sized for bf16 conv operands (f32 accumulation) through two
    # 3x3 convs, compared against an all-f32 HIGHEST-precision reference.
    assert jnp.allclose(out, ref, atol=3e-2, rtol=3e-2), float(
        jnp.max(jnp.abs(out - ref)))

    print("KERNEL_OK")
</pallas_src>

<mosaic_0001>
module attributes {stable_mosaic.version = 11 : i64} {
  func.func @residual_block_kernel(%arg0: i32, %arg1: memref<2x16x512xf32, #tpu.memory_space<vmem>>, %arg2: memref<1x512xf32, #tpu.memory_space<vmem>>, %arg3: memref<1x512xf32, #tpu.memory_space<vmem>>, %arg4: memref<3x512x512xbf16, #tpu.memory_space<vmem>>, %arg5: memref<16x512xf32, #tpu.memory_space<vmem>>, %arg6: memref<16x512xf32, #tpu.memory_space<vmem>>, %arg7: memref<3x512x512xbf16, #tpu.memory_space<vmem>>, %arg8: memref<1x512xf32, #tpu.memory_space<vmem>>, %arg9: memref<2x16x512xf32, #tpu.memory_space<vmem>>, %arg10: memref<48x512xf32, #tpu.memory_space<vmem>>) attributes {dimension_semantics = [#tpu.dimension_semantics<parallel>], iteration_bounds = array<i64: 1>, scalar_prefetch = 0 : i64, scratch_operands = 1 : i64, tpu.core_type = #tpu.core_type<tc>, window_params = [{transform_indices = @transform_0, window_bounds = array<i64: 2, 16, 512>}, {pipeline_mode = #tpu.pipeline_mode<synchronous>, transform_indices = @transform_1, window_bounds = array<i64: 1, 512>}, {pipeline_mode = #tpu.pipeline_mode<synchronous>, transform_indices = @transform_2, window_bounds = array<i64: 1, 512>}, {pipeline_mode = #tpu.pipeline_mode<synchronous>, transform_indices = @transform_3, window_bounds = array<i64: 3, 512, 512>}, {pipeline_mode = #tpu.pipeline_mode<synchronous>, transform_indices = @transform_4, window_bounds = array<i64: 16, 512>}, {pipeline_mode = #tpu.pipeline_mode<synchronous>, transform_indices = @transform_5, window_bounds = array<i64: 16, 512>}, {pipeline_mode = #tpu.pipeline_mode<synchronous>, transform_indices = @transform_6, window_bounds = array<i64: 3, 512, 512>}, {pipeline_mode = #tpu.pipeline_mode<synchronous>, transform_indices = @transform_7, window_bounds = array<i64: 1, 512>}, {transform_indices = @transform_8, window_bounds = array<i64: 2, 16, 512>}]} {
    %cst = arith.constant 0.000000e+00 : f32
    %0 = vector.broadcast %cst : f32 to vector<1x512xf32>
    %c0 = arith.constant 0 : index
    %c0_0 = arith.constant 0 : index
    %c0_1 = arith.constant 0 : index
    %1 = vector.load %arg1[%c0, %c0_0, %c0_1] : memref<2x16x512xf32, #tpu.memory_space<vmem>>, vector<1x16x512xf32>
    %2 = vector.shape_cast %1 : vector<1x16x512xf32> to vector<16x512xf32>
    %c0_2 = arith.constant 0 : index
    %c0_3 = arith.constant 0 : index
    %3 = vector.load %arg2[%c0_2, %c0_3] : memref<1x512xf32, #tpu.memory_space<vmem>>, vector<1x512xf32>
    %4 = vector.broadcast %3 : vector<1x512xf32> to vector<16x512xf32>
    %5 = arith.mulf %2, %4 : vector<16x512xf32>
    %c0_4 = arith.constant 0 : index
    %c0_5 = arith.constant 0 : index
    %6 = vector.load %arg3[%c0_4, %c0_5] : memref<1x512xf32, #tpu.memory_space<vmem>>, vector<1x512xf32>
    %7 = vector.broadcast %6 : vector<1x512xf32> to vector<16x512xf32>
    %8 = arith.addf %5, %7 : vector<16x512xf32>
    %cst_6 = arith.constant 0.000000e+00 : f32
    %9 = vector.broadcast %cst_6 : f32 to vector<16x512xf32>
    %10 = arith.maximumf %8, %9 : vector<16x512xf32>
    %c0_7 = arith.constant 0 : index
    %c0_8 = arith.constant 0 : index
    %11 = vector.load %arg10[%c0_7, %c0_8] : memref<48x512xf32, #tpu.memory_space<vmem>>, vector<1x512xf32>
    tpu.vector_store %arg10[%c0_7, %c0_8], %0 {strides = array<i32>} : memref<48x512xf32, #tpu.memory_space<vmem>>, vector<1x512xf32>,
    %c17 = arith.constant 17 : index
    %c0_9 = arith.constant 0 : index
    %12 = vector.load %arg10[%c17, %c0_9] : memref<48x512xf32, #tpu.memory_space<vmem>>, vector<1x512xf32>
    tpu.vector_store %arg10[%c17, %c0_9], %0 {strides = array<i32>} : memref<48x512xf32, #tpu.memory_space<vmem>>, vector<1x512xf32>,
    %c1 = arith.constant 1 : index
    %c0_10 = arith.constant 0 : index
    %13 = vector.load %arg10[%c1, %c0_10] : memref<48x512xf32, #tpu.memory_space<vmem>>, vector<16x512xf32>
    tpu.vector_store %arg10[%c1, %c0_10], %10 {strides = array<i32>} : memref<48x512xf32, #tpu.memory_space<vmem>>, vector<16x512xf32>,
    %c1_11 = arith.constant 1 : index
    %c0_12 = arith.constant 0 : index
    %c0_13 = arith.constant 0 : index
    %14 = vector.load %arg1[%c1_11, %c0_12, %c0_13] : memref<2x16x512xf32, #tpu.memory_space<vmem>>, vector<1x16x512xf32>
    %15 = vector.shape_cast %14 : vector<1x16x512xf32> to vector<16x512xf32>
    %c0_14 = arith.constant 0 : index
    %c0_15 = arith.constant 0 : index
    %16 = vector.load %arg2[%c0_14, %c0_15] : memref<1x512xf32, #tpu.memory_space<vmem>>, vector<1x512xf32>
    %17 = vector.broadcast %16 : vector<1x512xf32> to vector<16x512xf32>
    %18 = arith.mulf %15, %17 : vector<16x512xf32>
    %c0_16 = arith.constant 0 : index
    %c0_17 = arith.constant 0 : index
    %19 = vector.load %arg3[%c0_16, %c0_17] : memref<1x512xf32, #tpu.memory_space<vmem>>, vector<1x512xf32>
    %20 = vector.broadcast %19 : vector<1x512xf32> to vector<16x512xf32>
    %21 = arith.addf %18, %20 : vector<16x512xf32>
    %cst_18 = arith.constant 0.000000e+00 : f32
    %22 = vector.broadcast %cst_18 : f32 to vector<16x512xf32>
    %23 = arith.maximumf %21, %22 : vector<16x512xf32>
    %c24 = arith.constant 24 : index
    %c0_19 = arith.constant 0 : index
    %24 = vector.load %arg10[%c24, %c0_19] : memref<48x512xf32, #tpu.memory_space<vmem>>, vector<1x512xf32>
    tpu.vector_store %arg10[%c24, %c0_19], %0 {strides = array<i32>} : memref<48x512xf32, #tpu.memory_space<vmem>>, vector<1x512xf32>,
    %c41 = arith.constant 41 : index
    %c0_20 = arith.constant 0 : index
    %25 = vector.load %arg10[%c41, %c0_20] : memref<48x512xf32, #tpu.memory_space<vmem>>, vector<1x512xf32>
    tpu.vector_store %arg10[%c41, %c0_20], %0 {strides = array<i32>} : memref<48x512xf32, #tpu.memory_space<vmem>>, vector<1x512xf32>,
    %c25 = arith.constant 25 : index
    %c0_21 = arith.constant 0 : index
    %26 = vector.load %arg10[%c25, %c0_21] : memref<48x512xf32, #tpu.memory_space<vmem>>, vector<16x512xf32>
    tpu.vector_store %arg10[%c25, %c0_21], %23 {strides = array<i32>} : memref<48x512xf32, #tpu.memory_space<vmem>>, vector<16x512xf32>,
    %c0_22 = arith.constant 0 : index
    %c0_23 = arith.constant 0 : index
    %27 = vector.load %arg10[%c0_22, %c0_23] : memref<48x512xf32, #tpu.memory_space<vmem>>, vector<40x512xf32>
    %28 = arith.truncf %27 : vector<40x512xf32> to vector<40x512xbf16>
    %c0_24 = arith.constant 0 : index
    %c0_25 = arith.constant 0 : index
    %c0_26 = arith.constant 0 : index
    %29 = vector.load %arg4[%c0_24, %c0_25, %c0_26] : memref<3x512x512xbf16, #tpu.memory_space<vmem>>, vector<1x512x512xbf16>
    %30 = vector.shape_cast %29 : vector<1x512x512xbf16> to vector<512x512xbf16>
    %cst_27 = arith.constant dense<0.000000e+00> : vector<40x512xf32>
    %31 = tpu.matmul %28, %30, %cst_27 {dimension_numbers = #tpu.dot_dimension_numbers<[1], [0], [0], [1], [0, 0, 1, 1], [], []>} : vector<40x512xbf16>, vector<512x512xbf16>, vector<40x512xf32> -> vector<40x512xf32>
    %c1_28 = arith.constant 1 : index
    %c0_29 = arith.constant 0 : index
    %32 = vector.load %arg10[%c1_28, %c0_29] : memref<48x512xf32, #tpu.memory_space<vmem>>, vector<40x512xf32>
    %33 = arith.truncf %32 : vector<40x512xf32> to vector<40x512xbf16>
    %c1_30 = arith.constant 1 : index
    %c0_31 = arith.constant 0 : index
    %c0_32 = arith.constant 0 : index
    %34 = vector.load %arg4[%c1_30, %c0_31, %c0_32] : memref<3x512x512xbf16, #tpu.memory_space<vmem>>, vector<1x512x512xbf16>
    %35 = vector.shape_cast %34 : vector<1x512x512xbf16> to vector<512x512xbf16>
    %cst_33 = arith.constant dense<0.000000e+00> : vector<40x512xf32>
    %36 = tpu.matmul %33, %35, %cst_33 {dimension_numbers = #tpu.dot_dimension_numbers<[1], [0], [0], [1], [0, 0, 1, 1], [], []>} : vector<40x512xbf16>, vector<512x512xbf16>, vector<40x512xf32> -> vector<40x512xf32>
    %37 = arith.addf %31, %36 : vector<40x512xf32>
    %c2 = arith.constant 2 : index
    %c0_34 = arith.constant 0 : index
    %38 = vector.load %arg10[%c2, %c0_34] : memref<48x512xf32, #tpu.memory_space<vmem>>, vector<40x512xf32>
    %39 = arith.truncf %38 : vector<40x512xf32> to vector<40x512xbf16>
    %c2_35 = arith.constant 2 : index
    %c0_36 = arith.constant 0 : index
    %c0_37 = arith.constant 0 : index
    %40 = vector.load %arg4[%c2_35, %c0_36, %c0_37] : memref<3x512x512xbf16, #tpu.memory_space<vmem>>, vector<1x512x512xbf16>
    %41 = vector.shape_cast %40 : vector<1x512x512xbf16> to vector<512x512xbf16>
    %cst_38 = arith.constant dense<0.000000e+00> : vector<40x512xf32>
    %42 = tpu.matmul %39, %41, %cst_38 {dimension_numbers = #tpu.dot_dimension_numbers<[1], [0], [0], [1], [0, 0, 1, 1], [], []>} : vector<40x512xbf16>, vector<512x512xbf16>, vector<40x512xf32> -> vector<40x512xf32>
    %43 = arith.addf %37, %42 : vector<40x512xf32>
    %44 = vector.extract_strided_slice %43 {offsets = [0, 0], sizes = [16, 512], strides = [1, 1]} : vector<40x512xf32> to vector<16x512xf32>
    %45 = vector.shape_cast %44 : vector<16x512xf32> to vector<1x16x512xf32>
    %cst_39 = arith.constant dense<0.000000e+00> : vector<1xf32>
    %46 = vector.multi_reduction <add>, %45, %cst_39 [1, 2] : vector<1x16x512xf32> to vector<1xf32>
    %47 = vector.shape_cast %46 : vector<1xf32> to vector<1x1x1xf32>
    %48 = vector.extract %47[0, 0, 0] : f32 from vector<1x1x1xf32>
    %49 = vector.broadcast %48 : f32 to vector<1x1xf32>
    %cst_40 = arith.constant 1.22070313E-4 : f32
    %50 = vector.broadcast %cst_40 : f32 to vector<1x1xf32>
    %51 = arith.mulf %49, %50 : vector<1x1xf32>
    %52 = vector.broadcast %51 : vector<1x1xf32> to vector<16x512xf32>
    %53 = arith.subf %44, %52 : vector<16x512xf32>
    %54 = arith.mulf %53, %53 : vector<16x512xf32>
    %55 = vector.shape_cast %54 : vector<16x512xf32> to vector<1x16x512xf32>
    %cst_41 = arith.constant dense<0.000000e+00> : vector<1xf32>
    %56 = vector.multi_reduction <add>, %55, %cst_41 [1, 2] : vector<1x16x512xf32> to vector<1xf32>
    %57 = vector.shape_cast %56 : vector<1xf32> to vector<1x1x1xf32>
    %58 = vector.extract %57[0, 0, 0] : f32 from vector<1x1x1xf32>
    %59 = vector.broadcast %58 : f32 to vector<1x1xf32>
    %cst_42 = arith.constant 1.22070313E-4 : f32
    %60 = vector.broadcast %cst_42 : f32 to vector<1x1xf32>
    %61 = arith.mulf %59, %60 : vector<1x1xf32>
    %cst_43 = arith.constant 9.99999974E-6 : f32
    %62 = vector.broadcast %cst_43 : f32 to vector<1x1xf32>
    %63 = arith.addf %61, %62 : vector<1x1xf32>
    %64 = math.rsqrt %63 : vector<1x1xf32>
    %65 = vector.broadcast %64 : vector<1x1xf32> to vector<16x512xf32>
    %66 = arith.mulf %53, %65 : vector<16x512xf32>
    %c0_44 = arith.constant 0 : index
    %c0_45 = arith.constant 0 : index
    %67 = vector.load %arg5[%c0_44, %c0_45] : memref<16x512xf32, #tpu.memory_space<vmem>>, vector<16x512xf32>
    %68 = arith.mulf %66, %67 : vector<16x512xf32>
    %c0_46 = arith.constant 0 : index
    %c0_47 = arith.constant 0 : index
    %69 = vector.load %arg6[%c0_46, %c0_47] : memref<16x512xf32, #tpu.memory_space<vmem>>, vector<16x512xf32>
    %70 = arith.addf %68, %69 : vector<16x512xf32>
    %cst_48 = arith.constant 0.000000e+00 : f32
    %71 = vector.broadcast %cst_48 : f32 to vector<16x512xf32>
    %72 = arith.maximumf %70, %71 : vector<16x512xf32>
    %c1_49 = arith.constant 1 : index
    %c0_50 = arith.constant 0 : index
    %73 = vector.load %arg10[%c1_49, %c0_50] : memref<48x512xf32, #tpu.memory_space<vmem>>, vector<16x512xf32>
    tpu.vector_store %arg10[%c1_49, %c0_50], %72 {strides = array<i32>} : memref<48x512xf32, #tpu.memory_space<vmem>>, vector<16x512xf32>,
    %74 = vector.extract_strided_slice %43 {offsets = [24, 0], sizes = [16, 512], strides = [1, 1]} : vector<40x512xf32> to vector<16x512xf32>
    %75 = vector.shape_cast %74 : vector<16x512xf32> to vector<1x16x512xf32>
    %cst_51 = arith.constant dense<0.000000e+00> : vector<1xf32>
    %76 = vector.multi_reduction <add>, %75, %cst_51 [1, 2] : vector<1x16x512xf32> to vector<1xf32>
    %77 = vector.shape_cast %76 : vector<1xf32> to vector<1x1x1xf32>
    %78 = vector.extract %77[0, 0, 0] : f32 from vector<1x1x1xf32>
    %79 = vector.broadcast %78 : f32 to vector<1x1xf32>
    %cst_52 = arith.constant 1.22070313E-4 : f32
    %80 = vector.broadcast %cst_52 : f32 to vector<1x1xf32>
    %81 = arith.mulf %79, %80 : vector<1x1xf32>
    %82 = vector.broadcast %81 : vector<1x1xf32> to vector<16x512xf32>
    %83 = arith.subf %74, %82 : vector<16x512xf32>
    %84 = arith.mulf %83, %83 : vector<16x512xf32>
    %85 = vector.shape_cast %84 : vector<16x512xf32> to vector<1x16x512xf32>
    %cst_53 = arith.constant dense<0.000000e+00> : vector<1xf32>
    %86 = vector.multi_reduction <add>, %85, %cst_53 [1, 2] : vector<1x16x512xf32> to vector<1xf32>
    %87 = vector.shape_cast %86 : vector<1xf32> to vector<1x1x1xf32>
    %88 = vector.extract %87[0, 0, 0] : f32 from vector<1x1x1xf32>
    %89 = vector.broadcast %88 : f32 to vector<1x1xf32>
    %cst_54 = arith.constant 1.22070313E-4 : f32
    %90 = vector.broadcast %cst_54 : f32 to vector<1x1xf32>
    %91 = arith.mulf %89, %90 : vector<1x1xf32>
    %cst_55 = arith.constant 9.99999974E-6 : f32
    %92 = vector.broadcast %cst_55 : f32 to vector<1x1xf32>
    %93 = arith.addf %91, %92 : vector<1x1xf32>
    %94 = math.rsqrt %93 : vector<1x1xf32>
    %95 = vector.broadcast %94 : vector<1x1xf32> to vector<16x512xf32>
    %96 = arith.mulf %83, %95 : vector<16x512xf32>
    %c0_56 = arith.constant 0 : index
    %c0_57 = arith.constant 0 : index
    %97 = vector.load %arg5[%c0_56, %c0_57] : memref<16x512xf32, #tpu.memory_space<vmem>>, vector<16x512xf32>
    %98 = arith.mulf %96, %97 : vector<16x512xf32>
    %c0_58 = arith.constant 0 : index
    %c0_59 = arith.constant 0 : index
    %99 = vector.load %arg6[%c0_58, %c0_59] : memref<16x512xf32, #tpu.memory_space<vmem>>, vector<16x512xf32>
    %100 = arith.addf %98, %99 : vector<16x512xf32>
    %cst_60 = arith.constant 0.000000e+00 : f32
    %101 = vector.broadcast %cst_60 : f32 to vector<16x512xf32>
    %102 = arith.maximumf %100, %101 : vector<16x512xf32>
    %c25_61 = arith.constant 25 : index
    %c0_62 = arith.constant 0 : index
    %103 = vector.load %arg10[%c25_61, %c0_62] : memref<48x512xf32, #tpu.memory_space<vmem>>, vector<16x512xf32>
    tpu.vector_store %arg10[%c25_61, %c0_62], %102 {strides = array<i32>} : memref<48x512xf32, #tpu.memory_space<vmem>>, vector<16x512xf32>,
    %c0_63 = arith.constant 0 : index
    %c0_64 = arith.constant 0 : index
    %104 = vector.load %arg10[%c0_63, %c0_64] : memref<48x512xf32, #tpu.memory_space<vmem>>, vector<40x512xf32>
    %105 = arith.truncf %104 : vector<40x512xf32> to vector<40x512xbf16>
    %c0_65 = arith.constant 0 : index
    %c0_66 = arith.constant 0 : index
    %c0_67 = arith.constant 0 : index
    %106 = vector.load %arg7[%c0_65, %c0_66, %c0_67] : memref<3x512x512xbf16, #tpu.memory_space<vmem>>, vector<1x512x512xbf16>
    %107 = vector.shape_cast %106 : vector<1x512x512xbf16> to vector<512x512xbf16>
    %cst_68 = arith.constant dense<0.000000e+00> : vector<40x512xf32>
    %108 = tpu.matmul %105, %107, %cst_68 {dimension_numbers = #tpu.dot_dimension_numbers<[1], [0], [0], [1], [0, 0, 1, 1], [], []>} : vector<40x512xbf16>, vector<512x512xbf16>, vector<40x512xf32> -> vector<40x512xf32>
    %c1_69 = arith.constant 1 : index
    %c0_70 = arith.constant 0 : index
    %109 = vector.load %arg10[%c1_69, %c0_70] : memref<48x512xf32, #tpu.memory_space<vmem>>, vector<40x512xf32>
    %110 = arith.truncf %109 : vector<40x512xf32> to vector<40x512xbf16>
    %c1_71 = arith.constant 1 : index
    %c0_72 = arith.constant 0 : index
    %c0_73 = arith.constant 0 : index
    %111 = vector.load %arg7[%c1_71, %c0_72, %c0_73] : memref<3x512x512xbf16, #tpu.memory_space<vmem>>, vector<1x512x512xbf16>
    %112 = vector.shape_cast %111 : vector<1x512x512xbf16> to vector<512x512xbf16>
    %cst_74 = arith.constant dense<0.000000e+00> : vector<40x512xf32>
    %113 = tpu.matmul %110, %112, %cst_74 {dimension_numbers = #tpu.dot_dimension_numbers<[1], [0], [0], [1], [0, 0, 1, 1], [], []>} : vector<40x512xbf16>, vector<512x512xbf16>, vector<40x512xf32> -> vector<40x512xf32>
    %114 = arith.addf %108, %113 : vector<40x512xf32>
    %c2_75 = arith.constant 2 : index
    %c0_76 = arith.constant 0 : index
    %115 = vector.load %arg10[%c2_75, %c0_76] : memref<48x512xf32, #tpu.memory_space<vmem>>, vector<40x512xf32>
    %116 = arith.truncf %115 : vector<40x512xf32> to vector<40x512xbf16>
    %c2_77 = arith.constant 2 : index
    %c0_78 = arith.constant 0 : index
    %c0_79 = arith.constant 0 : index
    %117 = vector.load %arg7[%c2_77, %c0_78, %c0_79] : memref<3x512x512xbf16, #tpu.memory_space<vmem>>, vector<1x512x512xbf16>
    %118 = vector.shape_cast %117 : vector<1x512x512xbf16> to vector<512x512xbf16>
    %cst_80 = arith.constant dense<0.000000e+00> : vector<40x512xf32>
    %119 = tpu.matmul %116, %118, %cst_80 {dimension_numbers = #tpu.dot_dimension_numbers<[1], [0], [0], [1], [0, 0, 1, 1], [], []>} : vector<40x512xbf16>, vector<512x512xbf16>, vector<40x512xf32> -> vector<40x512xf32>
    %120 = arith.addf %114, %119 : vector<40x512xf32>
    %c0_81 = arith.constant 0 : index
    %c0_82 = arith.constant 0 : index
    %c0_83 = arith.constant 0 : index
    %121 = vector.load %arg1[%c0_81, %c0_82, %c0_83] : memref<2x16x512xf32, #tpu.memory_space<vmem>>, vector<1x16x512xf32>
    %122 = vector.shape_cast %121 : vector<1x16x512xf32> to vector<16x512xf32>
    %123 = vector.extract_strided_slice %120 {offsets = [0, 0], sizes = [16, 512], strides = [1, 1]} : vector<40x512xf32> to vector<16x512xf32>
    %124 = arith.addf %122, %123 : vector<16x512xf32>
    %c0_84 = arith.constant 0 : index
    %c0_85 = arith.constant 0 : index
    %125 = vector.load %arg8[%c0_84, %c0_85] : memref<1x512xf32, #tpu.memory_space<vmem>>, vector<1x512xf32>
    %126 = vector.broadcast %125 : vector<1x512xf32> to vector<16x512xf32>
    %127 = arith.addf %124, %126 : vector<16x512xf32>
    %c0_86 = arith.constant 0 : index
    %c0_87 = arith.constant 0 : index
    %c0_88 = arith.constant 0 : index
    %128 = vector.load %arg9[%c0_86, %c0_87, %c0_88] : memref<2x16x512xf32, #tpu.memory_space<vmem>>, vector<1x16x512xf32>
    %129 = vector.shape_cast %128 : vector<1x16x512xf32> to vector<16x512xf32>
    %130 = vector.shape_cast %127 : vector<16x512xf32> to vector<1x16x512xf32>
    tpu.vector_store %arg9[%c0_86, %c0_87, %c0_88], %130 {strides = array<i32>} : memref<2x16x512xf32, #tpu.memory_space<vmem>>, vector<1x16x512xf32>,
    %c1_89 = arith.constant 1 : index
    %c0_90 = arith.constant 0 : index
    %c0_91 = arith.constant 0 : index
    %131 = vector.load %arg1[%c1_89, %c0_90, %c0_91] : memref<2x16x512xf32, #tpu.memory_space<vmem>>, vector<1x16x512xf32>
    %132 = vector.shape_cast %131 : vector<1x16x512xf32> to vector<16x512xf32>
    %133 = vector.extract_strided_slice %120 {offsets = [24, 0], sizes = [16, 512], strides = [1, 1]} : vector<40x512xf32> to vector<16x512xf32>
    %134 = arith.addf %132, %133 : vector<16x512xf32>
    %c0_92 = arith.constant 0 : index
    %c0_93 = arith.constant 0 : index
    %135 = vector.load %arg8[%c0_92, %c0_93] : memref<1x512xf32, #tpu.memory_space<vmem>>, vector<1x512xf32>
    %136 = vector.broadcast %135 : vector<1x512xf32> to vector<16x512xf32>
    %137 = arith.addf %134, %136 : vector<16x512xf32>
    %c1_94 = arith.constant 1 : index
    %c0_95 = arith.constant 0 : index
    %c0_96 = arith.constant 0 : index
    %138 = vector.load %arg9[%c1_94, %c0_95, %c0_96] : memref<2x16x512xf32, #tpu.memory_space<vmem>>, vector<1x16x512xf32>
    %139 = vector.shape_cast %138 : vector<1x16x512xf32> to vector<16x512xf32>
    %140 = vector.shape_cast %137 : vector<16x512xf32> to vector<1x16x512xf32>
    tpu.vector_store %arg9[%c1_94, %c0_95, %c0_96], %140 {strides = array<i32>} : memref<2x16x512xf32, #tpu.memory_space<vmem>>, vector<1x16x512xf32>,
    return
  }
  func.func @transform_0(%arg0: i32) -> (i32, i32, i32) {
    %c0_i32 = arith.constant 0 : i32
    %c0_i32_0 = arith.constant 0 : i32
    %c0_i32_1 = arith.constant 0 : i32
    return %arg0, %c0_i32, %c0_i32_0 : i32, i32, i32
  }
  func.func @transform_1(%arg0: i32) -> (i32, i32) {
    %c0_i32 = arith.constant 0 : i32
    %c0_i32_0 = arith.constant 0 : i32
    %c0_i32_1 = arith.constant 0 : i32
    return %c0_i32, %c0_i32_0 : i32, i32
  }
  func.func @transform_2(%arg0: i32) -> (i32, i32) {
    %c0_i32 = arith.constant 0 : i32
    %c0_i32_0 = arith.constant 0 : i32
    %c0_i32_1 = arith.constant 0 : i32
    return %c0_i32, %c0_i32_0 : i32, i32
  }
  func.func @transform_3(%arg0: i32) -> (i32, i32, i32) {
    %c0_i32 = arith.constant 0 : i32
    %c0_i32_0 = arith.constant 0 : i32
    %c0_i32_1 = arith.constant 0 : i32
    %c0_i32_2 = arith.constant 0 : i32
    return %c0_i32, %c0_i32_0, %c0_i32_1 : i32, i32, i32
  }
  func.func @transform_4(%arg0: i32) -> (i32, i32) {
    %c0_i32 = arith.constant 0 : i32
    %c0_i32_0 = arith.constant 0 : i32
    %c0_i32_1 = arith.constant 0 : i32
    return %c0_i32, %c0_i32_0 : i32, i32
  }
  func.func @transform_5(%arg0: i32) -> (i32, i32) {
    %c0_i32 = arith.constant 0 : i32
    %c0_i32_0 = arith.constant 0 : i32
    %c0_i32_1 = arith.constant 0 : i32
    return %c0_i32, %c0_i32_0 : i32, i32
  }
  func.func @transform_6(%arg0: i32) -> (i32, i32, i32) {
    %c0_i32 = arith.constant 0 : i32
    %c0_i32_0 = arith.constant 0 : i32
    %c0_i32_1 = arith.constant 0 : i32
    %c0_i32_2 = arith.constant 0 : i32
    return %c0_i32, %c0_i32_0, %c0_i32_1 : i32, i32, i32
  }
  func.func @transform_7(%arg0: i32) -> (i32, i32) {
    %c0_i32 = arith.constant 0 : i32
    %c0_i32_0 = arith.constant 0 : i32
    %c0_i32_1 = arith.constant 0 : i32
    return %c0_i32, %c0_i32_0 : i32, i32
  }
  func.func @transform_8(%arg0: i32) -> (i32, i32, i32) {
    %c0_i32 = arith.constant 0 : i32
    %c0_i32_0 = arith.constant 0 : i32
    %c0_i32_1 = arith.constant 0 : i32
    return %arg0, %c0_i32, %c0_i32_0 : i32, i32, i32
  }
}

</mosaic_0001>

<llo_original>
// kernel: tile.18
$region0: #{tile.18}
  #allocation0 [shape = 's32[1]{0}', space=sflag, size = 0x4, scoped, tag = 'scoped memory for tile.18']
  %s0 = inlined_call_operand.vmem [shape: f32[32], index: 0, kind: input, shape index: {}]
  %s1 = inlined_call_operand.vmem [shape: f32[16,32], index: 1, kind: output, shape index: {}]
  // Predicated region
  $region2: #{tile.18} parent=0 // pred_check
    _
  $region3: #{tile.18} parent=0 // pred_check_branch
    %3 = sbr.rel (0) target = $region5
  $region4: #{tile.18} parent=0 // pred_region
    _
  $region5: #{tile.18} parent=0 // pred_fallthru
    _
  %v4 = vld [vmem:[%s0] ss:$0 sm:$0xff]
  %5 = vst [vmem:[%s1] sm:$0xff] %v4
  %s6 = scalar_lea.vmem %s1, 8
  %7 = vst [vmem:[%s6] sm:$0xff] %v4

// kernel: tile.19
$region0: #{tile.19}
  %s0 = inlined_call_operand.vmem [shape: f32[16,32], index: 0, kind: input, shape index: {}]
  %s1 = inlined_call_operand.vmem [shape: f32[1,512], index: 1, kind: output, shape index: {}]
  $region1: #{tile.19} parent=0
    #allocation0 [shape = 'u8[16384]{0}', space=vmem, size = 0x4000, scoped, tag = 'scoped mem for output reshape']
    %v2 = vld [vmem:[%s0] ss:$4 sm:$0xf]
    %vm3 = vcmask 261120
    %4 = vst.msk [vmem:[#allocation0] ss:$8 sm:$0xf] %vm3, %v2
    %s5 = scalar_lea.vmem %s0, 3
    %v6 = vld [vmem:[%s5] ss:$4 sm:$0xf]
    %7 = vrot.lane.b32.xlu0 %v6, 96
    %v8 = vpop.permute.xlu0 %7
    %vm9 = vcmask 1048320
    %10 = vst.msk [vmem:[#allocation0] ss:$8 sm:$0xf] %vm9, %v8
    %s11 = scalar_lea.vmem %s0, 2
    %v12 = vld [vmem:[%s11] ss:$4 sm:$0xf]
    %13 = vrot.lane.b32.xlu0 %v12, 64
    %v14 = vpop.permute.xlu0 %13
    %vm15 = vcmask 785920
    %16 = vst.msk [vmem:[#allocation0] ss:$8 sm:$0xf] %vm15, %v14
    %s17 = scalar_lea.vmem %s0, 1
    %v18 = vld [vmem:[%s17] ss:$4 sm:$0xf]
    %19 = vrot.lane.b32.xlu0 %v18, 32
    %v20 = vpop.permute.xlu0 %19
    %vm21 = vcmask 523520
    %22 = vst.msk [vmem:[#allocation0] ss:$8 sm:$0xf] %vm21, %v20
    %s24 = sshllo.u32 0, 1
    %v26 = vld [vmem:[#allocation0] sm:%s24]
    %s27 = sshllo.u32 0, 1
    %28 = vst [vmem:[%s1] sm:%s27] %v26
    %s29 = scalar_lea.vmem [#allocation0], 8
    %v30 = vld [vmem:[%s29] sm:%s24]
    %s31 = sshllo.u32 0, 1
    %s32 = scalar_lea.vmem %s1, 1
    %33 = vst [vmem:[%s32] sm:%s31] %v30
    %s34 = scalar_lea.vmem [#allocation0], 16
    %v35 = vld [vmem:[%s34] sm:%s24]
    %s36 = sshllo.u32 0, 1
    %s37 = smul.addr 1, 2
    %s38 = scalar_lea.vmem %s1, %s37
    %39 = vst [vmem:[%s38] sm:%s36] %v35
    %s40 = scalar_lea.vmem [#allocation0], 24
    %v41 = vld [vmem:[%s40] sm:%s24]
    %s42 = sshllo.u32 0, 1
    %s43 = smul.addr 1, 3
    %s44 = scalar_lea.vmem %s1, %s43
    %45 = vst [vmem:[%s44] sm:%s42] %v41

// kernel: residual_block_pallas.1
$region0: #{residual_block_pallas.1}
  #allocation0 [shape = 'u32[]', space=smem, size = 0x4, offset = 0x4, fixed_abs, tag = 'smem constant byte address 0x4 - core index']
  #allocation1 [shape = 'u32[144,128]{1,0:T(1,128)}', space=vmem, size = 0x12000, scoped, tag = 'internal scratch']
  #allocation2 [shape = 'f32[48,512]{1,0:T(8,128)}', space=vmem, size = 0x18000, scoped, tag = 'scratch operand']
  %s0 = inlined_call_operand.vmem [shape: f32[2,16,512], index: 0, kind: input, shape index: {}]
  %s1 = inlined_call_operand.vmem [shape: f32[1,512], index: 1, kind: input, shape index: {}]
  %s2 = inlined_call_operand.vmem [shape: f32[1,512], index: 2, kind: input, shape index: {}]
  %s3 = inlined_call_operand.vmem [shape: bf16[3,512,512], index: 3, kind: input, shape index: {}]
  %s4 = inlined_call_operand.vmem [shape: f32[16,512], index: 4, kind: input, shape index: {}]
  %s5 = inlined_call_operand.vmem [shape: f32[16,512], index: 5, kind: input, shape index: {}]
  %s6 = inlined_call_operand.vmem [shape: bf16[3,512,512], index: 6, kind: input, shape index: {}]
  %s7 = inlined_call_operand.vmem [shape: f32[1,512], index: 7, kind: input, shape index: {}]
  %s8 = inlined_call_operand.vmem [shape: f32[2,16,512], index: 8, kind: output, shape index: {}]
  %s9 = sld [smem:[#allocation0]]
  $region42: #{residual_block_pallas.1} parent=0
    _
  %s11 = ssub.s32 1, %s9
  %s12 = scalar_select 0, %s11, %s9
  // Predicated region
  $region2: #{residual_block_pallas.1} parent=0 // pred_check
    _
  $region3: #{residual_block_pallas.1} parent=0 // pred_check_branch
    %14 = sbr.rel (0) target = $region5
  $region4: #{residual_block_pallas.1} parent=0 // pred_region
    _
  $region5: #{residual_block_pallas.1} parent=0 // pred_fallthru
    _
  // Predicated region
  $region6: #{residual_block_pallas.1} parent=0 // pred_check
    _
  $region7: #{residual_block_pallas.1} parent=0 // pred_check_branch
    %16 = sbr.rel (0) target = $region9
  $region8: #{residual_block_pallas.1} parent=0 // pred_region
    _
  $region9: #{residual_block_pallas.1} parent=0 // pred_fallthru
    _
  // Predicated region
  $region10: #{residual_block_pallas.1} parent=0 // pred_check
    _
  $region11: #{residual_block_pallas.1} parent=0 // pred_check_branch
    %18 = sbr.rel (0) target = $region13
  $region12: #{residual_block_pallas.1} parent=0 // pred_region
    _
  $region13: #{residual_block_pallas.1} parent=0 // pred_fallthru
    _
  // Predicated region
  $region14: #{residual_block_pallas.1} parent=0 // pred_check
    _
  $region15: #{residual_block_pallas.1} parent=0 // pred_check_branch
    %20 = sbr.rel (0) target = $region17
  $region16: #{residual_block_pallas.1} parent=0 // pred_region
    _
  $region17: #{residual_block_pallas.1} parent=0 // pred_fallthru
    _
  // Predicated region
  $region18: #{residual_block_pallas.1} parent=0 // pred_check
    _
  $region19: #{residual_block_pallas.1} parent=0 // pred_check_branch
    %22 = sbr.rel (0) target = $region21
  $region20: #{residual_block_pallas.1} parent=0 // pred_region
    _
  $region21: #{residual_block_pallas.1} parent=0 // pred_fallthru
    _
  // Predicated region
  $region22: #{residual_block_pallas.1} parent=0 // pred_check
    _
  $region23: #{residual_block_pallas.1} parent=0 // pred_check_branch
    %24 = sbr.rel (0) target = $region25
  $region24: #{residual_block_pallas.1} parent=0 // pred_region
    _
  $region25: #{residual_block_pallas.1} parent=0 // pred_fallthru
    _
  // Predicated region
  $region26: #{residual_block_pallas.1} parent=0 // pred_check
    _
  $region27: #{residual_block_pallas.1} parent=0 // pred_check_branch
    %26 = sbr.rel (0) target = $region29
  $region28: #{residual_block_pallas.1} parent=0 // pred_region
    _
  $region29: #{residual_block_pallas.1} parent=0 // pred_fallthru
    _
  // Predicated region
  $region30: #{residual_block_pallas.1} parent=0 // pred_check
    _
  $region31: #{residual_block_pallas.1} parent=0 // pred_check_branch
    %28 = sbr.rel (0) target = $region33
  $region32: #{residual_block_pallas.1} parent=0 // pred_region
    _
  $region33: #{residual_block_pallas.1} parent=0 // pred_fallthru
    _
  %v29 = vld [vmem:[%s0] sm:$0xff]
  %v30 = vld [vmem:[%s0 + $0x8] sm:$0xff]
  %v31 = vld [vmem:[%s0 + $0x10] sm:$0xff]
  %v32 = vld [vmem:[%s0 + $0x18] sm:$0xff]
  %v33 = vld [vmem:[%s0 + $0x20] sm:$0xff]
  %v34 = vld [vmem:[%s0 + $0x28] sm:$0xff]
  %v35 = vld [vmem:[%s0 + $0x30] sm:$0xff]
  %v36 = vld [vmem:[%s0 + $0x38] sm:$0xff]
  %v37 = vld [vmem:[%s1] sm:$0xf]
  %v39 = vlaneseq
  %v40 = vshrl.u32 %v39, 7
  %v41 = vsub.s32 0, %v40
  %v42 = vrot.slane %v37, %v41
  %v43 = vlaneseq
  %v44 = vshrl.u32 %v43, 7
  %v45 = vsub.s32 1, %v44
  %v46 = vrot.slane %v37, %v45
  %v47 = vlaneseq
  %v48 = vshrl.u32 %v47, 7
  %v49 = vsub.s32 2, %v48
  %v50 = vrot.slane %v37, %v49
  %v51 = vlaneseq
  %v52 = vshrl.u32 %v51, 7
  %v53 = vsub.s32 3, %v52
  %v54 = vrot.slane %v37, %v53
  %v59 = vmul.f32 %v29, %v42
  %v60 = vmul.f32 %v30, %v46
  %v61 = vmul.f32 %v31, %v50
  %v62 = vmul.f32 %v32, %v54
  %v63 = vmul.f32 %v33, %v42
  %v64 = vmul.f32 %v34, %v46
  %v65 = vmul.f32 %v35, %v50
  %v66 = vmul.f32 %v36, %v54
  %v67 = vld [vmem:[%s2] sm:$0xf]
  %v69 = vlaneseq
  %v70 = vshrl.u32 %v69, 7
  %v71 = vsub.s32 0, %v70
  %v72 = vrot.slane %v67, %v71
  %v73 = vlaneseq
  %v74 = vshrl.u32 %v73, 7
  %v75 = vsub.s32 1, %v74
  %v76 = vrot.slane %v67, %v75
  %v77 = vlaneseq
  %v78 = vshrl.u32 %v77, 7
  %v79 = vsub.s32 2, %v78
  %v80 = vrot.slane %v67, %v79
  %v81 = vlaneseq
  %v82 = vshrl.u32 %v81, 7
  %v83 = vsub.s32 3, %v82
  %v84 = vrot.slane %v67, %v83
  %v89 = vadd.f32 %v59, %v72
  %v90 = vadd.f32 %v60, %v76
  %v91 = vadd.f32 %v61, %v80
  %v92 = vadd.f32 %v62, %v84
  %v93 = vadd.f32 %v63, %v72
  %v94 = vadd.f32 %v64, %v76
  %v95 = vadd.f32 %v65, %v80
  %v96 = vadd.f32 %v66, %v84
  %v97 = vmax.f32 %v89, 0.0
  %v98 = vmax.f32 %v90, 0.0
  %v99 = vmax.f32 %v91, 0.0
  %v100 = vmax.f32 %v92, 0.0
  %v101 = vmax.f32 %v93, 0.0
  %v102 = vmax.f32 %v94, 0.0
  %v103 = vmax.f32 %v95, 0.0
  %v104 = vmax.f32 %v96, 0.0
  %v105 = vlaneseq
  %vm106 = vcmp.ge.s32.totalorder %v105, 0
  %vm107 = vcmp.lt.s32.totalorder %v105, 512
  %vm108 = vmand %vm106, %vm107
  %109 = vst.msk [vmem:[#allocation2] ss:$8 sm:$0xf] %vm108, 0.0
  %110 = vst.msk [vmem:[#allocation2] ss:$8 sm:$0x0] %vm108, 0.0
  %s111 = scalar_lea.vmem [#allocation2], 65
  %112 = vst.msk [vmem:[%s111] ss:$8 sm:$0xf] %vm108, 0.0
  %113 = vst.msk [vmem:[%s111] ss:$8 sm:$0x0] %vm108, 0.0
  %vm122 = vcmask 1040384
  %v123 = vrot.slane %v97, 7
  %v124 = vrot.slane %v98, 7
  %v125 = vrot.slane %v99, 7
  %v126 = vrot.slane %v100, 7
  %v127 = vrot.slane %v101, 7
  %v128 = vsel %vm122, %v123, %v127
  %v129 = vrot.slane %v102, 7
  %v130 = vsel %vm122, %v124, %v129
  %v131 = vrot.slane %v103, 7
  %v132 = vsel %vm122, %v125, %v131
  %v133 = vrot.slane %v104, 7
  %v134 = vsel %vm122, %v126, %v133
  %147 = vst [vmem:[#allocation2] sm:$0xfe] %v123
  %148 = vst [vmem:[#allocation2 + $0x8] sm:$0xfe] %v124
  %149 = vst [vmem:[#allocation2 + $0x10] sm:$0xfe] %v125
  %150 = vst [vmem:[#allocation2 + $0x18] sm:$0xfe] %v126
  %151 = vst [vmem:[#allocation2 + $0x20] sm:$0xff] %v128
  %152 = vst [vmem:[#allocation2 + $0x28] sm:$0xff] %v130
  %153 = vst [vmem:[#allocation2 + $0x30] sm:$0xff] %v132
  %154 = vst [vmem:[#allocation2 + $0x38] sm:$0xff] %v134
  %155 = vst [vmem:[#allocation2 + $0x40] sm:$0x1] %v127
  %156 = vst [vmem:[#allocation2 + $0x48] sm:$0x1] %v129
  %157 = vst [vmem:[#allocation2 + $0x50] sm:$0x1] %v131
  %158 = vst [vmem:[#allocation2 + $0x58] sm:$0x1] %v133
  %s159 = scalar_lea.vmem %s0, 64
  %v160 = vld [vmem:[%s159] sm:$0xff]
  %v161 = vld [vmem:[%s159 + $0x8] sm:$0xff]
  %v162 = vld [vmem:[%s159 + $0x10] sm:$0xff]
  %v163 = vld [vmem:[%s159 + $0x18] sm:$0xff]
  %v164 = vld [vmem:[%s159 + $0x20] sm:$0xff]
  %v165 = vld [vmem:[%s159 + $0x28] sm:$0xff]
  %v166 = vld [vmem:[%s159 + $0x30] sm:$0xff]
  %v167 = vld [vmem:[%s159 + $0x38] sm:$0xff]
  %v168 = vld [vmem:[%s1] sm:$0xf]
  %v170 = vlaneseq
  %v171 = vshrl.u32 %v170, 7
  %v172 = vsub.s32 0, %v171
  %v173 = vrot.slane %v168, %v172
  %v174 = vlaneseq
  %v175 = vshrl.u32 %v174, 7
  %v176 = vsub.s32 1, %v175
  %v177 = vrot.slane %v168, %v176
  %v178 = vlaneseq
  %v179 = vshrl.u32 %v178, 7
  %v180 = vsub.s32 2, %v179
  %v181 = vrot.slane %v168, %v180
  %v182 = vlaneseq
  %v183 = vshrl.u32 %v182, 7
  %v184 = vsub.s32 3, %v183
  %v185 = vrot.slane %v168, %v184
  %v190 = vmul.f32 %v160, %v173
  %v191 = vmul.f32 %v161, %v177
  %v192 = vmul.f32 %v162, %v181
  %v193 = vmul.f32 %v163, %v185
  %v194 = vmul.f32 %v164, %v173
  %v195 = vmul.f32 %v165, %v177
  %v196 = vmul.f32 %v166, %v181
  %v197 = vmul.f32 %v167, %v185
  %v198 = vld [vmem:[%s2] sm:$0xf]
  %v200 = vlaneseq
  %v201 = vshrl.u32 %v200, 7
  %v202 = vsub.s32 0, %v201
  %v203 = vrot.slane %v198, %v202
  %v204 = vlaneseq
  %v205 = vshrl.u32 %v204, 7
  %v206 = vsub.s32 1, %v205
  %v207 = vrot.slane %v198, %v206
  %v208 = vlaneseq
  %v209 = vshrl.u32 %v208, 7
  %v210 = vsub.s32 2, %v209
  %v211 = vrot.slane %v198, %v210
  %v212 = vlaneseq
  %v213 = vshrl.u32 %v212, 7
  %v214 = vsub.s32 3, %v213
  %v215 = vrot.slane %v198, %v214
  %v220 = vadd.f32 %v190, %v203
  %v221 = vadd.f32 %v191, %v207
  %v222 = vadd.f32 %v192, %v211
  %v223 = vadd.f32 %v193, %v215
  %v224 = vadd.f32 %v194, %v203
  %v225 = vadd.f32 %v195, %v207
  %v226 = vadd.f32 %v196, %v211
  %v227 = vadd.f32 %v197, %v215
  %v228 = vmax.f32 %v220, 0.0
  %v229 = vmax.f32 %v221, 0.0
  %v230 = vmax.f32 %v222, 0.0
  %v231 = vmax.f32 %v223, 0.0
  %v232 = vmax.f32 %v224, 0.0
  %v233 = vmax.f32 %v225, 0.0
  %v234 = vmax.f32 %v226, 0.0
  %v235 = vmax.f32 %v227, 0.0
  %s236 = scalar_lea.vmem [#allocation2], 96
  %237 = vst.msk [vmem:[%s236] ss:$8 sm:$0xf] %vm108, 0.0
  %238 = vst.msk [vmem:[%s236] ss:$8 sm:$0x0] %vm108, 0.0
  %s239 = scalar_lea.vmem [#allocation2], 161
  %240 = vst.msk [vmem:[%s239] ss:$8 sm:$0xf] %vm108, 0.0
  %241 = vst.msk [vmem:[%s239] ss:$8 sm:$0x0] %vm108, 0.0
  %v250 = vrot.slane %v228, 7
  %v251 = vrot.slane %v229, 7
  %v252 = vrot.slane %v230, 7
  %v253 = vrot.slane %v231, 7
  %v254 = vrot.slane %v232, 7
  %v255 = vsel %vm122, %v250, %v254
  %v256 = vrot.slane %v233, 7
  %v257 = vsel %vm122, %v251, %v256
  %v258 = vrot.slane %v234, 7
  %v259 = vsel %vm122, %v252, %v258
  %v260 = vrot.slane %v235, 7
  %v261 = vsel %vm122, %v253, %v260
  %274 = vst [vmem:[#allocation2 + $0x60] sm:$0xfe] %v250
  %275 = vst [vmem:[#allocation2 + $0x68] sm:$0xfe] %v251
  %276 = vst [vmem:[#allocation2 + $0x70] sm:$0xfe] %v252
  %277 = vst [vmem:[#allocation2 + $0x78] sm:$0xfe] %v253
  %278 = vst [vmem:[#allocation2 + $0x80] sm:$0xff] %v255
  %279 = vst [vmem:[#allocation2 + $0x88] sm:$0xff] %v257
  %280 = vst [vmem:[#allocation2 + $0x90] sm:$0xff] %v259
  %281 = vst [vmem:[#allocation2 + $0x98] sm:$0xff] %v261
  %282 = vst [vmem:[#allocation2 + $0xa0] sm:$0x1] %v254
  %283 = vst [vmem:[#allocation2 + $0xa8] sm:$0x1] %v256
  %284 = vst [vmem:[#allocation2 + $0xb0] sm:$0x1] %v258
  %285 = vst [vmem:[#allocation2 + $0xb8] sm:$0x1] %v260
  %v286 = vld [vmem:[#allocation2] sm:$0xff]
  %v287 = vld [vmem:[#allocation2 + $0x8] sm:$0xff]
  %v288 = vld [vmem:[#allocation2 + $0x10] sm:$0xff]
  %v289 = vld [vmem:[#allocation2 + $0x18] sm:$0xff]
  %v290 = vld [vmem:[#allocation2 + $0x20] sm:$0xff]
  %v291 = vld [vmem:[#allocation2 + $0x28] sm:$0xff]
  %v292 = vld [vmem:[#allocation2 + $0x30] sm:$0xff]
  %v293 = vld [vmem:[#allocation2 + $0x38] sm:$0xff]
  %v294 = vld [vmem:[#allocation2 + $0x40] sm:$0xff]
  %v295 = vld [vmem:[#allocation2 + $0x48] sm:$0xff]
  %v296 = vld [vmem:[#allocation2 + $0x50] sm:$0xff]
  %v297 = vld [vmem:[#allocation2 + $0x58] sm:$0xff]
  %v298 = vld [vmem:[#allocation2 + $0x60] sm:$0xff]
  %v299 = vld [vmem:[#allocation2 + $0x68] sm:$0xff]
  %v300 = vld [vmem:[#allocation2 + $0x70] sm:$0xff]
  %v301 = vld [vmem:[#allocation2 + $0x78] sm:$0xff]
  %v302 = vld [vmem:[#allocation2 + $0x80] sm:$0xff]
  %v303 = vld [vmem:[#allocation2 + $0x88] sm:$0xff]
  %v304 = vld [vmem:[#allocation2 + $0x90] sm:$0xff]
  %v305 = vld [vmem:[#allocation2 + $0x98] sm:$0xff]
  %v306 = vpack.c.bf16 %v290, %v286
  %v307 = vpack.c.bf16 %v291, %v287
  %v308 = vpack.c.bf16 %v292, %v288
  %v309 = vpack.c.bf16 %v293, %v289
  %v310 = vpack.c.bf16 %v298, %v294
  %v311 = vpack.c.bf16 %v299, %v295
  %v312 = vpack.c.bf16 %v300, %v296
  %v313 = vpack.c.bf16 %v301, %v297
  %v314 = vpack.c.bf16 %v302, %v302
  %v315 = vpack.c.bf16 %v303, %v303
  %v316 = vpack.c.bf16 %v304, %v304
  %v317 = vpack.c.bf16 %v305, %v305
  %v318 = vld [vmem:[%s3] sm:$0xff]
  %v319 = vld [vmem:[%s3 + $0x8] sm:$0xff]
  %v320 = vld [vmem:[%s3 + $0x10] sm:$0xff]
  %v321 = vld [vmem:[%s3 + $0x18] sm:$0xff]
  %v322 = vld [vmem:[%s3 + $0x20] sm:$0xff]
  %v323 = vld [vmem:[%s3 + $0x28] sm:$0xff]
  %v324 = vld [vmem:[%s3 + $0x30] sm:$0xff]
  %v325 = vld [vmem:[%s3 + $0x38] sm:$0xff]
  %v326 = vld [vmem:[%s3 + $0x40] sm:$0xff]
  %v327 = vld [vmem:[%s3 + $0x48] sm:$0xff]
  %v328 = vld [vmem:[%s3 + $0x50] sm:$0xff]
  %v329 = vld [vmem:[%s3 + $0x58] sm:$0xff]
  %v330 = vld [vmem:[%s3 + $0x60] sm:$0xff]
  %v331 = vld [vmem:[%s3 + $0x68] sm:$0xff]
  %v332 = vld [vmem:[%s3 + $0x70] sm:$0xff]
  %v333 = vld [vmem:[%s3 + $0x78] sm:$0xff]
  %v334 = vld [vmem:[%s3 + $0x80] sm:$0xff]
  %v335 = vld [vmem:[%s3 + $0x88] sm:$0xff]
  %v336 = vld [vmem:[%s3 + $0x90] sm:$0xff]
  %v337 = vld [vmem:[%s3 + $0x98] sm:$0xff]
  %v338 = vld [vmem:[%s3 + $0xa0] sm:$0xff]
  %v339 = vld [vmem:[%s3 + $0xa8] sm:$0xff]
  %v340 = vld [vmem:[%s3 + $0xb0] sm:$0xff]
  %v341 = vld [vmem:[%s3 + $0xb8] sm:$0xff]
  %v342 = vld [vmem:[%s3 + $0xc0] sm:$0xff]
  %v343 = vld [vmem:[%s3 + $0xc8] sm:$0xff]
  %v344 = vld [vmem:[%s3 + $0xd0] sm:$0xff]
  %v345 = vld [vmem:[%s3 + $0xd8] sm:$0xff]
  %v346 = vld [vmem:[%s3 + $0xe0] sm:$0xff]
  %v347 = vld [vmem:[%s3 + $0xe8] sm:$0xff]
  %v348 = vld [vmem:[%s3 + $0xf0] sm:$0xff]
  %v349 = vld [vmem:[%s3 + $0xf8] sm:$0xff]
  %v350 = vld [vmem:[%s3 + $0x100] sm:$0xff]
  %v351 = vld [vmem:[%s3 + $0x108] sm:$0xff]
  %v352 = vld [vmem:[%s3 + $0x110] sm:$0xff]
  %v353 = vld [vmem:[%s3 + $0x118] sm:$0xff]
  %v354 = vld [vmem:[%s3 + $0x120] sm:$0xff]
  %v355 = vld [vmem:[%s3 + $0x128] sm:$0xff]
  %v356 = vld [vmem:[%s3 + $0x130] sm:$0xff]
  %v357 = vld [vmem:[%s3 + $0x138] sm:$0xff]
  %v358 = vld [vmem:[%s3 + $0x140] sm:$0xff]
  %v359 = vld [vmem:[%s3 + $0x148] sm:$0xff]
  %v360 = vld [vmem:[%s3 + $0x150] sm:$0xff]
  %v361 = vld [vmem:[%s3 + $0x158] sm:$0xff]
  %v362 = vld [vmem:[%s3 + $0x160] sm:$0xff]
  %v363 = vld [vmem:[%s3 + $0x168] sm:$0xff]
  %v364 = vld [vmem:[%s3 + $0x170] sm:$0xff]
  %v365 = vld [vmem:[%s3 + $0x178] sm:$0xff]
  %v366 = vld [vmem:[%s3 + $0x180] sm:$0xff]
  %v367 = vld [vmem:[%s3 + $0x188] sm:$0xff]
  %v368 = vld [vmem:[%s3 + $0x190] sm:$0xff]
  %v369 = vld [vmem:[%s3 + $0x198] sm:$0xff]
  %v370 = vld [vmem:[%s3 + $0x1a0] sm:$0xff]
  %v371 = vld [vmem:[%s3 + $0x1a8] sm:$0xff]
  %v372 = vld [vmem:[%s3 + $0x1b0] sm:$0xff]
  %v373 = vld [vmem:[%s3 + $0x1b8] sm:$0xff]
  %v374 = vld [vmem:[%s3 + $0x1c0] sm:$0xff]
  %v375 = vld [vmem:[%s3 + $0x1c8] sm:$0xff]
  %v376 = vld [vmem:[%s3 + $0x1d0] sm:$0xff]
  %v377 = vld [vmem:[%s3 + $0x1d8] sm:$0xff]
  %v378 = vld [vmem:[%s3 + $0x1e0] sm:$0xff]
  %v379 = vld [vmem:[%s3 + $0x1e8] sm:$0xff]
  %v380 = vld [vmem:[%s3 + $0x1f0] sm:$0xff]
  %v381 = vld [vmem:[%s3 + $0x1f8] sm:$0xff]
  %v382 = vld [vmem:[%s3 + $0x200] sm:$0xff]
  %v383 = vld [vmem:[%s3 + $0x208] sm:$0xff]
  %v384 = vld [vmem:[%s3 + $0x210] sm:$0xff]
  %v385 = vld [vmem:[%s3 + $0x218] sm:$0xff]
  %v386 = vld [vmem:[%s3 + $0x220] sm:$0xff]
  %v387 = vld [vmem:[%s3 + $0x228] sm:$0xff]
  %v388 = vld [vmem:[%s3 + $0x230] sm:$0xff]
  %v389 = vld [vmem:[%s3 + $0x238] sm:$0xff]
  %v390 = vld [vmem:[%s3 + $0x240] sm:$0xff]
  %v391 = vld [vmem:[%s3 + $0x248] sm:$0xff]
  %v392 = vld [vmem:[%s3 + $0x250] sm:$0xff]
  %v393 = vld [vmem:[%s3 + $0x258] sm:$0xff]
  %v394 = vld [vmem:[%s3 + $0x260] sm:$0xff]
  %v395 = vld [vmem:[%s3 + $0x268] sm:$0xff]
  %v396 = vld [vmem:[%s3 + $0x270] sm:$0xff]
  %v397 = vld [vmem:[%s3 + $0x278] sm:$0xff]
  %v398 = vld [vmem:[%s3 + $0x280] sm:$0xff]
  %v399 = vld [vmem:[%s3 + $0x288] sm:$0xff]
  %v400 = vld [vmem:[%s3 + $0x290] sm:$0xff]
  %v401 = vld [vmem:[%s3 + $0x298] sm:$0xff]
  %v402 = vld [vmem:[%s3 + $0x2a0] sm:$0xff]
  %v403 = vld [vmem:[%s3 + $0x2a8] sm:$0xff]
  %v404 = vld [vmem:[%s3 + $0x2b0] sm:$0xff]
  %v405 = vld [vmem:[%s3 + $0x2b8] sm:$0xff]
  %v406 = vld [vmem:[%s3 + $0x2c0] sm:$0xff]
  %v407 = vld [vmem:[%s3 + $0x2c8] sm:$0xff]
  %v408 = vld [vmem:[%s3 + $0x2d0] sm:$0xff]
  %v409 = vld [vmem:[%s3 + $0x2d8] sm:$0xff]
  %v410 = vld [vmem:[%s3 + $0x2e0] sm:$0xff]
  %v411 = vld [vmem:[%s3 + $0x2e8] sm:$0xff]
  %v412 = vld [vmem:[%s3 + $0x2f0] sm:$0xff]
  %v413 = vld [vmem:[%s3 + $0x2f8] sm:$0xff]
  %v414 = vld [vmem:[%s3 + $0x300] sm:$0xff]
  %v415 = vld [vmem:[%s3 + $0x308] sm:$0xff]
  %v416 = vld [vmem:[%s3 + $0x310] sm:$0xff]
  %v417 = vld [vmem:[%s3 + $0x318] sm:$0xff]
  %v418 = vld [vmem:[%s3 + $0x320] sm:$0xff]
  %v419 = vld [vmem:[%s3 + $0x328] sm:$0xff]
  %v420 = vld [vmem:[%s3 + $0x330] sm:$0xff]
  %v421 = vld [vmem:[%s3 + $0x338] sm:$0xff]
  %v422 = vld [vmem:[%s3 + $0x340] sm:$0xff]
  %v423 = vld [vmem:[%s3 + $0x348] sm:$0xff]
  %v424 = vld [vmem:[%s3 + $0x350] sm:$0xff]
  %v425 = vld [vmem:[%s3 + $0x358] sm:$0xff]
  %v426 = vld [vmem:[%s3 + $0x360] sm:$0xff]
  %v427 = vld [vmem:[%s3 + $0x368] sm:$0xff]
  %v428 = vld [vmem:[%s3 + $0x370] sm:$0xff]
  %v429 = vld [vmem:[%s3 + $0x378] sm:$0xff]
  %v430 = vld [vmem:[%s3 + $0x380] sm:$0xff]
  %v431 = vld [vmem:[%s3 + $0x388] sm:$0xff]
  %v432 = vld [vmem:[%s3 + $0x390] sm:$0xff]
  %v433 = vld [vmem:[%s3 + $0x398] sm:$0xff]
  %v434 = vld [vmem:[%s3 + $0x3a0] sm:$0xff]
  %v435 = vld [vmem:[%s3 + $0x3a8] sm:$0xff]
  %v436 = vld [vmem:[%s3 + $0x3b0] sm:$0xff]
  %v437 = vld [vmem:[%s3 + $0x3b8] sm:$0xff]
  %v438 = vld [vmem:[%s3 + $0x3c0] sm:$0xff]
  %v439 = vld [vmem:[%s3 + $0x3c8] sm:$0xff]
  %v440 = vld [vmem:[%s3 + $0x3d0] sm:$0xff]
  %v441 = vld [vmem:[%s3 + $0x3d8] sm:$0xff]
  %v442 = vld [vmem:[%s3 + $0x3e0] sm:$0xff]
  %v443 = vld [vmem:[%s3 + $0x3e8] sm:$0xff]
  %v444 = vld [vmem:[%s3 + $0x3f0] sm:$0xff]
  %v445 = vld [vmem:[%s3 + $0x3f8] sm:$0xff]
  %v446 = vld [vmem:[#allocation2] sm:$0xfe]
  %v447 = vld [vmem:[#allocation2 + $0x8] sm:$0xfe]
  %v448 = vld [vmem:[#allocation2 + $0x10] sm:$0xfe]
  %v449 = vld [vmem:[#allocation2 + $0x18] sm:$0xfe]
  %v450 = vld [vmem:[#allocation2 + $0x20] sm:$0xff]
  %v451 = vld [vmem:[#allocation2 + $0x28] sm:$0xff]
  %v452 = vld [vmem:[#allocation2 + $0x30] sm:$0xff]
  %v453 = vld [vmem:[#allocation2 + $0x38] sm:$0xff]
  %v454 = vld [vmem:[#allocation2 + $0x40] sm:$0xff]
  %v455 = vld [vmem:[#allocation2 + $0x48] sm:$0xff]
  %v456 = vld [vmem:[#allocation2 + $0x50] sm:$0xff]
  %v457 = vld [vmem:[#allocation2 + $0x58] sm:$0xff]
  %v458 = vld [vmem:[#allocation2 + $0x60] sm:$0xff]
  %v459 = vld [vmem:[#allocation2 + $0x68] sm:$0xff]
  %v460 = vld [vmem:[#allocation2 + $0x70] sm:$0xff]
  %v461 = vld [vmem:[#allocation2 + $0x78] sm:$0xff]
  %v462 = vld [vmem:[#allocation2 + $0x80] sm:$0xff]
  %v463 = vld [vmem:[#allocation2 + $0x88] sm:$0xff]
  %v464 = vld [vmem:[#allocation2 + $0x90] sm:$0xff]
  %v465 = vld [vmem:[#allocation2 + $0x98] sm:$0xff]
  %v466 = vld [vmem:[#allocation2 + $0xa0] sm:$0x1]
  %v467 = vld [vmem:[#allocation2 + $0xa8] sm:$0x1]
  %v468 = vld [vmem:[#allocation2 + $0xb0] sm:$0x1]
  %v469 = vld [vmem:[#allocation2 + $0xb8] sm:$0x1]
  %v470 = vpack.c.bf16 %v450, %v446
  %v471 = vpack.c.bf16 %v451, %v447
  %v472 = vpack.c.bf16 %v452, %v448
  %v473 = vpack.c.bf16 %v453, %v449
  %v474 = vpack.c.bf16 %v458, %v454
  %v475 = vpack.c.bf16 %v459, %v455
  %v476 = vpack.c.bf16 %v460, %v456
  %v477 = vpack.c.bf16 %v461, %v457
  %v478 = vpack.c.bf16 %v466, %v462
  %v479 = vpack.c.bf16 %v467, %v463
  %v480 = vpack.c.bf16 %v468, %v464
  %v481 = vpack.c.bf16 %v469, %v465
  %s482 = scalar_lea.vmem %s3, 1024
  %v483 = vld [vmem:[%s482] sm:$0xff]
  %v484 = vld [vmem:[%s482 + $0x8] sm:$0xff]
  %v485 = vld [vmem:[%s482 + $0x10] sm:$0xff]
  %v486 = vld [vmem:[%s482 + $0x18] sm:$0xff]
  %v487 = vld [vmem:[%s482 + $0x20] sm:$0xff]
  %v488 = vld [vmem:[%s482 + $0x28] sm:$0xff]
  %v489 = vld [vmem:[%s482 + $0x30] sm:$0xff]
  %v490 = vld [vmem:[%s482 + $0x38] sm:$0xff]
  %v491 = vld [vmem:[%s482 + $0x40] sm:$0xff]
  %v492 = vld [vmem:[%s482 + $0x48] sm:$0xff]
  %v493 = vld [vmem:[%s482 + $0x50] sm:$0xff]
  %v494 = vld [vmem:[%s482 + $0x58] sm:$0xff]
  %v495 = vld [vmem:[%s482 + $0x60] sm:$0xff]
  %v496 = vld [vmem:[%s482 + $0x68] sm:$0xff]
  %v497 = vld [vmem:[%s482 + $0x70] sm:$0xff]
  %v498 = vld [vmem:[%s482 + $0x78] sm:$0xff]
  %v499 = vld [vmem:[%s482 + $0x80] sm:$0xff]
  %v500 = vld [vmem:[%s482 + $0x88] sm:$0xff]
  %v501 = vld [vmem:[%s482 + $0x90] sm:$0xff]
  %v502 = vld [vmem:[%s482 + $0x98] sm:$0xff]
  %v503 = vld [vmem:[%s482 + $0xa0] sm:$0xff]
  %v504 = vld [vmem:[%s482 + $0xa8] sm:$0xff]
  %v505 = vld [vmem:[%s482 + $0xb0] sm:$0xff]
  %v506 = vld [vmem:[%s482 + $0xb8] sm:$0xff]
  %v507 = vld [vmem:[%s482 + $0xc0] sm:$0xff]
  %v508 = vld [vmem:[%s482 + $0xc8] sm:$0xff]
  %v509 = vld [vmem:[%s482 + $0xd0] sm:$0xff]
  %v510 = vld [vmem:[%s482 + $0xd8] sm:$0xff]
  %v511 = vld [vmem:[%s482 + $0xe0] sm:$0xff]
  %v512 = vld [vmem:[%s482 + $0xe8] sm:$0xff]
  %v513 = vld [vmem:[%s482 + $0xf0] sm:$0xff]
  %v514 = vld [vmem:[%s482 + $0xf8] sm:$0xff]
  %v515 = vld [vmem:[%s482 + $0x100] sm:$0xff]
  %v516 = vld [vmem:[%s482 + $0x108] sm:$0xff]
  %v517 = vld [vmem:[%s482 + $0x110] sm:$0xff]
  %v518 = vld [vmem:[%s482 + $0x118] sm:$0xff]
  %v519 = vld [vmem:[%s482 + $0x120] sm:$0xff]
  %v520 = vld [vmem:[%s482 + $0x128] sm:$0xff]
  %v521 = vld [vmem:[%s482 + $0x130] sm:$0xff]
  %v522 = vld [vmem:[%s482 + $0x138] sm:$0xff]
  %v523 = vld [vmem:[%s482 + $0x140] sm:$0xff]
  %v524 = vld [vmem:[%s482 + $0x148] sm:$0xff]
  %v525 = vld [vmem:[%s482 + $0x150] sm:$0xff]
  %v526 = vld [vmem:[%s482 + $0x158] sm:$0xff]
  %v527 = vld [vmem:[%s482 + $0x160] sm:$0xff]
  %v528 = vld [vmem:[%s482 + $0x168] sm:$0xff]
  %v529 = vld [vmem:[%s482 + $0x170] sm:$0xff]
  %v530 = vld [vmem:[%s482 + $0x178] sm:$0xff]
  %v531 = vld [vmem:[%s482 + $0x180] sm:$0xff]
  %v532 = vld [vmem:[%s482 + $0x188] sm:$0xff]
  %v533 = vld [vmem:[%s482 + $0x190] sm:$0xff]
  %v534 = vld [vmem:[%s482 + $0x198] sm:$0xff]
  %v535 = vld [vmem:[%s482 + $0x1a0] sm:$0xff]
  %v536 = vld [vmem:[%s482 + $0x1a8] sm:$0xff]
  %v537 = vld [vmem:[%s482 + $0x1b0] sm:$0xff]
  %v538 = vld [vmem:[%s482 + $0x1b8] sm:$0xff]
  %v539 = vld [vmem:[%s482 + $0x1c0] sm:$0xff]
  %v540 = vld [vmem:[%s482 + $0x1c8] sm:$0xff]
  %v541 = vld [vmem:[%s482 + $0x1d0] sm:$0xff]
  %v542 = vld [vmem:[%s482 + $0x1d8] sm:$0xff]
  %v543 = vld [vmem:[%s482 + $0x1e0] sm:$0xff]
  %v544 = vld [vmem:[%s482 + $0x1e8] sm:$0xff]
  %v545 = vld [vmem:[%s482 + $0x1f0] sm:$0xff]
  %v546 = vld [vmem:[%s482 + $0x1f8] sm:$0xff]
  %v547 = vld [vmem:[%s482 + $0x200] sm:$0xff]
  %v548 = vld [vmem:[%s482 + $0x208] sm:$0xff]
  %v549 = vld [vmem:[%s482 + $0x210] sm:$0xff]
  %v550 = vld [vmem:[%s482 + $0x218] sm:$0xff]
  %v551 = vld [vmem:[%s482 + $0x220] sm:$0xff]
  %v552 = vld [vmem:[%s482 + $0x228] sm:$0xff]
  %v553 = vld [vmem:[%s482 + $0x230] sm:$0xff]
  %v554 = vld [vmem:[%s482 + $0x238] sm:$0xff]
  %v555 = vld [vmem:[%s482 + $0x240] sm:$0xff]
  %v556 = vld [vmem:[%s482 + $0x248] sm:$0xff]
  %v557 = vld [vmem:[%s482 + $0x250] sm:$0xff]
  %v558 = vld [vmem:[%s482 + $0x258] sm:$0xff]
  %v559 = vld [vmem:[%s482 + $0x260] sm:$0xff]
  %v560 = vld [vmem:[%s482 + $0x268] sm:$0xff]
  %v561 = vld [vmem:[%s482 + $0x270] sm:$0xff]
  %v562 = vld [vmem:[%s482 + $0x278] sm:$0xff]
  %v563 = vld [vmem:[%s482 + $0x280] sm:$0xff]
  %v564 = vld [vmem:[%s482 + $0x288] sm:$0xff]
  %v565 = vld [vmem:[%s482 + $0x290] sm:$0xff]
  %v566 = vld [vmem:[%s482 + $0x298] sm:$0xff]
  %v567 = vld [vmem:[%s482 + $0x2a0] sm:$0xff]
  %v568 = vld [vmem:[%s482 + $0x2a8] sm:$0xff]
  %v569 = vld [vmem:[%s482 + $0x2b0] sm:$0xff]
  %v570 = vld [vmem:[%s482 + $0x2b8] sm:$0xff]
  %v571 = vld [vmem:[%s482 + $0x2c0] sm:$0xff]
  %v572 = vld [vmem:[%s482 + $0x2c8] sm:$0xff]
  %v573 = vld [vmem:[%s482 + $0x2d0] sm:$0xff]
  %v574 = vld [vmem:[%s482 + $0x2d8] sm:$0xff]
  %v575 = vld [vmem:[%s482 + $0x2e0] sm:$0xff]
  %v576 = vld [vmem:[%s482 + $0x2e8] sm:$0xff]
  %v577 = vld [vmem:[%s482 + $0x2f0] sm:$0xff]
  %v578 = vld [vmem:[%s482 + $0x2f8] sm:$0xff]
  %v579 = vld [vmem:[%s482 + $0x300] sm:$0xff]
  %v580 = vld [vmem:[%s482 + $0x308] sm:$0xff]
  %v581 = vld [vmem:[%s482 + $0x310] sm:$0xff]
  %v582 = vld [vmem:[%s482 + $0x318] sm:$0xff]
  %v583 = vld [vmem:[%s482 + $0x320] sm:$0xff]
  %v584 = vld [vmem:[%s482 + $0x328] sm:$0xff]
  %v585 = vld [vmem:[%s482 + $0x330] sm:$0xff]
  %v586 = vld [vmem:[%s482 + $0x338] sm:$0xff]
  %v587 = vld [vmem:[%s482 + $0x340] sm:$0xff]
  %v588 = vld [vmem:[%s482 + $0x348] sm:$0xff]
  %v589 = vld [vmem:[%s482 + $0x350] sm:$0xff]
  %v590 = vld [vmem:[%s482 + $0x358] sm:$0xff]
  %v591 = vld [vmem:[%s482 + $0x360] sm:$0xff]
  %v592 = vld [vmem:[%s482 + $0x368] sm:$0xff]
  %v593 = vld [vmem:[%s482 + $0x370] sm:$0xff]
  %v594 = vld [vmem:[%s482 + $0x378] sm:$0xff]
  %v595 = vld [vmem:[%s482 + $0x380] sm:$0xff]
  %v596 = vld [vmem:[%s482 + $0x388] sm:$0xff]
  %v597 = vld [vmem:[%s482 + $0x390] sm:$0xff]
  %v598 = vld [vmem:[%s482 + $0x398] sm:$0xff]
  %v599 = vld [vmem:[%s482 + $0x3a0] sm:$0xff]
  %v600 = vld [vmem:[%s482 + $0x3a8] sm:$0xff]
  %v601 = vld [vmem:[%s482 + $0x3b0] sm:$0xff]
  %v602 = vld [vmem:[%s482 + $0x3b8] sm:$0xff]
  %v603 = vld [vmem:[%s482 + $0x3c0] sm:$0xff]
  %v604 = vld [vmem:[%s482 + $0x3c8] sm:$0xff]
  %v605 = vld [vmem:[%s482 + $0x3d0] sm:$0xff]
  %v606 = vld [vmem:[%s482 + $0x3d8] sm:$0xff]
  %v607 = vld [vmem:[%s482 + $0x3e0] sm:$0xff]
  %v608 = vld [vmem:[%s482 + $0x3e8] sm:$0xff]
  %v609 = vld [vmem:[%s482 + $0x3f0] sm:$0xff]
  %v610 = vld [vmem:[%s482 + $0x3f8] sm:$0xff]
  %vm611 = vsmask.f32 7424
  %v613 = vshrl.u32 %v470, 16
  %v615 = vshll.u32 %v470, 16
  %v617 = vrot.slane %v615, 1
  %v618 = vor.u32 %v613, %v617
  %v620 = vshll.u32 %v474, 16
  %v622 = vrot.slane %v620, 1
  %v623 = vsel %vm611, %v618, %v622
  %v625 = vshrl.u32 %v471, 16
  %v627 = vshll.u32 %v471, 16
  %v629 = vrot.slane %v627, 1
  %v630 = vor.u32 %v625, %v629
  %v632 = vshll.u32 %v475, 16
  %v634 = vrot.slane %v632, 1
  %v635 = vsel %vm611, %v630, %v634
  %v637 = vshrl.u32 %v472, 16
  %v639 = vshll.u32 %v472, 16
  %v641 = vrot.slane %v639, 1
  %v642 = vor.u32 %v637, %v641
  %v644 = vshll.u32 %v476, 16
  %v646 = vrot.slane %v644, 1
  %v647 = vsel %vm611, %v642, %v646
  %v649 = vshrl.u32 %v473, 16
  %v651 = vshll.u32 %v473, 16
  %v653 = vrot.slane %v651, 1
  %v654 = vor.u32 %v649, %v653
  %v656 = vshll.u32 %v477, 16
  %v658 = vrot.slane %v656, 1
  %v659 = vsel %vm611, %v654, %v658
  %v660 = vshrl.u32 %v474, 16
  %v662 = vor.u32 %v660, %v622
  %v664 = vshll.u32 %v478, 16
  %v666 = vrot.slane %v664, 1
  %v667 = vsel %vm611, %v662, %v666
  %v668 = vshrl.u32 %v475, 16
  %v670 = vor.u32 %v668, %v634
  %v672 = vshll.u32 %v479, 16
  %v674 = vrot.slane %v672, 1
  %v675 = vsel %vm611, %v670, %v674
  %v676 = vshrl.u32 %v476, 16
  %v678 = vor.u32 %v676, %v646
  %v680 = vshll.u32 %v480, 16
  %v682 = vrot.slane %v680, 1
  %v683 = vsel %vm611, %v678, %v682
  %v684 = vshrl.u32 %v477, 16
  %v686 = vor.u32 %v684, %v658
  %v688 = vshll.u32 %v481, 16
  %v690 = vrot.slane %v688, 1
  %v691 = vsel %vm611, %v686, %v690
  %v692 = vshrl.u32 %v478, 16
  %v694 = vor.u32 %v692, %v666
  %v695 = vshrl.u32 %v479, 16
  %v697 = vor.u32 %v695, %v674
  %v698 = vshrl.u32 %v480, 16
  %v700 = vor.u32 %v698, %v682
  %v701 = vshrl.u32 %v481, 16
  %v703 = vor.u32 %v701, %v690
  %v844 = vunpack.c.l.b16 %v483
  %v845 = vunpack.c.h.b16 %v483
  %v846 = vunpack.c.l.b16 %v484
  %v847 = vunpack.c.h.b16 %v484
  %v848 = vunpack.c.l.b16 %v485
  %v849 = vunpack.c.h.b16 %v485
  %v850 = vunpack.c.l.b16 %v486
  %v851 = vunpack.c.h.b16 %v486
  %v852 = vunpack.c.l.b16 %v487
  %v853 = vunpack.c.h.b16 %v487
  %v854 = vunpack.c.l.b16 %v488
  %v855 = vunpack.c.h.b16 %v488
  %v856 = vunpack.c.l.b16 %v489
  %v857 = vunpack.c.h.b16 %v489
  %v858 = vunpack.c.l.b16 %v490
  %v859 = vunpack.c.h.b16 %v490
  %v860 = vunpack.c.l.b16 %v491
  %v861 = vunpack.c.h.b16 %v491
  %v862 = vunpack.c.l.b16 %v492
  %v863 = vunpack.c.h.b16 %v492
  %v864 = vunpack.c.l.b16 %v493
  %v865 = vunpack.c.h.b16 %v493
  %v866 = vunpack.c.l.b16 %v494
  %v867 = vunpack.c.h.b16 %v494
  %v868 = vunpack.c.l.b16 %v495
  %v869 = vunpack.c.h.b16 %v495
  %v870 = vunpack.c.l.b16 %v496
  %v871 = vunpack.c.h.b16 %v496
  %v872 = vunpack.c.l.b16 %v497
  %v873 = vunpack.c.h.b16 %v497
  %v874 = vunpack.c.l.b16 %v498
  %v875 = vunpack.c.h.b16 %v498
  %v876 = vunpack.c.l.b16 %v499
  %v877 = vunpack.c.h.b16 %v499
  %v878 = vunpack.c.l.b16 %v500
  %v879 = vunpack.c.h.b16 %v500
  %v880 = vunpack.c.l.b16 %v501
  %v881 = vunpack.c.h.b16 %v501
  %v882 = vunpack.c.l.b16 %v502
  %v883 = vunpack.c.h.b16 %v502
  %v884 = vunpack.c.l.b16 %v503
  %v885 = vunpack.c.h.b16 %v503
  %v886 = vunpack.c.l.b16 %v504
  %v887 = vunpack.c.h.b16 %v504
  %v888 = vunpack.c.l.b16 %v505
  %v889 = vunpack.c.h.b16 %v505
  %v890 = vunpack.c.l.b16 %v506
  %v891 = vunpack.c.h.b16 %v506
  %v892 = vunpack.c.l.b16 %v507
  %v893 = vunpack.c.h.b16 %v507
  %v894 = vunpack.c.l.b16 %v508
  %v895 = vunpack.c.h.b16 %v508
  %v896 = vunpack.c.l.b16 %v509
  %v897 = vunpack.c.h.b16 %v509
  %v898 = vunpack.c.l.b16 %v510
  %v899 = vunpack.c.h.b16 %v510
  %v900 = vunpack.c.l.b16 %v511
  %v901 = vunpack.c.h.b16 %v511
  %v902 = vunpack.c.l.b16 %v512
  %v903 = vunpack.c.h.b16 %v512
  %v904 = vunpack.c.l.b16 %v513
  %v905 = vunpack.c.h.b16 %v513
  %v906 = vunpack.c.l.b16 %v514
  %v907 = vunpack.c.h.b16 %v514
  %v908 = vunpack.c.l.b16 %v515
  %v909 = vunpack.c.h.b16 %v515
  %v910 = vunpack.c.l.b16 %v516
  %v911 = vunpack.c.h.b16 %v516
  %v912 = vunpack.c.l.b16 %v517
  %v913 = vunpack.c.h.b16 %v517
  %v914 = vunpack.c.l.b16 %v518
  %v915 = vunpack.c.h.b16 %v518
  %v916 = vunpack.c.l.b16 %v519
  %v917 = vunpack.c.h.b16 %v519
  %v918 = vunpack.c.l.b16 %v520
  %v919 = vunpack.c.h.b16 %v520
  %v920 = vunpack.c.l.b16 %v521
  %v921 = vunpack.c.h.b16 %v521
  %v922 = vunpack.c.l.b16 %v522
  %v923 = vunpack.c.h.b16 %v522
  %v924 = vunpack.c.l.b16 %v523
  %v925 = vunpack.c.h.b16 %v523
  %v926 = vunpack.c.l.b16 %v524
  %v927 = vunpack.c.h.b16 %v524
  %v928 = vunpack.c.l.b16 %v525
  %v929 = vunpack.c.h.b16 %v525
  %v930 = vunpack.c.l.b16 %v526
  %v931 = vunpack.c.h.b16 %v526
  %v932 = vunpack.c.l.b16 %v527
  %v933 = vunpack.c.h.b16 %v527
  %v934 = vunpack.c.l.b16 %v528
  %v935 = vunpack.c.h.b16 %v528
  %v936 = vunpack.c.l.b16 %v529
  %v937 = vunpack.c.h.b16 %v529
  %v938 = vunpack.c.l.b16 %v530
  %v939 = vunpack.c.h.b16 %v530
  %v940 = vunpack.c.l.b16 %v531
  %v941 = vunpack.c.h.b16 %v531
  %v942 = vunpack.c.l.b16 %v532
  %v943 = vunpack.c.h.b16 %v532
  %v944 = vunpack.c.l.b16 %v533
  %v945 = vunpack.c.h.b16 %v533
  %v946 = vunpack.c.l.b16 %v534
  %v947 = vunpack.c.h.b16 %v534
  %v948 = vunpack.c.l.b16 %v535
  %v949 = vunpack.c.h.b16 %v535
  %v950 = vunpack.c.l.b16 %v536
  %v951 = vunpack.c.h.b16 %v536
  %v952 = vunpack.c.l.b16 %v537
  %v953 = vunpack.c.h.b16 %v537
  %v954 = vunpack.c.l.b16 %v538
  %v955 = vunpack.c.h.b16 %v538
  %v956 = vunpack.c.l.b16 %v539
  %v957 = vunpack.c.h.b16 %v539
  %v958 = vunpack.c.l.b16 %v540
  %v959 = vunpack.c.h.b16 %v540
  %v960 = vunpack.c.l.b16 %v541
  %v961 = vunpack.c.h.b16 %v541
  %v962 = vunpack.c.l.b16 %v542
  %v963 = vunpack.c.h.b16 %v542
  %v964 = vunpack.c.l.b16 %v543
  %v965 = vunpack.c.h.b16 %v543
  %v966 = vunpack.c.l.b16 %v544
  %v967 = vunpack.c.h.b16 %v544
  %v968 = vunpack.c.l.b16 %v545
  %v969 = vunpack.c.h.b16 %v545
  %v970 = vunpack.c.l.b16 %v546
  %v971 = vunpack.c.h.b16 %v546
  %v972 = vunpack.c.l.b16 %v547
  %v973 = vunpack.c.h.b16 %v547
  %v974 = vunpack.c.l.b16 %v548
  %v975 = vunpack.c.h.b16 %v548
  %v976 = vunpack.c.l.b16 %v549
  %v977 = vunpack.c.h.b16 %v549
  %v978 = vunpack.c.l.b16 %v550
  %v979 = vunpack.c.h.b16 %v550
  %v980 = vunpack.c.l.b16 %v551
  %v981 = vunpack.c.h.b16 %v551
  %v982 = vunpack.c.l.b16 %v552
  %v983 = vunpack.c.h.b16 %v552
  %v984 = vunpack.c.l.b16 %v553
  %v985 = vunpack.c.h.b16 %v553
  %v986 = vunpack.c.l.b16 %v554
  %v987 = vunpack.c.h.b16 %v554
  %v988 = vunpack.c.l.b16 %v555
  %v989 = vunpack.c.h.b16 %v555
  %v990 = vunpack.c.l.b16 %v556
  %v991 = vunpack.c.h.b16 %v556
  %v992 = vunpack.c.l.b16 %v557
  %v993 = vunpack.c.h.b16 %v557
  %v994 = vunpack.c.l.b16 %v558
  %v995 = vunpack.c.h.b16 %v558
  %v996 = vunpack.c.l.b16 %v559
  %v997 = vunpack.c.h.b16 %v559
  %v998 = vunpack.c.l.b16 %v560
  %v999 = vunpack.c.h.b16 %v560
  %v1000 = vunpack.c.l.b16 %v561
  %v1001 = vunpack.c.h.b16 %v561
  %v1002 = vunpack.c.l.b16 %v562
  %v1003 = vunpack.c.h.b16 %v562
  %v1004 = vunpack.c.l.b16 %v563
  %v1005 = vunpack.c.h.b16 %v563
  %v1006 = vunpack.c.l.b16 %v564
  %v1007 = vunpack.c.h.b16 %v564
  %v1008 = vunpack.c.l.b16 %v565
  %v1009 = vunpack.c.h.b16 %v565
  %v1010 = vunpack.c.l.b16 %v566
  %v1011 = vunpack.c.h.b16 %v566
  %v1012 = vunpack.c.l.b16 %v567
  %v1013 = vunpack.c.h.b16 %v567
  %v1014 = vunpack.c.l.b16 %v568
  %v1015 = vunpack.c.h.b16 %v568
  %v1016 = vunpack.c.l.b16 %v569
  %v1017 = vunpack.c.h.b16 %v569
  %v1018 = vunpack.c.l.b16 %v570
  %v1019 = vunpack.c.h.b16 %v570
  %v1020 = vunpack.c.l.b16 %v571
  %v1021 = vunpack.c.h.b16 %v571
  %v1022 = vunpack.c.l.b16 %v572
  %v1023 = vunpack.c.h.b16 %v572
  %v1024 = vunpack.c.l.b16 %v573
  %v1025 = vunpack.c.h.b16 %v573
  %v1026 = vunpack.c.l.b16 %v574
  %v1027 = vunpack.c.h.b16 %v574
  %v1028 = vunpack.c.l.b16 %v575
  %v1029 = vunpack.c.h.b16 %v575
  %v1030 = vunpack.c.l.b16 %v576
  %v1031 = vunpack.c.h.b16 %v576
  %v1032 = vunpack.c.l.b16 %v577
  %v1033 = vunpack.c.h.b16 %v577
  %v1034 = vunpack.c.l.b16 %v578
  %v1035 = vunpack.c.h.b16 %v578
  %v1036 = vunpack.c.l.b16 %v579
  %v1037 = vunpack.c.h.b16 %v579
  %v1038 = vunpack.c.l.b16 %v580
  %v1039 = vunpack.c.h.b16 %v580
  %v1040 = vunpack.c.l.b16 %v581
  %v1041 = vunpack.c.h.b16 %v581
  %v1042 = vunpack.c.l.b16 %v582
  %v1043 = vunpack.c.h.b16 %v582
  %v1044 = vunpack.c.l.b16 %v583
  %v1045 = vunpack.c.h.b16 %v583
  %v1046 = vunpack.c.l.b16 %v584
  %v1047 = vunpack.c.h.b16 %v584
  %v1048 = vunpack.c.l.b16 %v585
  %v1049 = vunpack.c.h.b16 %v585
  %v1050 = vunpack.c.l.b16 %v586
  %v1051 = vunpack.c.h.b16 %v586
  %v1052 = vunpack.c.l.b16 %v587
  %v1053 = vunpack.c.h.b16 %v587
  %v1054 = vunpack.c.l.b16 %v588
  %v1055 = vunpack.c.h.b16 %v588
  %v1056 = vunpack.c.l.b16 %v589
  %v1057 = vunpack.c.h.b16 %v589
  %v1058 = vunpack.c.l.b16 %v590
  %v1059 = vunpack.c.h.b16 %v590
  %v1060 = vunpack.c.l.b16 %v591
  %v1061 = vunpack.c.h.b16 %v591
  %v1062 = vunpack.c.l.b16 %v592
  %v1063 = vunpack.c.h.b16 %v592
  %v1064 = vunpack.c.l.b16 %v593
  %v1065 = vunpack.c.h.b16 %v593
  %v1066 = vunpack.c.l.b16 %v594
  %v1067 = vunpack.c.h.b16 %v594
  %v1068 = vunpack.c.l.b16 %v595
  %v1069 = vunpack.c.h.b16 %v595
  %v1070 = vunpack.c.l.b16 %v596
  %v1071 = vunpack.c.h.b16 %v596
  %v1072 = vunpack.c.l.b16 %v597
  %v1073 = vunpack.c.h.b16 %v597
  %v1074 = vunpack.c.l.b16 %v598
  %v1075 = vunpack.c.h.b16 %v598
  %v1076 = vunpack.c.l.b16 %v599
  %v1077 = vunpack.c.h.b16 %v599
  %v1078 = vunpack.c.l.b16 %v600
  %v1079 = vunpack.c.h.b16 %v600
  %v1080 = vunpack.c.l.b16 %v601
  %v1081 = vunpack.c.h.b16 %v601
  %v1082 = vunpack.c.l.b16 %v602
  %v1083 = vunpack.c.h.b16 %v602
  %v1084 = vunpack.c.l.b16 %v603
  %v1085 = vunpack.c.h.b16 %v603
  %v1086 = vunpack.c.l.b16 %v604
  %v1087 = vunpack.c.h.b16 %v604
  %v1088 = vunpack.c.l.b16 %v605
  %v1089 = vunpack.c.h.b16 %v605
  %v1090 = vunpack.c.l.b16 %v606
  %v1091 = vunpack.c.h.b16 %v606
  %v1092 = vunpack.c.l.b16 %v607
  %v1093 = vunpack.c.h.b16 %v607
  %v1094 = vunpack.c.l.b16 %v608
  %v1095 = vunpack.c.h.b16 %v608
  %v1096 = vunpack.c.l.b16 %v609
  %v1097 = vunpack.c.h.b16 %v609
  %v1098 = vunpack.c.l.b16 %v610
  %v1099 = vunpack.c.h.b16 %v610
  %v1100 = vpack.c.b16 %v848, %v844
  %v1101 = vpack.c.b16 %v849, %v845
  %v1102 = vpack.c.b16 %v850, %v846
  %v1103 = vpack.c.b16 %v851, %v847
  %v1104 = vpack.c.b16 %v856, %v852
  %v1105 = vpack.c.b16 %v857, %v853
  %v1106 = vpack.c.b16 %v858, %v854
  %v1107 = vpack.c.b16 %v859, %v855
  %v1108 = vpack.c.b16 %v864, %v860
  %v1109 = vpack.c.b16 %v865, %v861
  %v1110 = vpack.c.b16 %v866, %v862
  %v1111 = vpack.c.b16 %v867, %v863
  %v1112 = vpack.c.b16 %v872, %v868
  %v1113 = vpack.c.b16 %v873, %v869
  %v1114 = vpack.c.b16 %v874, %v870
  %v1115 = vpack.c.b16 %v875, %v871
  %v1116 = vpack.c.b16 %v880, %v876
  %v1117 = vpack.c.b16 %v881, %v877
  %v1118 = vpack.c.b16 %v882, %v878
  %v1119 = vpack.c.b16 %v883, %v879
  %v1120 = vpack.c.b16 %v888, %v884
  %v1121 = vpack.c.b16 %v889, %v885
  %v1122 = vpack.c.b16 %v890, %v886
  %v1123 = vpack.c.b16 %v891, %v887
  %v1124 = vpack.c.b16 %v896, %v892
  %v1125 = vpack.c.b16 %v897, %v893
  %v1126 = vpack.c.b16 %v898, %v894
  %v1127 = vpack.c.b16 %v899, %v895
  %v1128 = vpack.c.b16 %v904, %v900
  %v1129 = vpack.c.b16 %v905, %v901
  %v1130 = vpack.c.b16 %v906, %v902
  %v1131 = vpack.c.b16 %v907, %v903
  %v1132 = vpack.c.b16 %v912, %v908
  %v1133 = vpack.c.b16 %v913, %v909
  %v1134 = vpack.c.b16 %v914, %v910
  %v1135 = vpack.c.b16 %v915, %v911
  %v1136 = vpack.c.b16 %v920, %v916
  %v1137 = vpack.c.b16 %v921, %v917
  %v1138 = vpack.c.b16 %v922, %v918
  %v1139 = vpack.c.b16 %v923, %v919
  %v1140 = vpack.c.b16 %v928, %v924
  %v1141 = vpack.c.b16 %v929, %v925
  %v1142 = vpack.c.b16 %v930, %v926
  %v1143 = vpack.c.b16 %v931, %v927
  %v1144 = vpack.c.b16 %v936, %v932
  %v1145 = vpack.c.b16 %v937, %v933
  %v1146 = vpack.c.b16 %v938, %v934
  %v1147 = vpack.c.b16 %v939, %v935
  %v1148 = vpack.c.b16 %v944, %v940
  %v1149 = vpack.c.b16 %v945, %v941
  %v1150 = vpack.c.b16 %v946, %v942
  %v1151 = vpack.c.b16 %v947, %v943
  %v1152 = vpack.c.b16 %v952, %v948
  %v1153 = vpack.c.b16 %v953, %v949
  %v1154 = vpack.c.b16 %v954, %v950
  %v1155 = vpack.c.b16 %v955, %v951
  %v1156 = vpack.c.b16 %v960, %v956
  %v1157 = vpack.c.b16 %v961, %v957
  %v1158 = vpack.c.b16 %v962, %v958
  %v1159 = vpack.c.b16 %v963, %v959
  %v1160 = vpack.c.b16 %v968, %v964
  %v1161 = vpack.c.b16 %v969, %v965
  %v1162 = vpack.c.b16 %v970, %v966
  %v1163 = vpack.c.b16 %v971, %v967
  %v1164 = vpack.c.b16 %v976, %v972
  %v1165 = vpack.c.b16 %v977, %v973
  %v1166 = vpack.c.b16 %v978, %v974
  %v1167 = vpack.c.b16 %v979, %v975
  %v1168 = vpack.c.b16 %v984, %v980
  %v1169 = vpack.c.b16 %v985, %v981
  %v1170 = vpack.c.b16 %v986, %v982
  %v1171 = vpack.c.b16 %v987, %v983
  %v1172 = vpack.c.b16 %v992, %v988
  %v1173 = vpack.c.b16 %v993, %v989
  %v1174 = vpack.c.b16 %v994, %v990
  %v1175 = vpack.c.b16 %v995, %v991
  %v1176 = vpack.c.b16 %v1000, %v996
  %v1177 = vpack.c.b16 %v1001, %v997
  %v1178 = vpack.c.b16 %v1002, %v998
  %v1179 = vpack.c.b16 %v1003, %v999
  %v1180 = vpack.c.b16 %v1008, %v1004
  %v1181 = vpack.c.b16 %v1009, %v1005
  %v1182 = vpack.c.b16 %v1010, %v1006
  %v1183 = vpack.c.b16 %v1011, %v1007
  %v1184 = vpack.c.b16 %v1016, %v1012
  %v1185 = vpack.c.b16 %v1017, %v1013
  %v1186 = vpack.c.b16 %v1018, %v1014
  %v1187 = vpack.c.b16 %v1019, %v1015
  %v1188 = vpack.c.b16 %v1024, %v1020
  %v1189 = vpack.c.b16 %v1025, %v1021
  %v1190 = vpack.c.b16 %v1026, %v1022
  %v1191 = vpack.c.b16 %v1027, %v1023
  %v1192 = vpack.c.b16 %v1032, %v1028
  %v1193 = vpack.c.b16 %v1033, %v1029
  %v1194 = vpack.c.b16 %v1034, %v1030
  %v1195 = vpack.c.b16 %v1035, %v1031
  %v1196 = vpack.c.b16 %v1040, %v1036
  %v1197 = vpack.c.b16 %v1041, %v1037
  %v1198 = vpack.c.b16 %v1042, %v1038
  %v1199 = vpack.c.b16 %v1043, %v1039
  %v1200 = vpack.c.b16 %v1048, %v1044
  %v1201 = vpack.c.b16 %v1049, %v1045
  %v1202 = vpack.c.b16 %v1050, %v1046
  %v1203 = vpack.c.b16 %v1051, %v1047
  %v1204 = vpack.c.b16 %v1056, %v1052
  %v1205 = vpack.c.b16 %v1057, %v1053
  %v1206 = vpack.c.b16 %v1058, %v1054
  %v1207 = vpack.c.b16 %v1059, %v1055
  %v1208 = vpack.c.b16 %v1064, %v1060
  %v1209 = vpack.c.b16 %v1065, %v1061
  %v1210 = vpack.c.b16 %v1066, %v1062
  %v1211 = vpack.c.b16 %v1067, %v1063
  %v1212 = vpack.c.b16 %v1072, %v1068
  %v1213 = vpack.c.b16 %v1073, %v1069
  %v1214 = vpack.c.b16 %v1074, %v1070
  %v1215 = vpack.c.b16 %v1075, %v1071
  %v1216 = vpack.c.b16 %v1080, %v1076
  %v1217 = vpack.c.b16 %v1081, %v1077
  %v1218 = vpack.c.b16 %v1082, %v1078
  %v1219 = vpack.c.b16 %v1083, %v1079
  %v1220 = vpack.c.b16 %v1088, %v1084
  %v1221 = vpack.c.b16 %v1089, %v1085
  %v1222 = vpack.c.b16 %v1090, %v1086
  %v1223 = vpack.c.b16 %v1091, %v1087
  %v1224 = vpack.c.b16 %v1096, %v1092
  %v1225 = vpack.c.b16 %v1097, %v1093
  %v1226 = vpack.c.b16 %v1098, %v1094
  %v1227 = vpack.c.b16 %v1099, %v1095
  %1356 = vmatprep.subr.bf16.mxu0 %v1101
  %1357 = vmatpush1.bf16.msra.mxu0 %v1100
  %1358 = vmatprep.subr.bf16.mxu0 %v1105
  %1359 = vmatpush1.bf16.msra.mxu0 %v1104
  %1360 = vmatprep.subr.bf16.mxu0 %v1109
  %1361 = vmatpush1.bf16.msra.mxu0 %v1108
  %1362 = vmatprep.subr.bf16.mxu0 %v1113
  %1363 = vmatpush1.bf16.msra.mxu0 %v1112
  %1364 = vmatprep.subr.bf16.mxu0 %v1117
  %1365 = vmatpush1.bf16.msra.mxu0 %v1116
  %1366 = vmatprep.subr.bf16.mxu0 %v1121
  %1367 = vmatpush1.bf16.msra.mxu0 %v1120
  %1368 = vmatprep.subr.bf16.mxu0 %v1125
  %1369 = vmatpush1.bf16.msra.mxu0 %v1124
  %1370 = vmatprep.subr.bf16.mxu0 %v1129
  %1371 = vmatpush1.bf16.msra.mxu0 %v1128
  %1372 = vmatprep.subr.bf16.mxu0 %v1133
  %1373 = vmatpush1.bf16.msra.mxu0 %v1132
  %1374 = vmatprep.subr.bf16.mxu0 %v1137
  %1375 = vmatpush1.bf16.msra.mxu0 %v1136
  %1376 = vmatprep.subr.bf16.mxu0 %v1141
  %1377 = vmatpush1.bf16.msra.mxu0 %v1140
  %1378 = vmatprep.subr.bf16.mxu0 %v1145
  %1379 = vmatpush1.bf16.msra.mxu0 %v1144
  %1380 = vmatprep.subr.bf16.mxu0 %v1149
  %1381 = vmatpush1.bf16.msra.mxu0 %v1148
  %1382 = vmatprep.subr.bf16.mxu0 %v1153
  %1383 = vmatpush1.bf16.msra.mxu0 %v1152
  %1384 = vmatprep.subr.bf16.mxu0 %v1157
  %1385 = vmatpush1.bf16.msra.mxu0 %v1156
  %1386 = vmatprep.subr.bf16.mxu0 %v1161
  %1387 = vmatpush1.bf16.msra.mxu0 %v1160
  %1388 = vmatprep.mubr.bf16.mxu0 %v635
  %1389 = vmatmul.mubr.bf16.gmra.mrb[0].mxu0 %v623
  %v1390 = vpop.f32.mrb[0].mxu0
  %v1391 = vadd.f32 0.0, %v1390
  %v1392 = vpop.f32.mrb[0].mxu0
  %v1393 = vadd.f32 0.0, %v1392
  %v1394 = vpop.f32.mrb[0].mxu0
  %v1395 = vadd.f32 0.0, %v1394
  %v1396 = vpop.f32.mrb[0].mxu0
  %v1397 = vadd.f32 0.0, %v1396
  %1398 = vmatprep.mubr.bf16.mxu0 %v675
  %1399 = vmatmul.mubr.bf16.gmra.mrb[0].mxu0 %v667
  %v1400 = vpop.f32.mrb[0].mxu0
  %v1401 = vpop.f32.mrb[0].mxu0
  %v1402 = vpop.f32.mrb[0].mxu0
  %v1403 = vadd.f32 0.0, %v1402
  %v1404 = vpop.f32.mrb[0].mxu0
  %v1405 = vadd.f32 0.0, %v1404
  %1406 = vmatprep.mubr.bf16.mxu0 %v697
  %1407 = vmatmul.mubr.bf16.gmra.mrb[0].mxu0 %v694
  %v1408 = vpop.f32.mrb[0].mxu0
  %v1409 = vadd.f32 0.0, %v1408
  %v1410 = vpop.f32.mrb[0].mxu0
  %v1411 = vadd.f32 0.0, %v1410
  %v1412 = vpop.f32.mrb[0].mxu0
  %v1413 = vpop.f32.mrb[0].mxu0
  %1414 = vdwg.mxu0
  %1415 = vmatprep.subr.bf16.mxu0 %v1165
  %1416 = vmatpush1.bf16.msra.mxu0 %v1164
  %1417 = vmatprep.subr.bf16.mxu0 %v1169
  %1418 = vmatpush1.bf16.msra.mxu0 %v1168
  %1419 = vmatprep.subr.bf16.mxu0 %v1173
  %1420 = vmatpush1.bf16.msra.mxu0 %v1172
  %1421 = vmatprep.subr.bf16.mxu0 %v1177
  %1422 = vmatpush1.bf16.msra.mxu0 %v1176
  %1423 = vmatprep.subr.bf16.mxu0 %v1181
  %1424 = vmatpush1.bf16.msra.mxu0 %v1180
  %1425 = vmatprep.subr.bf16.mxu0 %v1185
  %1426 = vmatpush1.bf16.msra.mxu0 %v1184
  %1427 = vmatprep.subr.bf16.mxu0 %v1189
  %1428 = vmatpush1.bf16.msra.mxu0 %v1188
  %1429 = vmatprep.subr.bf16.mxu0 %v1193
  %1430 = vmatpush1.bf16.msra.mxu0 %v1192
  %1431 = vmatprep.subr.bf16.mxu0 %v1197
  %1432 = vmatpush1.bf16.msra.mxu0 %v1196
  %1433 = vmatprep.subr.bf16.mxu0 %v1201
  %1434 = vmatpush1.bf16.msra.mxu0 %v1200
  %1435 = vmatprep.subr.bf16.mxu0 %v1205
  %1436 = vmatpush1.bf16.msra.mxu0 %v1204
  %1437 = vmatprep.subr.bf16.mxu0 %v1209
  %1438 = vmatpush1.bf16.msra.mxu0 %v1208
  %1439 = vmatprep.subr.bf16.mxu0 %v1213
  %1440 = vmatpush1.bf16.msra.mxu0 %v1212
  %1441 = vmatprep.subr.bf16.mxu0 %v1217
  %1442 = vmatpush1.bf16.msra.mxu0 %v1216
  %1443 = vmatprep.subr.bf16.mxu0 %v1221
  %1444 = vmatpush1.bf16.msra.mxu0 %v1220
  %1445 = vmatprep.subr.bf16.mxu0 %v1225
  %1446 = vmatpush1.bf16.msra.mxu0 %v1224
  %1447 = vmatprep.mubr.bf16.mxu0 %v659
  %1448 = vmatmul.mubr.bf16.gmra.mrb[0].mxu0 %v647
  %v1449 = vpop.f32.mrb[0].mxu0
  %v1450 = vadd.f32 %v1391, %v1449
  %v1451 = vpop.f32.mrb[0].mxu0
  %v1452 = vadd.f32 %v1393, %v1451
  %v1453 = vpop.f32.mrb[0].mxu0
  %v1454 = vadd.f32 %v1395, %v1453
  %v1455 = vpop.f32.mrb[0].mxu0
  %v1456 = vadd.f32 %v1397, %v1455
  %1457 = vmatprep.mubr.bf16.mxu0 %v691
  %1458 = vmatmul.mubr.bf16.gmra.mrb[0].mxu0 %v683
  %v1459 = vpop.f32.mrb[0].mxu0
  %v1460 = vpop.f32.mrb[0].mxu0
  %v1461 = vpop.f32.mrb[0].mxu0
  %v1462 = vadd.f32 %v1403, %v1461
  %v1463 = vpop.f32.mrb[0].mxu0
  %v1464 = vadd.f32 %v1405, %v1463
  %1465 = vmatprep.mubr.bf16.mxu0 %v703
  %1466 = vmatmul.mubr.bf16.gmra.mrb[0].mxu0 %v700
  %v1467 = vpop.f32.mrb[0].mxu0
  %v1468 = vadd.f32 %v1409, %v1467
  %v1469 = vpop.f32.mrb[0].mxu0
  %v1470 = vadd.f32 %v1411, %v1469
  %v1471 = vpop.f32.mrb[0].mxu0
  %v1472 = vpop.f32.mrb[0].mxu0
  %1473 = vdwg.mxu0
  %1474 = vmatprep.subr.bf16.mxu0 %v1103
  %1475 = vmatpush1.bf16.msra.mxu0 %v1102
  %1476 = vmatprep.subr.bf16.mxu0 %v1107
  %1477 = vmatpush1.bf16.msra.mxu0 %v1106
  %1478 = vmatprep.subr.bf16.mxu0 %v1111
  %1479 = vmatpush1.bf16.msra.mxu0 %v1110
  %1480 = vmatprep.subr.bf16.mxu0 %v1115
  %1481 = vmatpush1.bf16.msra.mxu0 %v1114
  %1482 = vmatprep.subr.bf16.mxu0 %v1119
  %1483 = vmatpush1.bf16.msra.mxu0 %v1118
  %1484 = vmatprep.subr.bf16.mxu0 %v1123
  %1485 = vmatpush1.bf16.msra.mxu0 %v1122
  %1486 = vmatprep.subr.bf16.mxu0 %v1127
  %1487 = vmatpush1.bf16.msra.mxu0 %v1126
  %1488 = vmatprep.subr.bf16.mxu0 %v1131
  %1489 = vmatpush1.bf16.msra.mxu0 %v1130
  %1490 = vmatprep.subr.bf16.mxu0 %v1135
  %1491 = vmatpush1.bf16.msra.mxu0 %v1134
  %1492 = vmatprep.subr.bf16.mxu0 %v1139
  %1493 = vmatpush1.bf16.msra.mxu0 %v1138
  %1494 = vmatprep.subr.bf16.mxu0 %v1143
  %1495 = vmatpush1.bf16.msra.mxu0 %v1142
  %1496 = vmatprep.subr.bf16.mxu0 %v1147
  %1497 = vmatpush1.bf16.msra.mxu0 %v1146
  %1498 = vmatprep.subr.bf16.mxu0 %v1151
  %1499 = vmatpush1.bf16.msra.mxu0 %v1150
  %1500 = vmatprep.subr.bf16.mxu0 %v1155
  %1501 = vmatpush1.bf16.msra.mxu0 %v1154
  %1502 = vmatprep.subr.bf16.mxu0 %v1159
  %1503 = vmatpush1.bf16.msra.mxu0 %v1158
  %1504 = vmatprep.subr.bf16.mxu0 %v1163
  %1505 = vmatpush1.bf16.msra.mxu0 %v1162
  %1506 = vmatprep.mubr.bf16.mxu0 %v635
  %1507 = vmatmul.mubr.bf16.gmra.mrb[0].mxu0 %v623
  %v1508 = vpop.f32.mrb[0].mxu0
  %v1509 = vadd.f32 0.0, %v1508
  %v1510 = vpop.f32.mrb[0].mxu0
  %v1511 = vadd.f32 0.0, %v1510
  %v1512 = vpop.f32.mrb[0].mxu0
  %v1513 = vadd.f32 0.0, %v1512
  %v1514 = vpop.f32.mrb[0].mxu0
  %v1515 = vadd.f32 0.0, %v1514
  %1516 = vmatprep.mubr.bf16.mxu0 %v675
  %1517 = vmatmul.mubr.bf16.gmra.mrb[0].mxu0 %v667
  %v1518 = vpop.f32.mrb[0].mxu0
  %v1519 = vpop.f32.mrb[0].mxu0
  %v1520 = vpop.f32.mrb[0].mxu0
  %v1521 = vadd.f32 0.0, %v1520
  %v1522 = vpop.f32.mrb[0].mxu0
  %v1523 = vadd.f32 0.0, %v1522
  %1524 = vmatprep.mubr.bf16.mxu0 %v697
  %1525 = vmatmul.mubr.bf16.gmra.mrb[0].mxu0 %v694
  %v1526 = vpop.f32.mrb[0].mxu0
  %v1527 = vadd.f32 0.0, %v1526
  %v1528 = vpop.f32.mrb[0].mxu0
  %v1529 = vadd.f32 0.0, %v1528
  %v1530 = vpop.f32.mrb[0].mxu0
  %v1531 = vpop.f32.mrb[0].mxu0
  %1532 = vdwg.mxu0
  %1533 = vmatprep.subr.bf16.mxu0 %v1167
  %1534 = vmatpush1.bf16.msra.mxu0 %v1166
  %1535 = vmatprep.subr.bf16.mxu0 %v1171
  %1536 = vmatpush1.bf16.msra.mxu0 %v1170
  %1537 = vmatprep.subr.bf16.mxu0 %v1175
  %1538 = vmatpush1.bf16.msra.mxu0 %v1174
  %1539 = vmatprep.subr.bf16.mxu0 %v1179
  %1540 = vmatpush1.bf16.msra.mxu0 %v1178
  %1541 = vmatprep.subr.bf16.mxu0 %v1183
  %1542 = vmatpush1.bf16.msra.mxu0 %v1182
  %1543 = vmatprep.subr.bf16.mxu0 %v1187
  %1544 = vmatpush1.bf16.msra.mxu0 %v1186
  %1545 = vmatprep.subr.bf16.mxu0 %v1191
  %1546 = vmatpush1.bf16.msra.mxu0 %v1190
  %1547 = vmatprep.subr.bf16.mxu0 %v1195
  %1548 = vmatpush1.bf16.msra.mxu0 %v1194
  %1549 = vmatprep.subr.bf16.mxu0 %v1199
  %1550 = vmatpush1.bf16.msra.mxu0 %v1198
  %1551 = vmatprep.subr.bf16.mxu0 %v1203
  %1552 = vmatpush1.bf16.msra.mxu0 %v1202
  %1553 = vmatprep.subr.bf16.mxu0 %v1207
  %1554 = vmatpush1.bf16.msra.mxu0 %v1206
  %1555 = vmatprep.subr.bf16.mxu0 %v1211
  %1556 = vmatpush1.bf16.msra.mxu0 %v1210
  %1557 = vmatprep.subr.bf16.mxu0 %v1215
  %1558 = vmatpush1.bf16.msra.mxu0 %v1214
  %1559 = vmatprep.subr.bf16.mxu0 %v1219
  %1560 = vmatpush1.bf16.msra.mxu0 %v1218
  %1561 = vmatprep.subr.bf16.mxu0 %v1223
  %1562 = vmatpush1.bf16.msra.mxu0 %v1222
  %1563 = vmatprep.subr.bf16.mxu0 %v1227
  %1564 = vmatpush1.bf16.msra.mxu0 %v1226
  %1565 = vmatprep.mubr.bf16.mxu0 %v659
  %1566 = vmatmul.mubr.bf16.gmra.mrb[0].mxu0 %v647
  %v1567 = vpop.f32.mrb[0].mxu0
  %v1568 = vadd.f32 %v1509, %v1567
  %v1569 = vpop.f32.mrb[0].mxu0
  %v1570 = vadd.f32 %v1511, %v1569
  %v1571 = vpop.f32.mrb[0].mxu0
  %v1572 = vadd.f32 %v1513, %v1571
  %v1573 = vpop.f32.mrb[0].mxu0
  %v1574 = vadd.f32 %v1515, %v1573
  %1575 = vmatprep.mubr.bf16.mxu0 %v691
  %1576 = vmatmul.mubr.bf16.gmra.mrb[0].mxu0 %v683
  %v1577 = vpop.f32.mrb[0].mxu0
  %v1578 = vpop.f32.mrb[0].mxu0
  %v1579 = vpop.f32.mrb[0].mxu0
  %v1580 = vadd.f32 %v1521, %v1579
  %v1581 = vpop.f32.mrb[0].mxu0
  %v1582 = vadd.f32 %v1523, %v1581
  %1583 = vmatprep.mubr.bf16.mxu0 %v703
  %1584 = vmatmul.mubr.bf16.gmra.mrb[0].mxu0 %v700
  %v1585 = vpop.f32.mrb[0].mxu0
  %v1586 = vadd.f32 %v1527, %v1585
  %v1587 = vpop.f32.mrb[0].mxu0
  %v1588 = vadd.f32 %v1529, %v1587
  %v1589 = vpop.f32.mrb[0].mxu0
  %v1590 = vpop.f32.mrb[0].mxu0
  %1591 = vdwg.mxu0
  %v1720 = vunpack.c.l.b16 %v318
  %v1721 = vunpack.c.h.b16 %v318
  %v1722 = vunpack.c.l.b16 %v319
  %v1723 = vunpack.c.h.b16 %v319
  %v1724 = vunpack.c.l.b16 %v320
  %v1725 = vunpack.c.h.b16 %v320
  %v1726 = vunpack.c.l.b16 %v321
  %v1727 = vunpack.c.h.b16 %v321
  %v1728 = vunpack.c.l.b16 %v322
  %v1729 = vunpack.c.h.b16 %v322
  %v1730 = vunpack.c.l.b16 %v323
  %v1731 = vunpack.c.h.b16 %v323
  %v1732 = vunpack.c.l.b16 %v324
  %v1733 = vunpack.c.h.b16 %v324
  %v1734 = vunpack.c.l.b16 %v325
  %v1735 = vunpack.c.h.b16 %v325
  %v1736 = vunpack.c.l.b16 %v326
  %v1737 = vunpack.c.h.b16 %v326
  %v1738 = vunpack.c.l.b16 %v327
  %v1739 = vunpack.c.h.b16 %v327
  %v1740 = vunpack.c.l.b16 %v328
  %v1741 = vunpack.c.h.b16 %v328
  %v1742 = vunpack.c.l.b16 %v329
  %v1743 = vunpack.c.h.b16 %v329
  %v1744 = vunpack.c.l.b16 %v330
  %v1745 = vunpack.c.h.b16 %v330
  %v1746 = vunpack.c.l.b16 %v331
  %v1747 = vunpack.c.h.b16 %v331
  %v1748 = vunpack.c.l.b16 %v332
  %v1749 = vunpack.c.h.b16 %v332
  %v1750 = vunpack.c.l.b16 %v333
  %v1751 = vunpack.c.h.b16 %v333
  %v1752 = vunpack.c.l.b16 %v334
  %v1753 = vunpack.c.h.b16 %v334
  %v1754 = vunpack.c.l.b16 %v335
  %v1755 = vunpack.c.h.b16 %v335
  %v1756 = vunpack.c.l.b16 %v336
  %v1757 = vunpack.c.h.b16 %v336
  %v1758 = vunpack.c.l.b16 %v337
  %v1759 = vunpack.c.h.b16 %v337
  %v1760 = vunpack.c.l.b16 %v338
  %v1761 = vunpack.c.h.b16 %v338
  %v1762 = vunpack.c.l.b16 %v339
  %v1763 = vunpack.c.h.b16 %v339
  %v1764 = vunpack.c.l.b16 %v340
  %v1765 = vunpack.c.h.b16 %v340
  %v1766 = vunpack.c.l.b16 %v341
  %v1767 = vunpack.c.h.b16 %v341
  %v1768 = vunpack.c.l.b16 %v342
  %v1769 = vunpack.c.h.b16 %v342
  %v1770 = vunpack.c.l.b16 %v343
  %v1771 = vunpack.c.h.b16 %v343
  %v1772 = vunpack.c.l.b16 %v344
  %v1773 = vunpack.c.h.b16 %v344
  %v1774 = vunpack.c.l.b16 %v345
  %v1775 = vunpack.c.h.b16 %v345
  %v1776 = vunpack.c.l.b16 %v346
  %v1777 = vunpack.c.h.b16 %v346
  %v1778 = vunpack.c.l.b16 %v347
  %v1779 = vunpack.c.h.b16 %v347
  %v1780 = vunpack.c.l.b16 %v348
  %v1781 = vunpack.c.h.b16 %v348
  %v1782 = vunpack.c.l.b16 %v349
  %v1783 = vunpack.c.h.b16 %v349
  %v1784 = vunpack.c.l.b16 %v350
  %v1785 = vunpack.c.h.b16 %v350
  %v1786 = vunpack.c.l.b16 %v351
  %v1787 = vunpack.c.h.b16 %v351
  %v1788 = vunpack.c.l.b16 %v352
  %v1789 = vunpack.c.h.b16 %v352
  %v1790 = vunpack.c.l.b16 %v353
  %v1791 = vunpack.c.h.b16 %v353
  %v1792 = vunpack.c.l.b16 %v354
  %v1793 = vunpack.c.h.b16 %v354
  %v1794 = vunpack.c.l.b16 %v355
  %v1795 = vunpack.c.h.b16 %v355
  %v1796 = vunpack.c.l.b16 %v356
  %v1797 = vunpack.c.h.b16 %v356
  %v1798 = vunpack.c.l.b16 %v357
  %v1799 = vunpack.c.h.b16 %v357
  %v1800 = vunpack.c.l.b16 %v358
  %v1801 = vunpack.c.h.b16 %v358
  %v1802 = vunpack.c.l.b16 %v359
  %v1803 = vunpack.c.h.b16 %v359
  %v1804 = vunpack.c.l.b16 %v360
  %v1805 = vunpack.c.h.b16 %v360
  %v1806 = vunpack.c.l.b16 %v361
  %v1807 = vunpack.c.h.b16 %v361
  %v1808 = vunpack.c.l.b16 %v362
  %v1809 = vunpack.c.h.b16 %v362
  %v1810 = vunpack.c.l.b16 %v363
  %v1811 = vunpack.c.h.b16 %v363
  %v1812 = vunpack.c.l.b16 %v364
  %v1813 = vunpack.c.h.b16 %v364
  %v1814 = vunpack.c.l.b16 %v365
  %v1815 = vunpack.c.h.b16 %v365
  %v1816 = vunpack.c.l.b16 %v366
  %v1817 = vunpack.c.h.b16 %v366
  %v1818 = vunpack.c.l.b16 %v367
  %v1819 = vunpack.c.h.b16 %v367
  %v1820 = vunpack.c.l.b16 %v368
  %v1821 = vunpack.c.h.b16 %v368
  %v1822 = vunpack.c.l.b16 %v369
  %v1823 = vunpack.c.h.b16 %v369
  %v1824 = vunpack.c.l.b16 %v370
  %v1825 = vunpack.c.h.b16 %v370
  %v1826 = vunpack.c.l.b16 %v371
  %v1827 = vunpack.c.h.b16 %v371
  %v1828 = vunpack.c.l.b16 %v372
  %v1829 = vunpack.c.h.b16 %v372
  %v1830 = vunpack.c.l.b16 %v373
  %v1831 = vunpack.c.h.b16 %v373
  %v1832 = vunpack.c.l.b16 %v374
  %v1833 = vunpack.c.h.b16 %v374
  %v1834 = vunpack.c.l.b16 %v375
  %v1835 = vunpack.c.h.b16 %v375
  %v1836 = vunpack.c.l.b16 %v376
  %v1837 = vunpack.c.h.b16 %v376
  %v1838 = vunpack.c.l.b16 %v377
  %v1839 = vunpack.c.h.b16 %v377
  %v1840 = vunpack.c.l.b16 %v378
  %v1841 = vunpack.c.h.b16 %v378
  %v1842 = vunpack.c.l.b16 %v379
  %v1843 = vunpack.c.h.b16 %v379
  %v1844 = vunpack.c.l.b16 %v380
  %v1845 = vunpack.c.h.b16 %v380
  %v1846 = vunpack.c.l.b16 %v381
  %v1847 = vunpack.c.h.b16 %v381
  %v1848 = vunpack.c.l.b16 %v382
  %v1849 = vunpack.c.h.b16 %v382
  %v1850 = vunpack.c.l.b16 %v383
  %v1851 = vunpack.c.h.b16 %v383
  %v1852 = vunpack.c.l.b16 %v384
  %v1853 = vunpack.c.h.b16 %v384
  %v1854 = vunpack.c.l.b16 %v385
  %v1855 = vunpack.c.h.b16 %v385
  %v1856 = vunpack.c.l.b16 %v386
  %v1857 = vunpack.c.h.b16 %v386
  %v1858 = vunpack.c.l.b16 %v387
  %v1859 = vunpack.c.h.b16 %v387
  %v1860 = vunpack.c.l.b16 %v388
  %v1861 = vunpack.c.h.b16 %v388
  %v1862 = vunpack.c.l.b16 %v389
  %v1863 = vunpack.c.h.b16 %v389
  %v1864 = vunpack.c.l.b16 %v390
  %v1865 = vunpack.c.h.b16 %v390
  %v1866 = vunpack.c.l.b16 %v391
  %v1867 = vunpack.c.h.b16 %v391
  %v1868 = vunpack.c.l.b16 %v392
  %v1869 = vunpack.c.h.b16 %v392
  %v1870 = vunpack.c.l.b16 %v393
  %v1871 = vunpack.c.h.b16 %v393
  %v1872 = vunpack.c.l.b16 %v394
  %v1873 = vunpack.c.h.b16 %v394
  %v1874 = vunpack.c.l.b16 %v395
  %v1875 = vunpack.c.h.b16 %v395
  %v1876 = vunpack.c.l.b16 %v396
  %v1877 = vunpack.c.h.b16 %v396
  %v1878 = vunpack.c.l.b16 %v397
  %v1879 = vunpack.c.h.b16 %v397
  %v1880 = vunpack.c.l.b16 %v398
  %v1881 = vunpack.c.h.b16 %v398
  %v1882 = vunpack.c.l.b16 %v399
  %v1883 = vunpack.c.h.b16 %v399
  %v1884 = vunpack.c.l.b16 %v400
  %v1885 = vunpack.c.h.b16 %v400
  %v1886 = vunpack.c.l.b16 %v401
  %v1887 = vunpack.c.h.b16 %v401
  %v1888 = vunpack.c.l.b16 %v402
  %v1889 = vunpack.c.h.b16 %v402
  %v1890 = vunpack.c.l.b16 %v403
  %v1891 = vunpack.c.h.b16 %v403
  %v1892 = vunpack.c.l.b16 %v404
  %v1893 = vunpack.c.h.b16 %v404
  %v1894 = vunpack.c.l.b16 %v405
  %v1895 = vunpack.c.h.b16 %v405
  %v1896 = vunpack.c.l.b16 %v406
  %v1897 = vunpack.c.h.b16 %v406
  %v1898 = vunpack.c.l.b16 %v407
  %v1899 = vunpack.c.h.b16 %v407
  %v1900 = vunpack.c.l.b16 %v408
  %v1901 = vunpack.c.h.b16 %v408
  %v1902 = vunpack.c.l.b16 %v409
  %v1903 = vunpack.c.h.b16 %v409
  %v1904 = vunpack.c.l.b16 %v410
  %v1905 = vunpack.c.h.b16 %v410
  %v1906 = vunpack.c.l.b16 %v411
  %v1907 = vunpack.c.h.b16 %v411
  %v1908 = vunpack.c.l.b16 %v412
  %v1909 = vunpack.c.h.b16 %v412
  %v1910 = vunpack.c.l.b16 %v413
  %v1911 = vunpack.c.h.b16 %v413
  %v1912 = vunpack.c.l.b16 %v414
  %v1913 = vunpack.c.h.b16 %v414
  %v1914 = vunpack.c.l.b16 %v415
  %v1915 = vunpack.c.h.b16 %v415
  %v1916 = vunpack.c.l.b16 %v416
  %v1917 = vunpack.c.h.b16 %v416
  %v1918 = vunpack.c.l.b16 %v417
  %v1919 = vunpack.c.h.b16 %v417
  %v1920 = vunpack.c.l.b16 %v418
  %v1921 = vunpack.c.h.b16 %v418
  %v1922 = vunpack.c.l.b16 %v419
  %v1923 = vunpack.c.h.b16 %v419
  %v1924 = vunpack.c.l.b16 %v420
  %v1925 = vunpack.c.h.b16 %v420
  %v1926 = vunpack.c.l.b16 %v421
  %v1927 = vunpack.c.h.b16 %v421
  %v1928 = vunpack.c.l.b16 %v422
  %v1929 = vunpack.c.h.b16 %v422
  %v1930 = vunpack.c.l.b16 %v423
  %v1931 = vunpack.c.h.b16 %v423
  %v1932 = vunpack.c.l.b16 %v424
  %v1933 = vunpack.c.h.b16 %v424
  %v1934 = vunpack.c.l.b16 %v425
  %v1935 = vunpack.c.h.b16 %v425
  %v1936 = vunpack.c.l.b16 %v426
  %v1937 = vunpack.c.h.b16 %v426
  %v1938 = vunpack.c.l.b16 %v427
  %v1939 = vunpack.c.h.b16 %v427
  %v1940 = vunpack.c.l.b16 %v428
  %v1941 = vunpack.c.h.b16 %v428
  %v1942 = vunpack.c.l.b16 %v429
  %v1943 = vunpack.c.h.b16 %v429
  %v1944 = vunpack.c.l.b16 %v430
  %v1945 = vunpack.c.h.b16 %v430
  %v1946 = vunpack.c.l.b16 %v431
  %v1947 = vunpack.c.h.b16 %v431
  %v1948 = vunpack.c.l.b16 %v432
  %v1949 = vunpack.c.h.b16 %v432
  %v1950 = vunpack.c.l.b16 %v433
  %v1951 = vunpack.c.h.b16 %v433
  %v1952 = vunpack.c.l.b16 %v434
  %v1953 = vunpack.c.h.b16 %v434
  %v1954 = vunpack.c.l.b16 %v435
  %v1955 = vunpack.c.h.b16 %v435
  %v1956 = vunpack.c.l.b16 %v436
  %v1957 = vunpack.c.h.b16 %v436
  %v1958 = vunpack.c.l.b16 %v437
  %v1959 = vunpack.c.h.b16 %v437
  %v1960 = vunpack.c.l.b16 %v438
  %v1961 = vunpack.c.h.b16 %v438
  %v1962 = vunpack.c.l.b16 %v439
  %v1963 = vunpack.c.h.b16 %v439
  %v1964 = vunpack.c.l.b16 %v440
  %v1965 = vunpack.c.h.b16 %v440
  %v1966 = vunpack.c.l.b16 %v441
  %v1967 = vunpack.c.h.b16 %v441
  %v1968 = vunpack.c.l.b16 %v442
  %v1969 = vunpack.c.h.b16 %v442
  %v1970 = vunpack.c.l.b16 %v443
  %v1971 = vunpack.c.h.b16 %v443
  %v1972 = vunpack.c.l.b16 %v444
  %v1973 = vunpack.c.h.b16 %v444
  %v1974 = vunpack.c.l.b16 %v445
  %v1975 = vunpack.c.h.b16 %v445
  %v1976 = vpack.c.b16 %v1724, %v1720
  %v1977 = vpack.c.b16 %v1725, %v1721
  %v1978 = vpack.c.b16 %v1726, %v1722
  %v1979 = vpack.c.b16 %v1727, %v1723
  %v1980 = vpack.c.b16 %v1732, %v1728
  %v1981 = vpack.c.b16 %v1733, %v1729
  %v1982 = vpack.c.b16 %v1734, %v1730
  %v1983 = vpack.c.b16 %v1735, %v1731
  %v1984 = vpack.c.b16 %v1740, %v1736
  %v1985 = vpack.c.b16 %v1741, %v1737
  %v1986 = vpack.c.b16 %v1742, %v1738
  %v1987 = vpack.c.b16 %v1743, %v1739
  %v1988 = vpack.c.b16 %v1748, %v1744
  %v1989 = vpack.c.b16 %v1749, %v1745
  %v1990 = vpack.c.b16 %v1750, %v1746
  %v1991 = vpack.c.b16 %v1751, %v1747
  %v1992 = vpack.c.b16 %v1756, %v1752
  %v1993 = vpack.c.b16 %v1757, %v1753
  %v1994 = vpack.c.b16 %v1758, %v1754
  %v1995 = vpack.c.b16 %v1759, %v1755
  %v1996 = vpack.c.b16 %v1764, %v1760
  %v1997 = vpack.c.b16 %v1765, %v1761
  %v1998 = vpack.c.b16 %v1766, %v1762
  %v1999 = vpack.c.b16 %v1767, %v1763
  %v2000 = vpack.c.b16 %v1772, %v1768
  %v2001 = vpack.c.b16 %v1773, %v1769
  %v2002 = vpack.c.b16 %v1774, %v1770
  %v2003 = vpack.c.b16 %v1775, %v1771
  %v2004 = vpack.c.b16 %v1780, %v1776
  %v2005 = vpack.c.b16 %v1781, %v1777
  %v2006 = vpack.c.b16 %v1782, %v1778
  %v2007 = vpack.c.b16 %v1783, %v1779
  %v2008 = vpack.c.b16 %v1788, %v1784
  %v2009 = vpack.c.b16 %v1789, %v1785
  %v2010 = vpack.c.b16 %v1790, %v1786
  %v2011 = vpack.c.b16 %v1791, %v1787
  %v2012 = vpack.c.b16 %v1796, %v1792
  %v2013 = vpack.c.b16 %v1797, %v1793
  %v2014 = vpack.c.b16 %v1798, %v1794
  %v2015 = vpack.c.b16 %v1799, %v1795
  %v2016 = vpack.c.b16 %v1804, %v1800
  %v2017 = vpack.c.b16 %v1805, %v1801
  %v2018 = vpack.c.b16 %v1806, %v1802
  %v2019 = vpack.c.b16 %v1807, %v1803
  %v2020 = vpack.c.b16 %v1812, %v1808
  %v2021 = vpack.c.b16 %v1813, %v1809
  %v2022 = vpack.c.b16 %v1814, %v1810
  %v2023 = vpack.c.b16 %v1815, %v1811
  %v2024 = vpack.c.b16 %v1820, %v1816
  %v2025 = vpack.c.b16 %v1821, %v1817
  %v2026 = vpack.c.b16 %v1822, %v1818
  %v2027 = vpack.c.b16 %v1823, %v1819
  %v2028 = vpack.c.b16 %v1828, %v1824
  %v2029 = vpack.c.b16 %v1829, %v1825
  %v2030 = vpack.c.b16 %v1830, %v1826
  %v2031 = vpack.c.b16 %v1831, %v1827
  %v2032 = vpack.c.b16 %v1836, %v1832
  %v2033 = vpack.c.b16 %v1837, %v1833
  %v2034 = vpack.c.b16 %v1838, %v1834
  %v2035 = vpack.c.b16 %v1839, %v1835
  %v2036 = vpack.c.b16 %v1844, %v1840
  %v2037 = vpack.c.b16 %v1845, %v1841
  %v2038 = vpack.c.b16 %v1846, %v1842
  %v2039 = vpack.c.b16 %v1847, %v1843
  %v2040 = vpack.c.b16 %v1852, %v1848
  %v2041 = vpack.c.b16 %v1853, %v1849
  %v2042 = vpack.c.b16 %v1854, %v1850
  %v2043 = vpack.c.b16 %v1855, %v1851
  %v2044 = vpack.c.b16 %v1860, %v1856
  %v2045 = vpack.c.b16 %v1861, %v1857
  %v2046 = vpack.c.b16 %v1862, %v1858
  %v2047 = vpack.c.b16 %v1863, %v1859
  %v2048 = vpack.c.b16 %v1868, %v1864
  %v2049 = vpack.c.b16 %v1869, %v1865
  %v2050 = vpack.c.b16 %v1870, %v1866
  %v2051 = vpack.c.b16 %v1871, %v1867
  %v2052 = vpack.c.b16 %v1876, %v1872
  %v2053 = vpack.c.b16 %v1877, %v1873
  %v2054 = vpack.c.b16 %v1878, %v1874
  %v2055 = vpack.c.b16 %v1879, %v1875
  %v2056 = vpack.c.b16 %v1884, %v1880
  %v2057 = vpack.c.b16 %v1885, %v1881
  %v2058 = vpack.c.b16 %v1886, %v1882
  %v2059 = vpack.c.b16 %v1887, %v1883
  %v2060 = vpack.c.b16 %v1892, %v1888
  %v2061 = vpack.c.b16 %v1893, %v1889
  %v2062 = vpack.c.b16 %v1894, %v1890
  %v2063 = vpack.c.b16 %v1895, %v1891
  %v2064 = vpack.c.b16 %v1900, %v1896
  %v2065 = vpack.c.b16 %v1901, %v1897
  %v2066 = vpack.c.b16 %v1902, %v1898
  %v2067 = vpack.c.b16 %v1903, %v1899
  %v2068 = vpack.c.b16 %v1908, %v1904
  %v2069 = vpack.c.b16 %v1909, %v1905
  %v2070 = vpack.c.b16 %v1910, %v1906
  %v2071 = vpack.c.b16 %v1911, %v1907
  %v2072 = vpack.c.b16 %v1916, %v1912
  %v2073 = vpack.c.b16 %v1917, %v1913
  %v2074 = vpack.c.b16 %v1918, %v1914
  %v2075 = vpack.c.b16 %v1919, %v1915
  %v2076 = vpack.c.b16 %v1924, %v1920
  %v2077 = vpack.c.b16 %v1925, %v1921
  %v2078 = vpack.c.b16 %v1926, %v1922
  %v2079 = vpack.c.b16 %v1927, %v1923
  %v2080 = vpack.c.b16 %v1932, %v1928
  %v2081 = vpack.c.b16 %v1933, %v1929
  %v2082 = vpack.c.b16 %v1934, %v1930
  %v2083 = vpack.c.b16 %v1935, %v1931
  %v2084 = vpack.c.b16 %v1940, %v1936
  %v2085 = vpack.c.b16 %v1941, %v1937
  %v2086 = vpack.c.b16 %v1942, %v1938
  %v2087 = vpack.c.b16 %v1943, %v1939
  %v2088 = vpack.c.b16 %v1948, %v1944
  %v2089 = vpack.c.b16 %v1949, %v1945
  %v2090 = vpack.c.b16 %v1950, %v1946
  %v2091 = vpack.c.b16 %v1951, %v1947
  %v2092 = vpack.c.b16 %v1956, %v1952
  %v2093 = vpack.c.b16 %v1957, %v1953
  %v2094 = vpack.c.b16 %v1958, %v1954
  %v2095 = vpack.c.b16 %v1959, %v1955
  %v2096 = vpack.c.b16 %v1964, %v1960
  %v2097 = vpack.c.b16 %v1965, %v1961
  %v2098 = vpack.c.b16 %v1966, %v1962
  %v2099 = vpack.c.b16 %v1967, %v1963
  %v2100 = vpack.c.b16 %v1972, %v1968
  %v2101 = vpack.c.b16 %v1973, %v1969
  %v2102 = vpack.c.b16 %v1974, %v1970
  %v2103 = vpack.c.b16 %v1975, %v1971
  %2232 = vmatprep.subr.bf16.mxu0 %v1977
  %2233 = vmatpush1.bf16.msra.mxu0 %v1976
  %2234 = vmatprep.subr.bf16.mxu0 %v1981
  %2235 = vmatpush1.bf16.msra.mxu0 %v1980
  %2236 = vmatprep.subr.bf16.mxu0 %v1985
  %2237 = vmatpush1.bf16.msra.mxu0 %v1984
  %2238 = vmatprep.subr.bf16.mxu0 %v1989
  %2239 = vmatpush1.bf16.msra.mxu0 %v1988
  %2240 = vmatprep.subr.bf16.mxu0 %v1993
  %2241 = vmatpush1.bf16.msra.mxu0 %v1992
  %2242 = vmatprep.subr.bf16.mxu0 %v1997
  %2243 = vmatpush1.bf16.msra.mxu0 %v1996
  %2244 = vmatprep.subr.bf16.mxu0 %v2001
  %2245 = vmatpush1.bf16.msra.mxu0 %v2000
  %2246 = vmatprep.subr.bf16.mxu0 %v2005
  %2247 = vmatpush1.bf16.msra.mxu0 %v2004
  %2248 = vmatprep.subr.bf16.mxu0 %v2009
  %2249 = vmatpush1.bf16.msra.mxu0 %v2008
  %2250 = vmatprep.subr.bf16.mxu0 %v2013
  %2251 = vmatpush1.bf16.msra.mxu0 %v2012
  %2252 = vmatprep.subr.bf16.mxu0 %v2017
  %2253 = vmatpush1.bf16.msra.mxu0 %v2016
  %2254 = vmatprep.subr.bf16.mxu0 %v2021
  %2255 = vmatpush1.bf16.msra.mxu0 %v2020
  %2256 = vmatprep.subr.bf16.mxu0 %v2025
  %2257 = vmatpush1.bf16.msra.mxu0 %v2024
  %2258 = vmatprep.subr.bf16.mxu0 %v2029
  %2259 = vmatpush1.bf16.msra.mxu0 %v2028
  %2260 = vmatprep.subr.bf16.mxu0 %v2033
  %2261 = vmatpush1.bf16.msra.mxu0 %v2032
  %2262 = vmatprep.subr.bf16.mxu0 %v2037
  %2263 = vmatpush1.bf16.msra.mxu0 %v2036
  %2264 = vmatprep.mubr.bf16.mxu0 %v307
  %2265 = vmatmul.mubr.bf16.gmra.mrb[0].mxu0 %v306
  %v2266 = vpop.f32.mrb[0].mxu0
  %v2267 = vadd.f32 %v1450, %v2266
  %v2268 = vpop.f32.mrb[0].mxu0
  %v2269 = vadd.f32 %v1452, %v2268
  %v2270 = vpop.f32.mrb[0].mxu0
  %v2271 = vadd.f32 %v1454, %v2270
  %v2272 = vpop.f32.mrb[0].mxu0
  %v2273 = vadd.f32 %v1456, %v2272
  %2274 = vmatprep.mubr.bf16.mxu0 %v311
  %2275 = vmatmul.mubr.bf16.gmra.mrb[0].mxu0 %v310
  %v2276 = vpop.f32.mrb[0].mxu0
  %v2277 = vpop.f32.mrb[0].mxu0
  %v2278 = vpop.f32.mrb[0].mxu0
  %v2279 = vadd.f32 %v1462, %v2278
  %v2280 = vpop.f32.mrb[0].mxu0
  %v2281 = vadd.f32 %v1464, %v2280
  %2282 = vmatprep.mubr.bf16.mxu0 %v315
  %2283 = vmatmul.mubr.bf16.gmra.mrb[0].mxu0 %v314
  %v2284 = vpop.f32.mrb[0].mxu0
  %v2285 = vadd.f32 %v1468, %v2284
  %v2286 = vpop.f32.mrb[0].mxu0
  %v2287 = vadd.f32 %v1470, %v2286
  %v2288 = vpop.f32.mrb[0].mxu0
  %v2289 = vpop.f32.mrb[0].mxu0
  %2290 = vdwg.mxu0
  %2291 = vmatprep.subr.bf16.mxu0 %v2041
  %2292 = vmatpush1.bf16.msra.mxu0 %v2040
  %2293 = vmatprep.subr.bf16.mxu0 %v2045
  %2294 = vmatpush1.bf16.msra.mxu0 %v2044
  %2295 = vmatprep.subr.bf16.mxu0 %v2049
  %2296 = vmatpush1.bf16.msra.mxu0 %v2048
  %2297 = vmatprep.subr.bf16.mxu0 %v2053
  %2298 = vmatpush1.bf16.msra.mxu0 %v2052
  %2299 = vmatprep.subr.bf16.mxu0 %v2057
  %2300 = vmatpush1.bf16.msra.mxu0 %v2056
  %2301 = vmatprep.subr.bf16.mxu0 %v2061
  %2302 = vmatpush1.bf16.msra.mxu0 %v2060
  %2303 = vmatprep.subr.bf16.mxu0 %v2065
  %2304 = vmatpush1.bf16.msra.mxu0 %v2064
  %2305 = vmatprep.subr.bf16.mxu0 %v2069
  %2306 = vmatpush1.bf16.msra.mxu0 %v2068
  %2307 = vmatprep.subr.bf16.mxu0 %v2073
  %2308 = vmatpush1.bf16.msra.mxu0 %v2072
  %2309 = vmatprep.subr.bf16.mxu0 %v2077
  %2310 = vmatpush1.bf16.msra.mxu0 %v2076
  %2311 = vmatprep.subr.bf16.mxu0 %v2081
  %2312 = vmatpush1.bf16.msra.mxu0 %v2080
  %2313 = vmatprep.subr.bf16.mxu0 %v2085
  %2314 = vmatpush1.bf16.msra.mxu0 %v2084
  %2315 = vmatprep.subr.bf16.mxu0 %v2089
  %2316 = vmatpush1.bf16.msra.mxu0 %v2088
  %2317 = vmatprep.subr.bf16.mxu0 %v2093
  %2318 = vmatpush1.bf16.msra.mxu0 %v2092
  %2319 = vmatprep.subr.bf16.mxu0 %v2097
  %2320 = vmatpush1.bf16.msra.mxu0 %v2096
  %2321 = vmatprep.subr.bf16.mxu0 %v2101
  %2322 = vmatpush1.bf16.msra.mxu0 %v2100
  %2323 = vmatprep.mubr.bf16.mxu0 %v309
  %2324 = vmatmul.mubr.bf16.gmra.mrb[0].mxu0 %v308
  %v2325 = vpop.f32.mrb[0].mxu0
  %v2326 = vadd.f32 %v2267, %v2325
  %v2327 = vpop.f32.mrb[0].mxu0
  %v2328 = vadd.f32 %v2269, %v2327
  %v2329 = vpop.f32.mrb[0].mxu0
  %v2330 = vadd.f32 %v2271, %v2329
  %v2331 = vpop.f32.mrb[0].mxu0
  %v2332 = vadd.f32 %v2273, %v2331
  %2333 = vmatprep.mubr.bf16.mxu0 %v313
  %2334 = vmatmul.mubr.bf16.gmra.mrb[0].mxu0 %v312
  %v2335 = vpop.f32.mrb[0].mxu0
  %v2336 = vpop.f32.mrb[0].mxu0
  %v2337 = vpop.f32.mrb[0].mxu0
  %v2338 = vadd.f32 %v2279, %v2337
  %v2339 = vpop.f32.mrb[0].mxu0
  %v2340 = vadd.f32 %v2281, %v2339
  %2341 = vmatprep.mubr.bf16.mxu0 %v317
  %2342 = vmatmul.mubr.bf16.gmra.mrb[0].mxu0 %v316
  %v2343 = vpop.f32.mrb[0].mxu0
  %v2344 = vadd.f32 %v2285, %v2343
  %v2345 = vpop.f32.mrb[0].mxu0
  %v2346 = vadd.f32 %v2287, %v2345
  %v2347 = vpop.f32.mrb[0].mxu0
  %v2348 = vpop.f32.mrb[0].mxu0
  %2349 = vdwg.mxu0
  %2350 = vmatprep.subr.bf16.mxu0 %v1979
  %2351 = vmatpush1.bf16.msra.mxu0 %v1978
  %2352 = vmatprep.subr.bf16.mxu0 %v1983
  %2353 = vmatpush1.bf16.msra.mxu0 %v1982
  %2354 = vmatprep.subr.bf16.mxu0 %v1987
  %2355 = vmatpush1.bf16.msra.mxu0 %v1986
  %2356 = vmatprep.subr.bf16.mxu0 %v1991
  %2357 = vmatpush1.bf16.msra.mxu0 %v1990
  %2358 = vmatprep.subr.bf16.mxu0 %v1995
  %2359 = vmatpush1.bf16.msra.mxu0 %v1994
  %2360 = vmatprep.subr.bf16.mxu0 %v1999
  %2361 = vmatpush1.bf16.msra.mxu0 %v1998
  %2362 = vmatprep.subr.bf16.mxu0 %v2003
  %2363 = vmatpush1.bf16.msra.mxu0 %v2002
  %2364 = vmatprep.subr.bf16.mxu0 %v2007
  %2365 = vmatpush1.bf16.msra.mxu0 %v2006
  %2366 = vmatprep.subr.bf16.mxu0 %v2011
  %2367 = vmatpush1.bf16.msra.mxu0 %v2010
  %2368 = vmatprep.subr.bf16.mxu0 %v2015
  %2369 = vmatpush1.bf16.msra.mxu0 %v2014
  %2370 = vmatprep.subr.bf16.mxu0 %v2019
  %2371 = vmatpush1.bf16.msra.mxu0 %v2018
  %2372 = vmatprep.subr.bf16.mxu0 %v2023
  %2373 = vmatpush1.bf16.msra.mxu0 %v2022
  %2374 = vmatprep.subr.bf16.mxu0 %v2027
  %2375 = vmatpush1.bf16.msra.mxu0 %v2026
  %2376 = vmatprep.subr.bf16.mxu0 %v2031
  %2377 = vmatpush1.bf16.msra.mxu0 %v2030
  %2378 = vmatprep.subr.bf16.mxu0 %v2035
  %2379 = vmatpush1.bf16.msra.mxu0 %v2034
  %2380 = vmatprep.subr.bf16.mxu0 %v2039
  %2381 = vmatpush1.bf16.msra.mxu0 %v2038
  %2382 = vmatprep.mubr.bf16.mxu0 %v307
  %2383 = vmatmul.mubr.bf16.gmra.mrb[0].mxu0 %v306
  %v2384 = vpop.f32.mrb[0].mxu0
  %v2385 = vadd.f32 %v1568, %v2384
  %v2386 = vpop.f32.mrb[0].mxu0
  %v2387 = vadd.f32 %v1570, %v2386
  %v2388 = vpop.f32.mrb[0].mxu0
  %v2389 = vadd.f32 %v1572, %v2388
  %v2390 = vpop.f32.mrb[0].mxu0
  %v2391 = vadd.f32 %v1574, %v2390
  %2392 = vmatprep.mubr.bf16.mxu0 %v311
  %2393 = vmatmul.mubr.bf16.gmra.mrb[0].mxu0 %v310
  %v2394 = vpop.f32.mrb[0].mxu0
  %v2395 = vpop.f32.mrb[0].mxu0
  %v2396 = vpop.f32.mrb[0].mxu0
  %v2397 = vadd.f32 %v1580, %v2396
  %v2398 = vpop.f32.mrb[0].mxu0
  %v2399 = vadd.f32 %v1582, %v2398
  %2400 = vmatprep.mubr.bf16.mxu0 %v315
  %2401 = vmatmul.mubr.bf16.gmra.mrb[0].mxu0 %v314
  %v2402 = vpop.f32.mrb[0].mxu0
  %v2403 = vadd.f32 %v1586, %v2402
  %v2404 = vpop.f32.mrb[0].mxu0
  %v2405 = vadd.f32 %v1588, %v2404
  %v2406 = vpop.f32.mrb[0].mxu0
  %v2407 = vpop.f32.mrb[0].mxu0
  %2408 = vdwg.mxu0
  %2409 = vmatprep.subr.bf16.mxu0 %v2043
  %2410 = vmatpush1.bf16.msra.mxu0 %v2042
  %2411 = vmatprep.subr.bf16.mxu0 %v2047
  %2412 = vmatpush1.bf16.msra.mxu0 %v2046
  %2413 = vmatprep.subr.bf16.mxu0 %v2051
  %2414 = vmatpush1.bf16.msra.mxu0 %v2050
  %2415 = vmatprep.subr.bf16.mxu0 %v2055
  %2416 = vmatpush1.bf16.msra.mxu0 %v2054
  %2417 = vmatprep.subr.bf16.mxu0 %v2059
  %2418 = vmatpush1.bf16.msra.mxu0 %v2058
  %2419 = vmatprep.subr.bf16.mxu0 %v2063
  %2420 = vmatpush1.bf16.msra.mxu0 %v2062
  %2421 = vmatprep.subr.bf16.mxu0 %v2067
  %2422 = vmatpush1.bf16.msra.mxu0 %v2066
  %2423 = vmatprep.subr.bf16.mxu0 %v2071
  %2424 = vmatpush1.bf16.msra.mxu0 %v2070
  %2425 = vmatprep.subr.bf16.mxu0 %v2075
  %2426 = vmatpush1.bf16.msra.mxu0 %v2074
  %2427 = vmatprep.subr.bf16.mxu0 %v2079
  %2428 = vmatpush1.bf16.msra.mxu0 %v2078
  %2429 = vmatprep.subr.bf16.mxu0 %v2083
  %2430 = vmatpush1.bf16.msra.mxu0 %v2082
  %2431 = vmatprep.subr.bf16.mxu0 %v2087
  %2432 = vmatpush1.bf16.msra.mxu0 %v2086
  %2433 = vmatprep.subr.bf16.mxu0 %v2091
  %2434 = vmatpush1.bf16.msra.mxu0 %v2090
  %2435 = vmatprep.subr.bf16.mxu0 %v2095
  %2436 = vmatpush1.bf16.msra.mxu0 %v2094
  %2437 = vmatprep.subr.bf16.mxu0 %v2099
  %2438 = vmatpush1.bf16.msra.mxu0 %v2098
  %2439 = vmatprep.subr.bf16.mxu0 %v2103
  %2440 = vmatpush1.bf16.msra.mxu0 %v2102
  %2441 = vmatprep.mubr.bf16.mxu0 %v309
  %2442 = vmatmul.mubr.bf16.gmra.mrb[0].mxu0 %v308
  %v2443 = vpop.f32.mrb[0].mxu0
  %v2444 = vadd.f32 %v2385, %v2443
  %v2445 = vpop.f32.mrb[0].mxu0
  %v2446 = vadd.f32 %v2387, %v2445
  %v2447 = vpop.f32.mrb[0].mxu0
  %v2448 = vadd.f32 %v2389, %v2447
  %v2449 = vpop.f32.mrb[0].mxu0
  %v2450 = vadd.f32 %v2391, %v2449
  %2451 = vmatprep.mubr.bf16.mxu0 %v313
  %2452 = vmatmul.mubr.bf16.gmra.mrb[0].mxu0 %v312
  %v2453 = vpop.f32.mrb[0].mxu0
  %v2454 = vpop.f32.mrb[0].mxu0
  %v2455 = vpop.f32.mrb[0].mxu0
  %v2456 = vadd.f32 %v2397, %v2455
  %v2457 = vpop.f32.mrb[0].mxu0
  %v2458 = vadd.f32 %v2399, %v2457
  %2459 = vmatprep.mubr.bf16.mxu0 %v317
  %2460 = vmatmul.mubr.bf16.gmra.mrb[0].mxu0 %v316
  %v2461 = vpop.f32.mrb[0].mxu0
  %v2462 = vadd.f32 %v2403, %v2461
  %v2463 = vpop.f32.mrb[0].mxu0
  %v2464 = vadd.f32 %v2405, %v2463
  %v2465 = vpop.f32.mrb[0].mxu0
  %v2466 = vpop.f32.mrb[0].mxu0
  %2467 = vdwg.mxu0
  %v2468 = vld [vmem:[#allocation2] sm:$0xfc]
  %v2469 = vld [vmem:[#allocation2 + $0x8] sm:$0xfc]
  %v2470 = vld [vmem:[#allocation2 + $0x10] sm:$0xfc]
  %v2471 = vld [vmem:[#allocation2 + $0x18] sm:$0xfc]
  %v2472 = vld [vmem:[#allocation2 + $0xa0] sm:$0x3]
  %v2473 = vld [vmem:[#allocation2 + $0xa8] sm:$0x3]
  %v2474 = vld [vmem:[#allocation2 + $0xb0] sm:$0x3]
  %v2475 = vld [vmem:[#allocation2 + $0xb8] sm:$0x3]
  %v2476 = vpack.c.bf16 %v450, %v2468
  %v2477 = vpack.c.bf16 %v451, %v2469
  %v2478 = vpack.c.bf16 %v452, %v2470
  %v2479 = vpack.c.bf16 %v453, %v2471
  %v2480 = vpack.c.bf16 %v2472, %v462
  %v2481 = vpack.c.bf16 %v2473, %v463
  %v2482 = vpack.c.bf16 %v2474, %v464
  %v2483 = vpack.c.bf16 %v2475, %v465
  %s2484 = scalar_lea.vmem %s3, 2048
  %v2485 = vld [vmem:[%s2484] sm:$0xff]
  %v2486 = vld [vmem:[%s2484 + $0x8] sm:$0xff]
  %v2487 = vld [vmem:[%s2484 + $0x10] sm:$0xff]
  %v2488 = vld [vmem:[%s2484 + $0x18] sm:$0xff]
  %v2489 = vld [vmem:[%s2484 + $0x20] sm:$0xff]
  %v2490 = vld [vmem:[%s2484 + $0x28] sm:$0xff]
  %v2491 = vld [vmem:[%s2484 + $0x30] sm:$0xff]
  %v2492 = vld [vmem:[%s2484 + $0x38] sm:$0xff]
  %v2493 = vld [vmem:[%s2484 + $0x40] sm:$0xff]
  %v2494 = vld [vmem:[%s2484 + $0x48] sm:$0xff]
  %v2495 = vld [vmem:[%s2484 + $0x50] sm:$0xff]
  %v2496 = vld [vmem:[%s2484 + $0x58] sm:$0xff]
  %v2497 = vld [vmem:[%s2484 + $0x60] sm:$0xff]
  %v2498 = vld [vmem:[%s2484 + $0x68] sm:$0xff]
  %v2499 = vld [vmem:[%s2484 + $0x70] sm:$0xff]
  %v2500 = vld [vmem:[%s2484 + $0x78] sm:$0xff]
  %v2501 = vld [vmem:[%s2484 + $0x80] sm:$0xff]
  %v2502 = vld [vmem:[%s2484 + $0x88] sm:$0xff]
  %v2503 = vld [vmem:[%s2484 + $0x90] sm:$0xff]
  %v2504 = vld [vmem:[%s2484 + $0x98] sm:$0xff]
  %v2505 = vld [vmem:[%s2484 + $0xa0] sm:$0xff]
  %v2506 = vld [vmem:[%s2484 + $0xa8] sm:$0xff]
  %v2507 = vld [vmem:[%s2484 + $0xb0] sm:$0xff]
  %v2508 = vld [vmem:[%s2484 + $0xb8] sm:$0xff]
  %v2509 = vld [vmem:[%s2484 + $0xc0] sm:$0xff]
  %v2510 = vld [vmem:[%s2484 + $0xc8] sm:$0xff]
  %v2511 = vld [vmem:[%s2484 + $0xd0] sm:$0xff]
  %v2512 = vld [vmem:[%s2484 + $0xd8] sm:$0xff]
  %v2513 = vld [vmem:[%s2484 + $0xe0] sm:$0xff]
  %v2514 = vld [vmem:[%s2484 + $0xe8] sm:$0xff]
  %v2515 = vld [vmem:[%s2484 + $0xf0] sm:$0xff]
  %v2516 = vld [vmem:[%s2484 + $0xf8] sm:$0xff]
  %v2517 = vld [vmem:[%s2484 + $0x100] sm:$0xff]
  %v2518 = vld [vmem:[%s2484 + $0x108] sm:$0xff]
  %v2519 = vld [vmem:[%s2484 + $0x110] sm:$0xff]
  %v2520 = vld [vmem:[%s2484 + $0x118] sm:$0xff]
  %v2521 = vld [vmem:[%s2484 + $0x120] sm:$0xff]
  %v2522 = vld [vmem:[%s2484 + $0x128] sm:$0xff]
  %v2523 = vld [vmem:[%s2484 + $0x130] sm:$0xff]
  %v2524 = vld [vmem:[%s2484 + $0x138] sm:$0xff]
  %v2525 = vld [vmem:[%s2484 + $0x140] sm:$0xff]
  %v2526 = vld [vmem:[%s2484 + $0x148] sm:$0xff]
  %v2527 = vld [vmem:[%s2484 + $0x150] sm:$0xff]
  %v2528 = vld [vmem:[%s2484 + $0x158] sm:$0xff]
  %v2529 = vld [vmem:[%s2484 + $0x160] sm:$0xff]
  %v2530 = vld [vmem:[%s2484 + $0x168] sm:$0xff]
  %v2531 = vld [vmem:[%s2484 + $0x170] sm:$0xff]
  %v2532 = vld [vmem:[%s2484 + $0x178] sm:$0xff]
  %v2533 = vld [vmem:[%s2484 + $0x180] sm:$0xff]
  %v2534 = vld [vmem:[%s2484 + $0x188] sm:$0xff]
  %v2535 = vld [vmem:[%s2484 + $0x190] sm:$0xff]
  %v2536 = vld [vmem:[%s2484 + $0x198] sm:$0xff]
  %v2537 = vld [vmem:[%s2484 + $0x1a0] sm:$0xff]
  %v2538 = vld [vmem:[%s2484 + $0x1a8] sm:$0xff]
  %v2539 = vld [vmem:[%s2484 + $0x1b0] sm:$0xff]
  %v2540 = vld [vmem:[%s2484 + $0x1b8] sm:$0xff]
  %v2541 = vld [vmem:[%s2484 + $0x1c0] sm:$0xff]
  %v2542 = vld [vmem:[%s2484 + $0x1c8] sm:$0xff]
  %v2543 = vld [vmem:[%s2484 + $0x1d0] sm:$0xff]
  %v2544 = vld [vmem:[%s2484 + $0x1d8] sm:$0xff]
  %v2545 = vld [vmem:[%s2484 + $0x1e0] sm:$0xff]
  %v2546 = vld [vmem:[%s2484 + $0x1e8] sm:$0xff]
  %v2547 = vld [vmem:[%s2484 + $0x1f0] sm:$0xff]
  %v2548 = vld [vmem:[%s2484 + $0x1f8] sm:$0xff]
  %v2549 = vld [vmem:[%s2484 + $0x200] sm:$0xff]
  %v2550 = vld [vmem:[%s2484 + $0x208] sm:$0xff]
  %v2551 = vld [vmem:[%s2484 + $0x210] sm:$0xff]
  %v2552 = vld [vmem:[%s2484 + $0x218] sm:$0xff]
  %v2553 = vld [vmem:[%s2484 + $0x220] sm:$0xff]
  %v2554 = vld [vmem:[%s2484 + $0x228] sm:$0xff]
  %v2555 = vld [vmem:[%s2484 + $0x230] sm:$0xff]
  %v2556 = vld [vmem:[%s2484 + $0x238] sm:$0xff]
  %v2557 = vld [vmem:[%s2484 + $0x240] sm:$0xff]
  %v2558 = vld [vmem:[%s2484 + $0x248] sm:$0xff]
  %v2559 = vld [vmem:[%s2484 + $0x250] sm:$0xff]
  %v2560 = vld [vmem:[%s2484 + $0x258] sm:$0xff]
  %v2561 = vld [vmem:[%s2484 + $0x260] sm:$0xff]
  %v2562 = vld [vmem:[%s2484 + $0x268] sm:$0xff]
  %v2563 = vld [vmem:[%s2484 + $0x270] sm:$0xff]
  %v2564 = vld [vmem:[%s2484 + $0x278] sm:$0xff]
  %v2565 = vld [vmem:[%s2484 + $0x280] sm:$0xff]
  %v2566 = vld [vmem:[%s2484 + $0x288] sm:$0xff]
  %v2567 = vld [vmem:[%s2484 + $0x290] sm:$0xff]
  %v2568 = vld [vmem:[%s2484 + $0x298] sm:$0xff]
  %v2569 = vld [vmem:[%s2484 + $0x2a0] sm:$0xff]
  %v2570 = vld [vmem:[%s2484 + $0x2a8] sm:$0xff]
  %v2571 = vld [vmem:[%s2484 + $0x2b0] sm:$0xff]
  %v2572 = vld [vmem:[%s2484 + $0x2b8] sm:$0xff]
  %v2573 = vld [vmem:[%s2484 + $0x2c0] sm:$0xff]
  %v2574 = vld [vmem:[%s2484 + $0x2c8] sm:$0xff]
  %v2575 = vld [vmem:[%s2484 + $0x2d0] sm:$0xff]
  %v2576 = vld [vmem:[%s2484 + $0x2d8] sm:$0xff]
  %v2577 = vld [vmem:[%s2484 + $0x2e0] sm:$0xff]
  %v2578 = vld [vmem:[%s2484 + $0x2e8] sm:$0xff]
  %v2579 = vld [vmem:[%s2484 + $0x2f0] sm:$0xff]
  %v2580 = vld [vmem:[%s2484 + $0x2f8] sm:$0xff]
  %v2581 = vld [vmem:[%s2484 + $0x300] sm:$0xff]
  %v2582 = vld [vmem:[%s2484 + $0x308] sm:$0xff]
  %v2583 = vld [vmem:[%s2484 + $0x310] sm:$0xff]
  %v2584 = vld [vmem:[%s2484 + $0x318] sm:$0xff]
  %v2585 = vld [vmem:[%s2484 + $0x320] sm:$0xff]
  %v2586 = vld [vmem:[%s2484 + $0x328] sm:$0xff]
  %v2587 = vld [vmem:[%s2484 + $0x330] sm:$0xff]
  %v2588 = vld [vmem:[%s2484 + $0x338] sm:$0xff]
  %v2589 = vld [vmem:[%s2484 + $0x340] sm:$0xff]
  %v2590 = vld [vmem:[%s2484 + $0x348] sm:$0xff]
  %v2591 = vld [vmem:[%s2484 + $0x350] sm:$0xff]
  %v2592 = vld [vmem:[%s2484 + $0x358] sm:$0xff]
  %v2593 = vld [vmem:[%s2484 + $0x360] sm:$0xff]
  %v2594 = vld [vmem:[%s2484 + $0x368] sm:$0xff]
  %v2595 = vld [vmem:[%s2484 + $0x370] sm:$0xff]
  %v2596 = vld [vmem:[%s2484 + $0x378] sm:$0xff]
  %v2597 = vld [vmem:[%s2484 + $0x380] sm:$0xff]
  %v2598 = vld [vmem:[%s2484 + $0x388] sm:$0xff]
  %v2599 = vld [vmem:[%s2484 + $0x390] sm:$0xff]
  %v2600 = vld [vmem:[%s2484 + $0x398] sm:$0xff]
  %v2601 = vld [vmem:[%s2484 + $0x3a0] sm:$0xff]
  %v2602 = vld [vmem:[%s2484 + $0x3a8] sm:$0xff]
  %v2603 = vld [vmem:[%s2484 + $0x3b0] sm:$0xff]
  %v2604 = vld [vmem:[%s2484 + $0x3b8] sm:$0xff]
  %v2605 = vld [vmem:[%s2484 + $0x3c0] sm:$0xff]
  %v2606 = vld [vmem:[%s2484 + $0x3c8] sm:$0xff]
  %v2607 = vld [vmem:[%s2484 + $0x3d0] sm:$0xff]
  %v2608 = vld [vmem:[%s2484 + $0x3d8] sm:$0xff]
  %v2609 = vld [vmem:[%s2484 + $0x3e0] sm:$0xff]
  %v2610 = vld [vmem:[%s2484 + $0x3e8] sm:$0xff]
  %v2611 = vld [vmem:[%s2484 + $0x3f0] sm:$0xff]
  %v2612 = vld [vmem:[%s2484 + $0x3f8] sm:$0xff]
  %vm2625 = vcmask 1046528
  %v2626 = vrot.slane %v2476, 1
  %v2627 = vrot.slane %v474, 1
  %v2628 = vsel %vm2625, %v2626, %v2627
  %v2629 = vrot.slane %v2477, 1
  %v2630 = vrot.slane %v475, 1
  %v2631 = vsel %vm2625, %v2629, %v2630
  %v2632 = vrot.slane %v2478, 1
  %v2633 = vrot.slane %v476, 1
  %v2634 = vsel %vm2625, %v2632, %v2633
  %v2635 = vrot.slane %v2479, 1
  %v2636 = vrot.slane %v477, 1
  %v2637 = vsel %vm2625, %v2635, %v2636
  %v2638 = vrot.slane %v2480, 1
  %v2639 = vsel %vm2625, %v2627, %v2638
  %v2640 = vrot.slane %v2481, 1
  %v2641 = vsel %vm2625, %v2630, %v2640
  %v2642 = vrot.slane %v2482, 1
  %v2643 = vsel %vm2625, %v2633, %v2642
  %v2644 = vrot.slane %v2483, 1
  %v2645 = vsel %vm2625, %v2636, %v2644
  %v2786 = vunpack.c.l.b16 %v2485
  %v2787 = vunpack.c.h.b16 %v2485
  %v2788 = vunpack.c.l.b16 %v2486
  %v2789 = vunpack.c.h.b16 %v2486
  %v2790 = vunpack.c.l.b16 %v2487
  %v2791 = vunpack.c.h.b16 %v2487
  %v2792 = vunpack.c.l.b16 %v2488
  %v2793 = vunpack.c.h.b16 %v2488
  %v2794 = vunpack.c.l.b16 %v2489
  %v2795 = vunpack.c.h.b16 %v2489
  %v2796 = vunpack.c.l.b16 %v2490
  %v2797 = vunpack.c.h.b16 %v2490
  %v2798 = vunpack.c.l.b16 %v2491
  %v2799 = vunpack.c.h.b16 %v2491
  %v2800 = vunpack.c.l.b16 %v2492
  %v2801 = vunpack.c.h.b16 %v2492
  %v2802 = vunpack.c.l.b16 %v2493
  %v2803 = vunpack.c.h.b16 %v2493
  %v2804 = vunpack.c.l.b16 %v2494
  %v2805 = vunpack.c.h.b16 %v2494
  %v2806 = vunpack.c.l.b16 %v2495
  %v2807 = vunpack.c.h.b16 %v2495
  %v2808 = vunpack.c.l.b16 %v2496
  %v2809 = vunpack.c.h.b16 %v2496
  %v2810 = vunpack.c.l.b16 %v2497
  %v2811 = vunpack.c.h.b16 %v2497
  %v2812 = vunpack.c.l.b16 %v2498
  %v2813 = vunpack.c.h.b16 %v2498
  %v2814 = vunpack.c.l.b16 %v2499
  %v2815 = vunpack.c.h.b16 %v2499
  %v2816 = vunpack.c.l.b16 %v2500
  %v2817 = vunpack.c.h.b16 %v2500
  %v2818 = vunpack.c.l.b16 %v2501
  %v2819 = vunpack.c.h.b16 %v2501
  %v2820 = vunpack.c.l.b16 %v2502
  %v2821 = vunpack.c.h.b16 %v2502
  %v2822 = vunpack.c.l.b16 %v2503
  %v2823 = vunpack.c.h.b16 %v2503
  %v2824 = vunpack.c.l.b16 %v2504
  %v2825 = vunpack.c.h.b16 %v2504
  %v2826 = vunpack.c.l.b16 %v2505
  %v2827 = vunpack.c.h.b16 %v2505
  %v2828 = vunpack.c.l.b16 %v2506
  %v2829 = vunpack.c.h.b16 %v2506
  %v2830 = vunpack.c.l.b16 %v2507
  %v2831 = vunpack.c.h.b16 %v2507
  %v2832 = vunpack.c.l.b16 %v2508
  %v2833 = vunpack.c.h.b16 %v2508
  %v2834 = vunpack.c.l.b16 %v2509
  %v2835 = vunpack.c.h.b16 %v2509
  %v2836 = vunpack.c.l.b16 %v2510
  %v2837 = vunpack.c.h.b16 %v2510
  %v2838 = vunpack.c.l.b16 %v2511
  %v2839 = vunpack.c.h.b16 %v2511
  %v2840 = vunpack.c.l.b16 %v2512
  %v2841 = vunpack.c.h.b16 %v2512
  %v2842 = vunpack.c.l.b16 %v2513
  %v2843 = vunpack.c.h.b16 %v2513
  %v2844 = vunpack.c.l.b16 %v2514
  %v2845 = vunpack.c.h.b16 %v2514
  %v2846 = vunpack.c.l.b16 %v2515
  %v2847 = vunpack.c.h.b16 %v2515
  %v2848 = vunpack.c.l.b16 %v2516
  %v2849 = vunpack.c.h.b16 %v2516
  %v2850 = vunpack.c.l.b16 %v2517
  %v2851 = vunpack.c.h.b16 %v2517
  %v2852 = vunpack.c.l.b16 %v2518
  %v2853 = vunpack.c.h.b16 %v2518
  %v2854 = vunpack.c.l.b16 %v2519
  %v2855 = vunpack.c.h.b16 %v2519
  %v2856 = vunpack.c.l.b16 %v2520
  %v2857 = vunpack.c.h.b16 %v2520
  %v2858 = vunpack.c.l.b16 %v2521
  %v2859 = vunpack.c.h.b16 %v2521
  %v2860 = vunpack.c.l.b16 %v2522
  %v2861 = vunpack.c.h.b16 %v2522
  %v2862 = vunpack.c.l.b16 %v2523
  %v2863 = vunpack.c.h.b16 %v2523
  %v2864 = vunpack.c.l.b16 %v2524
  %v2865 = vunpack.c.h.b16 %v2524
  %v2866 = vunpack.c.l.b16 %v2525
  %v2867 = vunpack.c.h.b16 %v2525
  %v2868 = vunpack.c.l.b16 %v2526
  %v2869 = vunpack.c.h.b16 %v2526
  %v2870 = vunpack.c.l.b16 %v2527
  %v2871 = vunpack.c.h.b16 %v2527
  %v2872 = vunpack.c.l.b16 %v2528
  %v2873 = vunpack.c.h.b16 %v2528
  %v2874 = vunpack.c.l.b16 %v2529
  %v2875 = vunpack.c.h.b16 %v2529
  %v2876 = vunpack.c.l.b16 %v2530
  %v2877 = vunpack.c.h.b16 %v2530
  %v2878 = vunpack.c.l.b16 %v2531
  %v2879 = vunpack.c.h.b16 %v2531
  %v2880 = vunpack.c.l.b16 %v2532
  %v2881 = vunpack.c.h.b16 %v2532
  %v2882 = vunpack.c.l.b16 %v2533
  %v2883 = vunpack.c.h.b16 %v2533
  %v2884 = vunpack.c.l.b16 %v2534
  %v2885 = vunpack.c.h.b16 %v2534
  %v2886 = vunpack.c.l.b16 %v2535
  %v2887 = vunpack.c.h.b16 %v2535
  %v2888 = vunpack.c.l.b16 %v2536
  %v2889 = vunpack.c.h.b16 %v2536
  %v2890 = vunpack.c.l.b16 %v2537
  %v2891 = vunpack.c.h.b16 %v2537
  %v2892 = vunpack.c.l.b16 %v2538
  %v2893 = vunpack.c.h.b16 %v2538
  %v2894 = vunpack.c.l.b16 %v2539
  %v2895 = vunpack.c.h.b16 %v2539
  %v2896 = vunpack.c.l.b16 %v2540
  %v2897 = vunpack.c.h.b16 %v2540
  %v2898 = vunpack.c.l.b16 %v2541
  %v2899 = vunpack.c.h.b16 %v2541
  %v2900 = vunpack.c.l.b16 %v2542
  %v2901 = vunpack.c.h.b16 %v2542
  %v2902 = vunpack.c.l.b16 %v2543
  %v2903 = vunpack.c.h.b16 %v2543
  %v2904 = vunpack.c.l.b16 %v2544
  %v2905 = vunpack.c.h.b16 %v2544
  %v2906 = vunpack.c.l.b16 %v2545
  %v2907 = vunpack.c.h.b16 %v2545
  %v2908 = vunpack.c.l.b16 %v2546
  %v2909 = vunpack.c.h.b16 %v2546
  %v2910 = vunpack.c.l.b16 %v2547
  %v2911 = vunpack.c.h.b16 %v2547
  %v2912 = vunpack.c.l.b16 %v2548
  %v2913 = vunpack.c.h.b16 %v2548
  %v2914 = vunpack.c.l.b16 %v2549
  %v2915 = vunpack.c.h.b16 %v2549
  %v2916 = vunpack.c.l.b16 %v2550
  %v2917 = vunpack.c.h.b16 %v2550
  %v2918 = vunpack.c.l.b16 %v2551
  %v2919 = vunpack.c.h.b16 %v2551
  %v2920 = vunpack.c.l.b16 %v2552
  %v2921 = vunpack.c.h.b16 %v2552
  %v2922 = vunpack.c.l.b16 %v2553
  %v2923 = vunpack.c.h.b16 %v2553
  %v2924 = vunpack.c.l.b16 %v2554
  %v2925 = vunpack.c.h.b16 %v2554
  %v2926 = vunpack.c.l.b16 %v2555
  %v2927 = vunpack.c.h.b16 %v2555
  %v2928 = vunpack.c.l.b16 %v2556
  %v2929 = vunpack.c.h.b16 %v2556
  %v2930 = vunpack.c.l.b16 %v2557
  %v2931 = vunpack.c.h.b16 %v2557
  %v2932 = vunpack.c.l.b16 %v2558
  %v2933 = vunpack.c.h.b16 %v2558
  %v2934 = vunpack.c.l.b16 %v2559
  %v2935 = vunpack.c.h.b16 %v2559
  %v2936 = vunpack.c.l.b16 %v2560
  %v2937 = vunpack.c.h.b16 %v2560
  %v2938 = vunpack.c.l.b16 %v2561
  %v2939 = vunpack.c.h.b16 %v2561
  %v2940 = vunpack.c.l.b16 %v2562
  %v2941 = vunpack.c.h.b16 %v2562
  %v2942 = vunpack.c.l.b16 %v2563
  %v2943 = vunpack.c.h.b16 %v2563
  %v2944 = vunpack.c.l.b16 %v2564
  %v2945 = vunpack.c.h.b16 %v2564
  %v2946 = vunpack.c.l.b16 %v2565
  %v2947 = vunpack.c.h.b16 %v2565
  %v2948 = vunpack.c.l.b16 %v2566
  %v2949 = vunpack.c.h.b16 %v2566
  %v2950 = vunpack.c.l.b16 %v2567
  %v2951 = vunpack.c.h.b16 %v2567
  %v2952 = vunpack.c.l.b16 %v2568
  %v2953 = vunpack.c.h.b16 %v2568
  %v2954 = vunpack.c.l.b16 %v2569
  %v2955 = vunpack.c.h.b16 %v2569
  %v2956 = vunpack.c.l.b16 %v2570
  %v2957 = vunpack.c.h.b16 %v2570
  %v2958 = vunpack.c.l.b16 %v2571
  %v2959 = vunpack.c.h.b16 %v2571
  %v2960 = vunpack.c.l.b16 %v2572
  %v2961 = vunpack.c.h.b16 %v2572
  %v2962 = vunpack.c.l.b16 %v2573
  %v2963 = vunpack.c.h.b16 %v2573
  %v2964 = vunpack.c.l.b16 %v2574
  %v2965 = vunpack.c.h.b16 %v2574
  %v2966 = vunpack.c.l.b16 %v2575
  %v2967 = vunpack.c.h.b16 %v2575
  %v2968 = vunpack.c.l.b16 %v2576
  %v2969 = vunpack.c.h.b16 %v2576
  %v2970 = vunpack.c.l.b16 %v2577
  %v2971 = vunpack.c.h.b16 %v2577
  %v2972 = vunpack.c.l.b16 %v2578
  %v2973 = vunpack.c.h.b16 %v2578
  %v2974 = vunpack.c.l.b16 %v2579
  %v2975 = vunpack.c.h.b16 %v2579
  %v2976 = vunpack.c.l.b16 %v2580
  %v2977 = vunpack.c.h.b16 %v2580
  %v2978 = vunpack.c.l.b16 %v2581
  %v2979 = vunpack.c.h.b16 %v2581
  %v2980 = vunpack.c.l.b16 %v2582
  %v2981 = vunpack.c.h.b16 %v2582
  %v2982 = vunpack.c.l.b16 %v2583
  %v2983 = vunpack.c.h.b16 %v2583
  %v2984 = vunpack.c.l.b16 %v2584
  %v2985 = vunpack.c.h.b16 %v2584
  %v2986 = vunpack.c.l.b16 %v2585
  %v2987 = vunpack.c.h.b16 %v2585
  %v2988 = vunpack.c.l.b16 %v2586
  %v2989 = vunpack.c.h.b16 %v2586
  %v2990 = vunpack.c.l.b16 %v2587
  %v2991 = vunpack.c.h.b16 %v2587
  %v2992 = vunpack.c.l.b16 %v2588
  %v2993 = vunpack.c.h.b16 %v2588
  %v2994 = vunpack.c.l.b16 %v2589
  %v2995 = vunpack.c.h.b16 %v2589
  %v2996 = vunpack.c.l.b16 %v2590
  %v2997 = vunpack.c.h.b16 %v2590
  %v2998 = vunpack.c.l.b16 %v2591
  %v2999 = vunpack.c.h.b16 %v2591
  %v3000 = vunpack.c.l.b16 %v2592
  %v3001 = vunpack.c.h.b16 %v2592
  %v3002 = vunpack.c.l.b16 %v2593
  %v3003 = vunpack.c.h.b16 %v2593
  %v3004 = vunpack.c.l.b16 %v2594
  %v3005 = vunpack.c.h.b16 %v2594
  %v3006 = vunpack.c.l.b16 %v2595
  %v3007 = vunpack.c.h.b16 %v2595
  %v3008 = vunpack.c.l.b16 %v2596
  %v3009 = vunpack.c.h.b16 %v2596
  %v3010 = vunpack.c.l.b16 %v2597
  %v3011 = vunpack.c.h.b16 %v2597
  %v3012 = vunpack.c.l.b16 %v2598
  %v3013 = vunpack.c.h.b16 %v2598
  %v3014 = vunpack.c.l.b16 %v2599
  %v3015 = vunpack.c.h.b16 %v2599
  %v3016 = vunpack.c.l.b16 %v2600
  %v3017 = vunpack.c.h.b16 %v2600
  %v3018 = vunpack.c.l.b16 %v2601
  %v3019 = vunpack.c.h.b16 %v2601
  %v3020 = vunpack.c.l.b16 %v2602
  %v3021 = vunpack.c.h.b16 %v2602
  %v3022 = vunpack.c.l.b16 %v2603
  %v3023 = vunpack.c.h.b16 %v2603
  %v3024 = vunpack.c.l.b16 %v2604
  %v3025 = vunpack.c.h.b16 %v2604
  %v3026 = vunpack.c.l.b16 %v2605
  %v3027 = vunpack.c.h.b16 %v2605
  %v3028 = vunpack.c.l.b16 %v2606
  %v3029 = vunpack.c.h.b16 %v2606
  %v3030 = vunpack.c.l.b16 %v2607
  %v3031 = vunpack.c.h.b16 %v2607
  %v3032 = vunpack.c.l.b16 %v2608
  %v3033 = vunpack.c.h.b16 %v2608
  %v3034 = vunpack.c.l.b16 %v2609
  %v3035 = vunpack.c.h.b16 %v2609
  %v3036 = vunpack.c.l.b16 %v2610
  %v3037 = vunpack.c.h.b16 %v2610
  %v3038 = vunpack.c.l.b16 %v2611
  %v3039 = vunpack.c.h.b16 %v2611
  %v3040 = vunpack.c.l.b16 %v2612
  %v3041 = vunpack.c.h.b16 %v2612
  %v3042 = vpack.c.b16 %v2790, %v2786
  %v3043 = vpack.c.b16 %v2791, %v2787
  %v3044 = vpack.c.b16 %v2792, %v2788
  %v3045 = vpack.c.b16 %v2793, %v2789
  %v3046 = vpack.c.b16 %v2798, %v2794
  %v3047 = vpack.c.b16 %v2799, %v2795
  %v3048 = vpack.c.b16 %v2800, %v2796
  %v3049 = vpack.c.b16 %v2801, %v2797
  %v3050 = vpack.c.b16 %v2806, %v2802
  %v3051 = vpack.c.b16 %v2807, %v2803
  %v3052 = vpack.c.b16 %v2808, %v2804
  %v3053 = vpack.c.b16 %v2809, %v2805
  %v3054 = vpack.c.b16 %v2814, %v2810
  %v3055 = vpack.c.b16 %v2815, %v2811
  %v3056 = vpack.c.b16 %v2816, %v2812
  %v3057 = vpack.c.b16 %v2817, %v2813
  %v3058 = vpack.c.b16 %v2822, %v2818
  %v3059 = vpack.c.b16 %v2823, %v2819
  %v3060 = vpack.c.b16 %v2824, %v2820
  %v3061 = vpack.c.b16 %v2825, %v2821
  %v3062 = vpack.c.b16 %v2830, %v2826
  %v3063 = vpack.c.b16 %v2831, %v2827
  %v3064 = vpack.c.b16 %v2832, %v2828
  %v3065 = vpack.c.b16 %v2833, %v2829
  %v3066 = vpack.c.b16 %v2838, %v2834
  %v3067 = vpack.c.b16 %v2839, %v2835
  %v3068 = vpack.c.b16 %v2840, %v2836
  %v3069 = vpack.c.b16 %v2841, %v2837
  %v3070 = vpack.c.b16 %v2846, %v2842
  %v3071 = vpack.c.b16 %v2847, %v2843
  %v3072 = vpack.c.b16 %v2848, %v2844
  %v3073 = vpack.c.b16 %v2849, %v2845
  %v3074 = vpack.c.b16 %v2854, %v2850
  %v3075 = vpack.c.b16 %v2855, %v2851
  %v3076 = vpack.c.b16 %v2856, %v2852
  %v3077 = vpack.c.b16 %v2857, %v2853
  %v3078 = vpack.c.b16 %v2862, %v2858
  %v3079 = vpack.c.b16 %v2863, %v2859
  %v3080 = vpack.c.b16 %v2864, %v2860
  %v3081 = vpack.c.b16 %v2865, %v2861
  %v3082 = vpack.c.b16 %v2870, %v2866
  %v3083 = vpack.c.b16 %v2871, %v2867
  %v3084 = vpack.c.b16 %v2872, %v2868
  %v3085 = vpack.c.b16 %v2873, %v2869
  %v3086 = vpack.c.b16 %v2878, %v2874
  %v3087 = vpack.c.b16 %v2879, %v2875
  %v3088 = vpack.c.b16 %v2880, %v2876
  %v3089 = vpack.c.b16 %v2881, %v2877
  %v3090 = vpack.c.b16 %v2886, %v2882
  %v3091 = vpack.c.b16 %v2887, %v2883
  %v3092 = vpack.c.b16 %v2888, %v2884
  %v3093 = vpack.c.b16 %v2889, %v2885
  %v3094 = vpack.c.b16 %v2894, %v2890
  %v3095 = vpack.c.b16 %v2895, %v2891
  %v3096 = vpack.c.b16 %v2896, %v2892
  %v3097 = vpack.c.b16 %v2897, %v2893
  %v3098 = vpack.c.b16 %v2902, %v2898
  %v3099 = vpack.c.b16 %v2903, %v2899
  %v3100 = vpack.c.b16 %v2904, %v2900
  %v3101 = vpack.c.b16 %v2905, %v2901
  %v3102 = vpack.c.b16 %v2910, %v2906
  %v3103 = vpack.c.b16 %v2911, %v2907
  %v3104 = vpack.c.b16 %v2912, %v2908
  %v3105 = vpack.c.b16 %v2913, %v2909
  %v3106 = vpack.c.b16 %v2918, %v2914
  %v3107 = vpack.c.b16 %v2919, %v2915
  %v3108 = vpack.c.b16 %v2920, %v2916
  %v3109 = vpack.c.b16 %v2921, %v2917
  %v3110 = vpack.c.b16 %v2926, %v2922
  %v3111 = vpack.c.b16 %v2927, %v2923
  %v3112 = vpack.c.b16 %v2928, %v2924
  %v3113 = vpack.c.b16 %v2929, %v2925
  %v3114 = vpack.c.b16 %v2934, %v2930
  %v3115 = vpack.c.b16 %v2935, %v2931
  %v3116 = vpack.c.b16 %v2936, %v2932
  %v3117 = vpack.c.b16 %v2937, %v2933
  %v3118 = vpack.c.b16 %v2942, %v2938
  %v3119 = vpack.c.b16 %v2943, %v2939
  %v3120 = vpack.c.b16 %v2944, %v2940
  %v3121 = vpack.c.b16 %v2945, %v2941
  %v3122 = vpack.c.b16 %v2950, %v2946
  %v3123 = vpack.c.b16 %v2951, %v2947
  %v3124 = vpack.c.b16 %v2952, %v2948
  %v3125 = vpack.c.b16 %v2953, %v2949
  %v3126 = vpack.c.b16 %v2958, %v2954
  %v3127 = vpack.c.b16 %v2959, %v2955
  %v3128 = vpack.c.b16 %v2960, %v2956
  %v3129 = vpack.c.b16 %v2961, %v2957
  %v3130 = vpack.c.b16 %v2966, %v2962
  %v3131 = vpack.c.b16 %v2967, %v2963
  %v3132 = vpack.c.b16 %v2968, %v2964
  %v3133 = vpack.c.b16 %v2969, %v2965
  %v3134 = vpack.c.b16 %v2974, %v2970
  %v3135 = vpack.c.b16 %v2975, %v2971
  %v3136 = vpack.c.b16 %v2976, %v2972
  %v3137 = vpack.c.b16 %v2977, %v2973
  %v3138 = vpack.c.b16 %v2982, %v2978
  %v3139 = vpack.c.b16 %v2983, %v2979
  %v3140 = vpack.c.b16 %v2984, %v2980
  %v3141 = vpack.c.b16 %v2985, %v2981
  %v3142 = vpack.c.b16 %v2990, %v2986
  %v3143 = vpack.c.b16 %v2991, %v2987
  %v3144 = vpack.c.b16 %v2992, %v2988
  %v3145 = vpack.c.b16 %v2993, %v2989
  %v3146 = vpack.c.b16 %v2998, %v2994
  %v3147 = vpack.c.b16 %v2999, %v2995
  %v3148 = vpack.c.b16 %v3000, %v2996
  %v3149 = vpack.c.b16 %v3001, %v2997
  %v3150 = vpack.c.b16 %v3006, %v3002
  %v3151 = vpack.c.b16 %v3007, %v3003
  %v3152 = vpack.c.b16 %v3008, %v3004
  %v3153 = vpack.c.b16 %v3009, %v3005
  %v3154 = vpack.c.b16 %v3014, %v3010
  %v3155 = vpack.c.b16 %v3015, %v3011
  %v3156 = vpack.c.b16 %v3016, %v3012
  %v3157 = vpack.c.b16 %v3017, %v3013
  %v3158 = vpack.c.b16 %v3022, %v3018
  %v3159 = vpack.c.b16 %v3023, %v3019
  %v3160 = vpack.c.b16 %v3024, %v3020
  %v3161 = vpack.c.b16 %v3025, %v3021
  %v3162 = vpack.c.b16 %v3030, %v3026
  %v3163 = vpack.c.b16 %v3031, %v3027
  %v3164 = vpack.c.b16 %v3032, %v3028
  %v3165 = vpack.c.b16 %v3033, %v3029
  %v3166 = vpack.c.b16 %v3038, %v3034
  %v3167 = vpack.c.b16 %v3039, %v3035
  %v3168 = vpack.c.b16 %v3040, %v3036
  %v3169 = vpack.c.b16 %v3041, %v3037
  %3298 = vmatprep.subr.bf16.mxu0 %v3043
  %3299 = vmatpush1.bf16.msra.mxu0 %v3042
  %3300 = vmatprep.subr.bf16.mxu0 %v3047
  %3301 = vmatpush1.bf16.msra.mxu0 %v3046
  %3302 = vmatprep.subr.bf16.mxu0 %v3051
  %3303 = vmatpush1.bf16.msra.mxu0 %v3050
  %3304 = vmatprep.subr.bf16.mxu0 %v3055
  %3305 = vmatpush1.bf16.msra.mxu0 %v3054
  %3306 = vmatprep.subr.bf16.mxu0 %v3059
  %3307 = vmatpush1.bf16.msra.mxu0 %v3058
  %3308 = vmatprep.subr.bf16.mxu0 %v3063
  %3309 = vmatpush1.bf16.msra.mxu0 %v3062
  %3310 = vmatprep.subr.bf16.mxu0 %v3067
  %3311 = vmatpush1.bf16.msra.mxu0 %v3066
  %3312 = vmatprep.subr.bf16.mxu0 %v3071
  %3313 = vmatpush1.bf16.msra.mxu0 %v3070
  %3314 = vmatprep.subr.bf16.mxu0 %v3075
  %3315 = vmatpush1.bf16.msra.mxu0 %v3074
  %3316 = vmatprep.subr.bf16.mxu0 %v3079
  %3317 = vmatpush1.bf16.msra.mxu0 %v3078
  %3318 = vmatprep.subr.bf16.mxu0 %v3083
  %3319 = vmatpush1.bf16.msra.mxu0 %v3082
  %3320 = vmatprep.subr.bf16.mxu0 %v3087
  %3321 = vmatpush1.bf16.msra.mxu0 %v3086
  %3322 = vmatprep.subr.bf16.mxu0 %v3091
  %3323 = vmatpush1.bf16.msra.mxu0 %v3090
  %3324 = vmatprep.subr.bf16.mxu0 %v3095
  %3325 = vmatpush1.bf16.msra.mxu0 %v3094
  %3326 = vmatprep.subr.bf16.mxu0 %v3099
  %3327 = vmatpush1.bf16.msra.mxu0 %v3098
  %3328 = vmatprep.subr.bf16.mxu0 %v3103
  %3329 = vmatpush1.bf16.msra.mxu0 %v3102
  %3330 = vmatprep.mubr.bf16.mxu0 %v2631
  %3331 = vmatmul.mubr.bf16.gmra.mrb[0].mxu0 %v2628
  %v3332 = vpop.f32.mrb[0].mxu0
  %v3333 = vadd.f32 0.0, %v3332
  %v3334 = vpop.f32.mrb[0].mxu0
  %v3335 = vadd.f32 0.0, %v3334
  %v3336 = vpop.f32.mrb[0].mxu0
  %v3337 = vadd.f32 0.0, %v3336
  %v3338 = vpop.f32.mrb[0].mxu0
  %v3339 = vadd.f32 0.0, %v3338
  %3340 = vmatprep.mubr.bf16.mxu0 %v2641
  %3341 = vmatmul.mubr.bf16.gmra.mrb[0].mxu0 %v2639
  %v3342 = vpop.f32.mrb[0].mxu0
  %v3343 = vpop.f32.mrb[0].mxu0
  %v3344 = vpop.f32.mrb[0].mxu0
  %v3345 = vadd.f32 0.0, %v3344
  %v3346 = vpop.f32.mrb[0].mxu0
  %v3347 = vadd.f32 0.0, %v3346
  %3348 = vmatprep.mubr.bf16.mxu0 %v2640
  %3349 = vmatmul.mubr.bf16.gmra.mrb[0].mxu0 %v2638
  %v3350 = vpop.f32.mrb[0].mxu0
  %v3351 = vadd.f32 0.0, %v3350
  %v3352 = vpop.f32.mrb[0].mxu0
  %v3353 = vadd.f32 0.0, %v3352
  %v3354 = vpop.f32.mrb[0].mxu0
  %v3355 = vpop.f32.mrb[0].mxu0
  %3356 = vdwg.mxu0
  %3357 = vmatprep.subr.bf16.mxu0 %v3107
  %3358 = vmatpush1.bf16.msra.mxu0 %v3106
  %3359 = vmatprep.subr.bf16.mxu0 %v3111
  %3360 = vmatpush1.bf16.msra.mxu0 %v3110
  %3361 = vmatprep.subr.bf16.mxu0 %v3115
  %3362 = vmatpush1.bf16.msra.mxu0 %v3114
  %3363 = vmatprep.subr.bf16.mxu0 %v3119
  %3364 = vmatpush1.bf16.msra.mxu0 %v3118
  %3365 = vmatprep.subr.bf16.mxu0 %v3123
  %3366 = vmatpush1.bf16.msra.mxu0 %v3122
  %3367 = vmatprep.subr.bf16.mxu0 %v3127
  %3368 = vmatpush1.bf16.msra.mxu0 %v3126
  %3369 = vmatprep.subr.bf16.mxu0 %v3131
  %3370 = vmatpush1.bf16.msra.mxu0 %v3130
  %3371 = vmatprep.subr.bf16.mxu0 %v3135
  %3372 = vmatpush1.bf16.msra.mxu0 %v3134
  %3373 = vmatprep.subr.bf16.mxu0 %v3139
  %3374 = vmatpush1.bf16.msra.mxu0 %v3138
  %3375 = vmatprep.subr.bf16.mxu0 %v3143
  %3376 = vmatpush1.bf16.msra.mxu0 %v3142
  %3377 = vmatprep.subr.bf16.mxu0 %v3147
  %3378 = vmatpush1.bf16.msra.mxu0 %v3146
  %3379 = vmatprep.subr.bf16.mxu0 %v3151
  %3380 = vmatpush1.bf16.msra.mxu0 %v3150
  %3381 = vmatprep.subr.bf16.mxu0 %v3155
  %3382 = vmatpush1.bf16.msra.mxu0 %v3154
  %3383 = vmatprep.subr.bf16.mxu0 %v3159
  %3384 = vmatpush1.bf16.msra.mxu0 %v3158
  %3385 = vmatprep.subr.bf16.mxu0 %v3163
  %3386 = vmatpush1.bf16.msra.mxu0 %v3162
  %3387 = vmatprep.subr.bf16.mxu0 %v3167
  %3388 = vmatpush1.bf16.msra.mxu0 %v3166
  %3389 = vmatprep.mubr.bf16.mxu0 %v2637
  %3390 = vmatmul.mubr.bf16.gmra.mrb[0].mxu0 %v2634
  %v3391 = vpop.f32.mrb[0].mxu0
  %v3392 = vadd.f32 %v3333, %v3391
  %v3393 = vpop.f32.mrb[0].mxu0
  %v3394 = vadd.f32 %v3335, %v3393
  %v3395 = vpop.f32.mrb[0].mxu0
  %v3396 = vadd.f32 %v3337, %v3395
  %v3397 = vpop.f32.mrb[0].mxu0
  %v3398 = vadd.f32 %v3339, %v3397
  %3399 = vmatprep.mubr.bf16.mxu0 %v2645
  %3400 = vmatmul.mubr.bf16.gmra.mrb[0].mxu0 %v2643
  %v3401 = vpop.f32.mrb[0].mxu0
  %v3402 = vpop.f32.mrb[0].mxu0
  %v3403 = vpop.f32.mrb[0].mxu0
  %v3404 = vadd.f32 %v3345, %v3403
  %v3405 = vpop.f32.mrb[0].mxu0
  %v3406 = vadd.f32 %v3347, %v3405
  %3407 = vmatprep.mubr.bf16.mxu0 %v2644
  %3408 = vmatmul.mubr.bf16.gmra.mrb[0].mxu0 %v2642
  %v3409 = vpop.f32.mrb[0].mxu0
  %v3410 = vadd.f32 %v3351, %v3409
  %v3411 = vpop.f32.mrb[0].mxu0
  %v3412 = vadd.f32 %v3353, %v3411
  %v3413 = vpop.f32.mrb[0].mxu0
  %v3414 = vpop.f32.mrb[0].mxu0
  %3415 = vdwg.mxu0
  %3416 = vmatprep.subr.bf16.mxu0 %v3045
  %3417 = vmatpush1.bf16.msra.mxu0 %v3044
  %3418 = vmatprep.subr.bf16.mxu0 %v3049
  %3419 = vmatpush1.bf16.msra.mxu0 %v3048
  %3420 = vmatprep.subr.bf16.mxu0 %v3053
  %3421 = vmatpush1.bf16.msra.mxu0 %v3052
  %3422 = vmatprep.subr.bf16.mxu0 %v3057
  %3423 = vmatpush1.bf16.msra.mxu0 %v3056
  %3424 = vmatprep.subr.bf16.mxu0 %v3061
  %3425 = vmatpush1.bf16.msra.mxu0 %v3060
  %3426 = vmatprep.subr.bf16.mxu0 %v3065
  %3427 = vmatpush1.bf16.msra.mxu0 %v3064
  %3428 = vmatprep.subr.bf16.mxu0 %v3069
  %3429 = vmatpush1.bf16.msra.mxu0 %v3068
  %3430 = vmatprep.subr.bf16.mxu0 %v3073
  %3431 = vmatpush1.bf16.msra.mxu0 %v3072
  %3432 = vmatprep.subr.bf16.mxu0 %v3077
  %3433 = vmatpush1.bf16.msra.mxu0 %v3076
  %3434 = vmatprep.subr.bf16.mxu0 %v3081
  %3435 = vmatpush1.bf16.msra.mxu0 %v3080
  %3436 = vmatprep.subr.bf16.mxu0 %v3085
  %3437 = vmatpush1.bf16.msra.mxu0 %v3084
  %3438 = vmatprep.subr.bf16.mxu0 %v3089
  %3439 = vmatpush1.bf16.msra.mxu0 %v3088
  %3440 = vmatprep.subr.bf16.mxu0 %v3093
  %3441 = vmatpush1.bf16.msra.mxu0 %v3092
  %3442 = vmatprep.subr.bf16.mxu0 %v3097
  %3443 = vmatpush1.bf16.msra.mxu0 %v3096
  %3444 = vmatprep.subr.bf16.mxu0 %v3101
  %3445 = vmatpush1.bf16.msra.mxu0 %v3100
  %3446 = vmatprep.subr.bf16.mxu0 %v3105
  %3447 = vmatpush1.bf16.msra.mxu0 %v3104
  %3448 = vmatprep.mubr.bf16.mxu0 %v2631
  %3449 = vmatmul.mubr.bf16.gmra.mrb[0].mxu0 %v2628
  %v3450 = vpop.f32.mrb[0].mxu0
  %v3451 = vadd.f32 0.0, %v3450
  %v3452 = vpop.f32.mrb[0].mxu0
  %v3453 = vadd.f32 0.0, %v3452
  %v3454 = vpop.f32.mrb[0].mxu0
  %v3455 = vadd.f32 0.0, %v3454
  %v3456 = vpop.f32.mrb[0].mxu0
  %v3457 = vadd.f32 0.0, %v3456
  %3458 = vmatprep.mubr.bf16.mxu0 %v2641
  %3459 = vmatmul.mubr.bf16.gmra.mrb[0].mxu0 %v2639
  %v3460 = vpop.f32.mrb[0].mxu0
  %v3461 = vpop.f32.mrb[0].mxu0
  %v3462 = vpop.f32.mrb[0].mxu0
  %v3463 = vadd.f32 0.0, %v3462
  %v3464 = vpop.f32.mrb[0].mxu0
  %v3465 = vadd.f32 0.0, %v3464
  %3466 = vmatprep.mubr.bf16.mxu0 %v2640
  %3467 = vmatmul.mubr.bf16.gmra.mrb[0].mxu0 %v2638
  %v3468 = vpop.f32.mrb[0].mxu0
  %v3469 = vadd.f32 0.0, %v3468
  %v3470 = vpop.f32.mrb[0].mxu0
  %v3471 = vadd.f32 0.0, %v3470
  %v3472 = vpop.f32.mrb[0].mxu0
  %v3473 = vpop.f32.mrb[0].mxu0
  %3474 = vdwg.mxu0
  %3475 = vmatprep.subr.bf16.mxu0 %v3109
  %3476 = vmatpush1.bf16.msra.mxu0 %v3108
  %3477 = vmatprep.subr.bf16.mxu0 %v3113
  %3478 = vmatpush1.bf16.msra.mxu0 %v3112
  %3479 = vmatprep.subr.bf16.mxu0 %v3117
  %3480 = vmatpush1.bf16.msra.mxu0 %v3116
  %3481 = vmatprep.subr.bf16.mxu0 %v3121
  %3482 = vmatpush1.bf16.msra.mxu0 %v3120
  %3483 = vmatprep.subr.bf16.mxu0 %v3125
  %3484 = vmatpush1.bf16.msra.mxu0 %v3124
  %3485 = vmatprep.subr.bf16.mxu0 %v3129
  %3486 = vmatpush1.bf16.msra.mxu0 %v3128
  %3487 = vmatprep.subr.bf16.mxu0 %v3133
  %3488 = vmatpush1.bf16.msra.mxu0 %v3132
  %3489 = vmatprep.subr.bf16.mxu0 %v3137
  %3490 = vmatpush1.bf16.msra.mxu0 %v3136
  %3491 = vmatprep.subr.bf16.mxu0 %v3141
  %3492 = vmatpush1.bf16.msra.mxu0 %v3140
  %3493 = vmatprep.subr.bf16.mxu0 %v3145
  %3494 = vmatpush1.bf16.msra.mxu0 %v3144
  %3495 = vmatprep.subr.bf16.mxu0 %v3149
  %3496 = vmatpush1.bf16.msra.mxu0 %v3148
  %3497 = vmatprep.subr.bf16.mxu0 %v3153
  %3498 = vmatpush1.bf16.msra.mxu0 %v3152
  %3499 = vmatprep.subr.bf16.mxu0 %v3157
  %3500 = vmatpush1.bf16.msra.mxu0 %v3156
  %3501 = vmatprep.subr.bf16.mxu0 %v3161
  %3502 = vmatpush1.bf16.msra.mxu0 %v3160
  %3503 = vmatprep.subr.bf16.mxu0 %v3165
  %3504 = vmatpush1.bf16.msra.mxu0 %v3164
  %3505 = vmatprep.subr.bf16.mxu0 %v3169
  %3506 = vmatpush1.bf16.msra.mxu0 %v3168
  %3507 = vmatprep.mubr.bf16.mxu0 %v2637
  %3508 = vmatmul.mubr.bf16.gmra.mrb[0].mxu0 %v2634
  %v3509 = vpop.f32.mrb[0].mxu0
  %v3510 = vadd.f32 %v3451, %v3509
  %v3511 = vpop.f32.mrb[0].mxu0
  %v3512 = vadd.f32 %v3453, %v3511
  %v3513 = vpop.f32.mrb[0].mxu0
  %v3514 = vadd.f32 %v3455, %v3513
  %v3515 = vpop.f32.mrb[0].mxu0
  %v3516 = vadd.f32 %v3457, %v3515
  %3517 = vmatprep.mubr.bf16.mxu0 %v2645
  %3518 = vmatmul.mubr.bf16.gmra.mrb[0].mxu0 %v2643
  %v3519 = vpop.f32.mrb[0].mxu0
  %v3520 = vpop.f32.mrb[0].mxu0
  %v3521 = vpop.f32.mrb[0].mxu0
  %v3522 = vadd.f32 %v3463, %v3521
  %v3523 = vpop.f32.mrb[0].mxu0
  %v3524 = vadd.f32 %v3465, %v3523
  %3525 = vmatprep.mubr.bf16.mxu0 %v2644
  %3526 = vmatmul.mubr.bf16.gmra.mrb[0].mxu0 %v2642
  %v3527 = vpop.f32.mrb[0].mxu0
  %v3528 = vadd.f32 %v3469, %v3527
  %v3529 = vpop.f32.mrb[0].mxu0
  %v3530 = vadd.f32 %v3471, %v3529
  %v3531 = vpop.f32.mrb[0].mxu0
  %v3532 = vpop.f32.mrb[0].mxu0
  %3533 = vdwg.mxu0
  %v3534 = vadd.f32 %v2326, %v3392
  %v3535 = vadd.f32 %v2328, %v3394
  %v3536 = vadd.f32 %v2444, %v3510
  %v3537 = vadd.f32 %v2446, %v3512
  %v3538 = vadd.f32 %v2330, %v3396
  %v3539 = vadd.f32 %v2332, %v3398
  %v3540 = vadd.f32 %v2448, %v3514
  %v3541 = vadd.f32 %v2450, %v3516
  %v3542 = vadd.f32 %v2338, %v3404
  %v3543 = vadd.f32 %v2340, %v3406
  %v3544 = vadd.f32 %v2456, %v3522
  %v3545 = vadd.f32 %v2458, %v3524
  %v3546 = vadd.f32 %v2344, %v3410
  %v3547 = vadd.f32 %v2346, %v3412
  %v3548 = vadd.f32 %v2462, %v3528
  %v3549 = vadd.f32 %v2464, %v3530
  %v3550 = vadd.f32 %v3534, %v3535
  %v3551 = vadd.f32 %v3550, %v3536
  %v3552 = vadd.f32 %v3551, %v3537
  %v3553 = vadd.f32 %v3552, %v3538
  %v3554 = vadd.f32 %v3553, %v3539
  %v3555 = vadd.f32 %v3554, %v3540
  %v3556 = vadd.f32 %v3555, %v3541
  %3557 = vadd.xlane.f32.xlu0 %v3556
  %v3558 = vpop.xlane.xlu0 %3557
  %v3559 = vrot.slane %v3558, 4
  %v3560 = vadd.f32 %v3558, %v3559
  %v3561 = vrot.slane %v3560, 2
  %v3562 = vadd.f32 %v3560, %v3561
  %v3563 = vrot.slane %v3562, 1
  %v3564 = vadd.f32 %v3562, %v3563
  %s3565 = vtos %v3564
  %v3566 = vstv %s3565
  %v3567 = vmul.f32 %v3566, 0.00012207031
  %v3568 = vsub.f32 %v3534, %v3567
  %v3569 = vsub.f32 %v3535, %v3567
  %v3570 = vsub.f32 %v3536, %v3567
  %v3571 = vsub.f32 %v3537, %v3567
  %v3572 = vsub.f32 %v3538, %v3567
  %v3573 = vsub.f32 %v3539, %v3567
  %v3574 = vsub.f32 %v3540, %v3567
  %v3575 = vsub.f32 %v3541, %v3567
  %v3576 = vmul.f32 %v3568, %v3568
  %v3577 = vmul.f32 %v3569, %v3569
  %v3578 = vmul.f32 %v3570, %v3570
  %v3579 = vmul.f32 %v3571, %v3571
  %v3580 = vmul.f32 %v3572, %v3572
  %v3581 = vmul.f32 %v3573, %v3573
  %v3582 = vmul.f32 %v3574, %v3574
  %v3583 = vmul.f32 %v3575, %v3575
  %v3584 = vadd.f32 %v3576, %v3577
  %v3585 = vadd.f32 %v3584, %v3578
  %v3586 = vadd.f32 %v3585, %v3579
  %v3587 = vadd.f32 %v3586, %v3580
  %v3588 = vadd.f32 %v3587, %v3581
  %v3589 = vadd.f32 %v3588, %v3582
  %v3590 = vadd.f32 %v3589, %v3583
  %3591 = vadd.xlane.f32.xlu0 %v3590
  %v3592 = vpop.xlane.xlu0 %3591
  %v3593 = vrot.slane %v3592, 4
  %v3594 = vadd.f32 %v3592, %v3593
  %v3595 = vrot.slane %v3594, 2
  %v3596 = vadd.f32 %v3594, %v3595
  %v3597 = vrot.slane %v3596, 1
  %v3598 = vadd.f32 %v3596, %v3597
  %s3599 = vtos %v3598
  %v3600 = vstv %s3599
  %v3601 = vmul.f32 %v3600, 0.00012207031
  %v3602 = vadd.f32 %v3601, 1e-05
  %v3603 = vrsqrt.pop %v3602
  %v3604 = vmul.f32 %v3568, %v3603
  %v3605 = vmul.f32 %v3569, %v3603
  %v3606 = vmul.f32 %v3570, %v3603
  %v3607 = vmul.f32 %v3571, %v3603
  %v3608 = vmul.f32 %v3572, %v3603
  %v3609 = vmul.f32 %v3573, %v3603
  %v3610 = vmul.f32 %v3574, %v3603
  %v3611 = vmul.f32 %v3575, %v3603
  %v3612 = vld [vmem:[%s4] sm:$0xff]
  %v3613 = vld [vmem:[%s4 + $0x8] sm:$0xff]
  %v3614 = vld [vmem:[%s4 + $0x10] sm:$0xff]
  %v3615 = vld [vmem:[%s4 + $0x18] sm:$0xff]
  %v3616 = vld [vmem:[%s4 + $0x20] sm:$0xff]
  %v3617 = vld [vmem:[%s4 + $0x28] sm:$0xff]
  %v3618 = vld [vmem:[%s4 + $0x30] sm:$0xff]
  %v3619 = vld [vmem:[%s4 + $0x38] sm:$0xff]
  %v3620 = vmul.f32 %v3604, %v3612
  %v3621 = vmul.f32 %v3605, %v3613
  %v3622 = vmul.f32 %v3606, %v3614
  %v3623 = vmul.f32 %v3607, %v3615
  %v3624 = vmul.f32 %v3608, %v3616
  %v3625 = vmul.f32 %v3609, %v3617
  %v3626 = vmul.f32 %v3610, %v3618
  %v3627 = vmul.f32 %v3611, %v3619
  %v3628 = vld [vmem:[%s5] sm:$0xff]
  %v3629 = vld [vmem:[%s5 + $0x8] sm:$0xff]
  %v3630 = vld [vmem:[%s5 + $0x10] sm:$0xff]
  %v3631 = vld [vmem:[%s5 + $0x18] sm:$0xff]
  %v3632 = vld [vmem:[%s5 + $0x20] sm:$0xff]
  %v3633 = vld [vmem:[%s5 + $0x28] sm:$0xff]
  %v3634 = vld [vmem:[%s5 + $0x30] sm:$0xff]
  %v3635 = vld [vmem:[%s5 + $0x38] sm:$0xff]
  %v3636 = vadd.f32 %v3620, %v3628
  %v3637 = vadd.f32 %v3621, %v3629
  %v3638 = vadd.f32 %v3622, %v3630
  %v3639 = vadd.f32 %v3623, %v3631
  %v3640 = vadd.f32 %v3624, %v3632
  %v3641 = vadd.f32 %v3625, %v3633
  %v3642 = vadd.f32 %v3626, %v3634
  %v3643 = vadd.f32 %v3627, %v3635
  %v3644 = vmax.f32 %v3636, 0.0
  %v3645 = vmax.f32 %v3637, 0.0
  %v3646 = vmax.f32 %v3638, 0.0
  %v3647 = vmax.f32 %v3639, 0.0
  %v3648 = vmax.f32 %v3640, 0.0
  %v3649 = vmax.f32 %v3641, 0.0
  %v3650 = vmax.f32 %v3642, 0.0
  %v3651 = vmax.f32 %v3643, 0.0
  %v3660 = vrot.slane %v3644, 7
  %v3661 = vrot.slane %v3645, 7
  %v3662 = vrot.slane %v3646, 7
  %v3663 = vrot.slane %v3647, 7
  %v3664 = vrot.slane %v3648, 7
  %v3665 = vsel %vm122, %v3660, %v3664
  %v3666 = vrot.slane %v3649, 7
  %v3667 = vsel %vm122, %v3661, %v3666
  %v3668 = vrot.slane %v3650, 7
  %v3669 = vsel %vm122, %v3662, %v3668
  %v3670 = vrot.slane %v3651, 7
  %v3671 = vsel %vm122, %v3663, %v3670
  %3684 = vst [vmem:[#allocation2] sm:$0xfe] %v3660
  %3685 = vst [vmem:[#allocation2 + $0x8] sm:$0xfe] %v3661
  %3686 = vst [vmem:[#allocation2 + $0x10] sm:$0xfe] %v3662
  %3687 = vst [vmem:[#allocation2 + $0x18] sm:$0xfe] %v3663
  %3688 = vst [vmem:[#allocation2 + $0x20] sm:$0xff] %v3665
  %3689 = vst [vmem:[#allocation2 + $0x28] sm:$0xff] %v3667
  %3690 = vst [vmem:[#allocation2 + $0x30] sm:$0xff] %v3669
  %3691 = vst [vmem:[#allocation2 + $0x38] sm:$0xff] %v3671
  %3692 = vst [vmem:[#allocation2 + $0x40] sm:$0x1] %v3664
  %3693 = vst [vmem:[#allocation2 + $0x48] sm:$0x1] %v3666
  %3694 = vst [vmem:[#allocation2 + $0x50] sm:$0x1] %v3668
  %3695 = vst [vmem:[#allocation2 + $0x58] sm:$0x1] %v3670
  %v3696 = vadd.f32 %v3542, %v3543
  %v3697 = vadd.f32 %v3696, %v3544
  %v3698 = vadd.f32 %v3697, %v3545
  %v3699 = vadd.f32 %v3698, %v3546
  %v3700 = vadd.f32 %v3699, %v3547
  %v3701 = vadd.f32 %v3700, %v3548
  %v3702 = vadd.f32 %v3701, %v3549
  %3703 = vadd.xlane.f32.xlu0 %v3702
  %v3704 = vpop.xlane.xlu0 %3703
  %v3705 = vrot.slane %v3704, 4
  %v3706 = vadd.f32 %v3704, %v3705
  %v3707 = vrot.slane %v3706, 2
  %v3708 = vadd.f32 %v3706, %v3707
  %v3709 = vrot.slane %v3708, 1
  %v3710 = vadd.f32 %v3708, %v3709
  %s3711 = vtos %v3710
  %v3712 = vstv %s3711
  %v3713 = vmul.f32 %v3712, 0.00012207031
  %v3714 = vsub.f32 %v3542, %v3713
  %v3715 = vsub.f32 %v3543, %v3713
  %v3716 = vsub.f32 %v3544, %v3713
  %v3717 = vsub.f32 %v3545, %v3713
  %v3718 = vsub.f32 %v3546, %v3713
  %v3719 = vsub.f32 %v3547, %v3713
  %v3720 = vsub.f32 %v3548, %v3713
  %v3721 = vsub.f32 %v3549, %v3713
  %v3722 = vmul.f32 %v3714, %v3714
  %v3723 = vmul.f32 %v3715, %v3715
  %v3724 = vmul.f32 %v3716, %v3716
  %v3725 = vmul.f32 %v3717, %v3717
  %v3726 = vmul.f32 %v3718, %v3718
  %v3727 = vmul.f32 %v3719, %v3719
  %v3728 = vmul.f32 %v3720, %v3720
  %v3729 = vmul.f32 %v3721, %v3721
  %v3730 = vadd.f32 %v3722, %v3723
  %v3731 = vadd.f32 %v3730, %v3724
  %v3732 = vadd.f32 %v3731, %v3725
  %v3733 = vadd.f32 %v3732, %v3726
  %v3734 = vadd.f32 %v3733, %v3727
  %v3735 = vadd.f32 %v3734, %v3728
  %v3736 = vadd.f32 %v3735, %v3729
  %3737 = vadd.xlane.f32.xlu0 %v3736
  %v3738 = vpop.xlane.xlu0 %3737
  %v3739 = vrot.slane %v3738, 4
  %v3740 = vadd.f32 %v3738, %v3739
  %v3741 = vrot.slane %v3740, 2
  %v3742 = vadd.f32 %v3740, %v3741
  %v3743 = vrot.slane %v3742, 1
  %v3744 = vadd.f32 %v3742, %v3743
  %s3745 = vtos %v3744
  %v3746 = vstv %s3745
  %v3747 = vmul.f32 %v3746, 0.00012207031
  %v3748 = vadd.f32 %v3747, 1e-05
  %v3749 = vrsqrt.pop %v3748
  %v3750 = vmul.f32 %v3714, %v3749
  %v3751 = vmul.f32 %v3715, %v3749
  %v3752 = vmul.f32 %v3716, %v3749
  %v3753 = vmul.f32 %v3717, %v3749
  %v3754 = vmul.f32 %v3718, %v3749
  %v3755 = vmul.f32 %v3719, %v3749
  %v3756 = vmul.f32 %v3720, %v3749
  %v3757 = vmul.f32 %v3721, %v3749
  %v3758 = vld [vmem:[%s4] sm:$0xff]
  %v3759 = vld [vmem:[%s4 + $0x8] sm:$0xff]
  %v3760 = vld [vmem:[%s4 + $0x10] sm:$0xff]
  %v3761 = vld [vmem:[%s4 + $0x18] sm:$0xff]
  %v3762 = vld [vmem:[%s4 + $0x20] sm:$0xff]
  %v3763 = vld [vmem:[%s4 + $0x28] sm:$0xff]
  %v3764 = vld [vmem:[%s4 + $0x30] sm:$0xff]
  %v3765 = vld [vmem:[%s4 + $0x38] sm:$0xff]
  %v3766 = vmul.f32 %v3750, %v3758
  %v3767 = vmul.f32 %v3751, %v3759
  %v3768 = vmul.f32 %v3752, %v3760
  %v3769 = vmul.f32 %v3753, %v3761
  %v3770 = vmul.f32 %v3754, %v3762
  %v3771 = vmul.f32 %v3755, %v3763
  %v3772 = vmul.f32 %v3756, %v3764
  %v3773 = vmul.f32 %v3757, %v3765
  %v3774 = vld [vmem:[%s5] sm:$0xff]
  %v3775 = vld [vmem:[%s5 + $0x8] sm:$0xff]
  %v3776 = vld [vmem:[%s5 + $0x10] sm:$0xff]
  %v3777 = vld [vmem:[%s5 + $0x18] sm:$0xff]
  %v3778 = vld [vmem:[%s5 + $0x20] sm:$0xff]
  %v3779 = vld [vmem:[%s5 + $0x28] sm:$0xff]
  %v3780 = vld [vmem:[%s5 + $0x30] sm:$0xff]
  %v3781 = vld [vmem:[%s5 + $0x38] sm:$0xff]
  %v3782 = vadd.f32 %v3766, %v3774
  %v3783 = vadd.f32 %v3767, %v3775
  %v3784 = vadd.f32 %v3768, %v3776
  %v3785 = vadd.f32 %v3769, %v3777
  %v3786 = vadd.f32 %v3770, %v3778
  %v3787 = vadd.f32 %v3771, %v3779
  %v3788 = vadd.f32 %v3772, %v3780
  %v3789 = vadd.f32 %v3773, %v3781
  %v3790 = vmax.f32 %v3782, 0.0
  %v3791 = vmax.f32 %v3783, 0.0
  %v3792 = vmax.f32 %v3784, 0.0
  %v3793 = vmax.f32 %v3785, 0.0
  %v3794 = vmax.f32 %v3786, 0.0
  %v3795 = vmax.f32 %v3787, 0.0
  %v3796 = vmax.f32 %v3788, 0.0
  %v3797 = vmax.f32 %v3789, 0.0
  %v3806 = vrot.slane %v3790, 7
  %v3807 = vrot.slane %v3791, 7
  %v3808 = vrot.slane %v3792, 7
  %v3809 = vrot.slane %v3793, 7
  %v3810 = vrot.slane %v3794, 7
  %v3811 = vsel %vm122, %v3806, %v3810
  %v3812 = vrot.slane %v3795, 7
  %v3813 = vsel %vm122, %v3807, %v3812
  %v3814 = vrot.slane %v3796, 7
  %v3815 = vsel %vm122, %v3808, %v3814
  %v3816 = vrot.slane %v3797, 7
  %v3817 = vsel %vm122, %v3809, %v3816
  %3830 = vst [vmem:[#allocation2 + $0x60] sm:$0xfe] %v3806
  %3831 = vst [vmem:[#allocation2 + $0x68] sm:$0xfe] %v3807
  %3832 = vst [vmem:[#allocation2 + $0x70] sm:$0xfe] %v3808
  %3833 = vst [vmem:[#allocation2 + $0x78] sm:$0xfe] %v3809
  %3834 = vst [vmem:[#allocation2 + $0x80] sm:$0xff] %v3811
  %3835 = vst [vmem:[#allocation2 + $0x88] sm:$0xff] %v3813
  %3836 = vst [vmem:[#allocation2 + $0x90] sm:$0xff] %v3815
  %3837 = vst [vmem:[#allocation2 + $0x98] sm:$0xff] %v3817
  %3838 = vst [vmem:[#allocation2 + $0xa0] sm:$0x1] %v3810
  %3839 = vst [vmem:[#allocation2 + $0xa8] sm:$0x1] %v3812
  %3840 = vst [vmem:[#allocation2 + $0xb0] sm:$0x1] %v3814
  %3841 = vst [vmem:[#allocation2 + $0xb8] sm:$0x1] %v3816
  %v3842 = vld [vmem:[#allocation2] sm:$0xff]
  %v3843 = vld [vmem:[#allocation2 + $0x8] sm:$0xff]
  %v3844 = vld [vmem:[#allocation2 + $0x10] sm:$0xff]
  %v3845 = vld [vmem:[#allocation2 + $0x18] sm:$0xff]
  %v3846 = vld [vmem:[#allocation2 + $0x20] sm:$0xff]
  %v3847 = vld [vmem:[#allocation2 + $0x28] sm:$0xff]
  %v3848 = vld [vmem:[#allocation2 + $0x30] sm:$0xff]
  %v3849 = vld [vmem:[#allocation2 + $0x38] sm:$0xff]
  %v3850 = vld [vmem:[#allocation2 + $0x40] sm:$0xff]
  %v3851 = vld [vmem:[#allocation2 + $0x48] sm:$0xff]
  %v3852 = vld [vmem:[#allocation2 + $0x50] sm:$0xff]
  %v3853 = vld [vmem:[#allocation2 + $0x58] sm:$0xff]
  %v3854 = vld [vmem:[#allocation2 + $0x60] sm:$0xff]
  %v3855 = vld [vmem:[#allocation2 + $0x68] sm:$0xff]
  %v3856 = vld [vmem:[#allocation2 + $0x70] sm:$0xff]
  %v3857 = vld [vmem:[#allocation2 + $0x78] sm:$0xff]
  %v3858 = vld [vmem:[#allocation2 + $0x80] sm:$0xff]
  %v3859 = vld [vmem:[#allocation2 + $0x88] sm:$0xff]
  %v3860 = vld [vmem:[#allocation2 + $0x90] sm:$0xff]
  %v3861 = vld [vmem:[#allocation2 + $0x98] sm:$0xff]
  %v3862 = vpack.c.bf16 %v3846, %v3842
  %v3863 = vpack.c.bf16 %v3847, %v3843
  %v3864 = vpack.c.bf16 %v3848, %v3844
  %v3865 = vpack.c.bf16 %v3849, %v3845
  %v3866 = vpack.c.bf16 %v3854, %v3850
  %v3867 = vpack.c.bf16 %v3855, %v3851
  %v3868 = vpack.c.bf16 %v3856, %v3852
  %v3869 = vpack.c.bf16 %v3857, %v3853
  %v3870 = vpack.c.bf16 %v3858, %v3858
  %v3871 = vpack.c.bf16 %v3859, %v3859
  %v3872 = vpack.c.bf16 %v3860, %v3860
  %v3873 = vpack.c.bf16 %v3861, %v3861
  %v3874 = vld [vmem:[%s6] sm:$0xff]
  %v3875 = vld [vmem:[%s6 + $0x8] sm:$0xff]
  %v3876 = vld [vmem:[%s6 + $0x10] sm:$0xff]
  %v3877 = vld [vmem:[%s6 + $0x18] sm:$0xff]
  %v3878 = vld [vmem:[%s6 + $0x20] sm:$0xff]
  %v3879 = vld [vmem:[%s6 + $0x28] sm:$0xff]
  %v3880 = vld [vmem:[%s6 + $0x30] sm:$0xff]
  %v3881 = vld [vmem:[%s6 + $0x38] sm:$0xff]
  %v3882 = vld [vmem:[%s6 + $0x40] sm:$0xff]
  %v3883 = vld [vmem:[%s6 + $0x48] sm:$0xff]
  %v3884 = vld [vmem:[%s6 + $0x50] sm:$0xff]
  %v3885 = vld [vmem:[%s6 + $0x58] sm:$0xff]
  %v3886 = vld [vmem:[%s6 + $0x60] sm:$0xff]
  %v3887 = vld [vmem:[%s6 + $0x68] sm:$0xff]
  %v3888 = vld [vmem:[%s6 + $0x70] sm:$0xff]
  %v3889 = vld [vmem:[%s6 + $0x78] sm:$0xff]
  %v3890 = vld [vmem:[%s6 + $0x80] sm:$0xff]
  %v3891 = vld [vmem:[%s6 + $0x88] sm:$0xff]
  %v3892 = vld [vmem:[%s6 + $0x90] sm:$0xff]
  %v3893 = vld [vmem:[%s6 + $0x98] sm:$0xff]
  %v3894 = vld [vmem:[%s6 + $0xa0] sm:$0xff]
  %v3895 = vld [vmem:[%s6 + $0xa8] sm:$0xff]
  %v3896 = vld [vmem:[%s6 + $0xb0] sm:$0xff]
  %v3897 = vld [vmem:[%s6 + $0xb8] sm:$0xff]
  %v3898 = vld [vmem:[%s6 + $0xc0] sm:$0xff]
  %v3899 = vld [vmem:[%s6 + $0xc8] sm:$0xff]
  %v3900 = vld [vmem:[%s6 + $0xd0] sm:$0xff]
  %v3901 = vld [vmem:[%s6 + $0xd8] sm:$0xff]
  %v3902 = vld [vmem:[%s6 + $0xe0] sm:$0xff]
  %v3903 = vld [vmem:[%s6 + $0xe8] sm:$0xff]
  %v3904 = vld [vmem:[%s6 + $0xf0] sm:$0xff]
  %v3905 = vld [vmem:[%s6 + $0xf8] sm:$0xff]
  %v3906 = vld [vmem:[%s6 + $0x100] sm:$0xff]
  %v3907 = vld [vmem:[%s6 + $0x108] sm:$0xff]
  %v3908 = vld [vmem:[%s6 + $0x110] sm:$0xff]
  %v3909 = vld [vmem:[%s6 + $0x118] sm:$0xff]
  %v3910 = vld [vmem:[%s6 + $0x120] sm:$0xff]
  %v3911 = vld [vmem:[%s6 + $0x128] sm:$0xff]
  %v3912 = vld [vmem:[%s6 + $0x130] sm:$0xff]
  %v3913 = vld [vmem:[%s6 + $0x138] sm:$0xff]
  %v3914 = vld [vmem:[%s6 + $0x140] sm:$0xff]
  %v3915 = vld [vmem:[%s6 + $0x148] sm:$0xff]
  %v3916 = vld [vmem:[%s6 + $0x150] sm:$0xff]
  %v3917 = vld [vmem:[%s6 + $0x158] sm:$0xff]
  %v3918 = vld [vmem:[%s6 + $0x160] sm:$0xff]
  %v3919 = vld [vmem:[%s6 + $0x168] sm:$0xff]
  %v3920 = vld [vmem:[%s6 + $0x170] sm:$0xff]
  %v3921 = vld [vmem:[%s6 + $0x178] sm:$0xff]
  %v3922 = vld [vmem:[%s6 + $0x180] sm:$0xff]
  %v3923 = vld [vmem:[%s6 + $0x188] sm:$0xff]
  %v3924 = vld [vmem:[%s6 + $0x190] sm:$0xff]
  %v3925 = vld [vmem:[%s6 + $0x198] sm:$0xff]
  %v3926 = vld [vmem:[%s6 + $0x1a0] sm:$0xff]
  %v3927 = vld [vmem:[%s6 + $0x1a8] sm:$0xff]
  %v3928 = vld [vmem:[%s6 + $0x1b0] sm:$0xff]
  %v3929 = vld [vmem:[%s6 + $0x1b8] sm:$0xff]
  %v3930 = vld [vmem:[%s6 + $0x1c0] sm:$0xff]
  %v3931 = vld [vmem:[%s6 + $0x1c8] sm:$0xff]
  %v3932 = vld [vmem:[%s6 + $0x1d0] sm:$0xff]
  %v3933 = vld [vmem:[%s6 + $0x1d8] sm:$0xff]
  %v3934 = vld [vmem:[%s6 + $0x1e0] sm:$0xff]
  %v3935 = vld [vmem:[%s6 + $0x1e8] sm:$0xff]
  %v3936 = vld [vmem:[%s6 + $0x1f0] sm:$0xff]
  %v3937 = vld [vmem:[%s6 + $0x1f8] sm:$0xff]
  %v3938 = vld [vmem:[%s6 + $0x200] sm:$0xff]
  %v3939 = vld [vmem:[%s6 + $0x208] sm:$0xff]
  %v3940 = vld [vmem:[%s6 + $0x210] sm:$0xff]
  %v3941 = vld [vmem:[%s6 + $0x218] sm:$0xff]
  %v3942 = vld [vmem:[%s6 + $0x220] sm:$0xff]
  %v3943 = vld [vmem:[%s6 + $0x228] sm:$0xff]
  %v3944 = vld [vmem:[%s6 + $0x230] sm:$0xff]
  %v3945 = vld [vmem:[%s6 + $0x238] sm:$0xff]
  %v3946 = vld [vmem:[%s6 + $0x240] sm:$0xff]
  %v3947 = vld [vmem:[%s6 + $0x248] sm:$0xff]
  %v3948 = vld [vmem:[%s6 + $0x250] sm:$0xff]
  %v3949 = vld [vmem:[%s6 + $0x258] sm:$0xff]
  %v3950 = vld [vmem:[%s6 + $0x260] sm:$0xff]
  %v3951 = vld [vmem:[%s6 + $0x268] sm:$0xff]
  %v3952 = vld [vmem:[%s6 + $0x270] sm:$0xff]
  %v3953 = vld [vmem:[%s6 + $0x278] sm:$0xff]
  %v3954 = vld [vmem:[%s6 + $0x280] sm:$0xff]
  %v3955 = vld [vmem:[%s6 + $0x288] sm:$0xff]
  %v3956 = vld [vmem:[%s6 + $0x290] sm:$0xff]
  %v3957 = vld [vmem:[%s6 + $0x298] sm:$0xff]
  %v3958 = vld [vmem:[%s6 + $0x2a0] sm:$0xff]
  %v3959 = vld [vmem:[%s6 + $0x2a8] sm:$0xff]
  %v3960 = vld [vmem:[%s6 + $0x2b0] sm:$0xff]
  %v3961 = vld [vmem:[%s6 + $0x2b8] sm:$0xff]
  %v3962 = vld [vmem:[%s6 + $0x2c0] sm:$0xff]
  %v3963 = vld [vmem:[%s6 + $0x2c8] sm:$0xff]
  %v3964 = vld [vmem:[%s6 + $0x2d0] sm:$0xff]
  %v3965 = vld [vmem:[%s6 + $0x2d8] sm:$0xff]
  %v3966 = vld [vmem:[%s6 + $0x2e0] sm:$0xff]
  %v3967 = vld [vmem:[%s6 + $0x2e8] sm:$0xff]
  %v3968 = vld [vmem:[%s6 + $0x2f0] sm:$0xff]
  %v3969 = vld [vmem:[%s6 + $0x2f8] sm:$0xff]
  %v3970 = vld [vmem:[%s6 + $0x300] sm:$0xff]
  %v3971 = vld [vmem:[%s6 + $0x308] sm:$0xff]
  %v3972 = vld [vmem:[%s6 + $0x310] sm:$0xff]
  %v3973 = vld [vmem:[%s6 + $0x318] sm:$0xff]
  %v3974 = vld [vmem:[%s6 + $0x320] sm:$0xff]
  %v3975 = vld [vmem:[%s6 + $0x328] sm:$0xff]
  %v3976 = vld [vmem:[%s6 + $0x330] sm:$0xff]
  %v3977 = vld [vmem:[%s6 + $0x338] sm:$0xff]
  %v3978 = vld [vmem:[%s6 + $0x340] sm:$0xff]
  %v3979 = vld [vmem:[%s6 + $0x348] sm:$0xff]
  %v3980 = vld [vmem:[%s6 + $0x350] sm:$0xff]
  %v3981 = vld [vmem:[%s6 + $0x358] sm:$0xff]
  %v3982 = vld [vmem:[%s6 + $0x360] sm:$0xff]
  %v3983 = vld [vmem:[%s6 + $0x368] sm:$0xff]
  %v3984 = vld [vmem:[%s6 + $0x370] sm:$0xff]
  %v3985 = vld [vmem:[%s6 + $0x378] sm:$0xff]
  %v3986 = vld [vmem:[%s6 + $0x380] sm:$0xff]
  %v3987 = vld [vmem:[%s6 + $0x388] sm:$0xff]
  %v3988 = vld [vmem:[%s6 + $0x390] sm:$0xff]
  %v3989 = vld [vmem:[%s6 + $0x398] sm:$0xff]
  %v3990 = vld [vmem:[%s6 + $0x3a0] sm:$0xff]
  %v3991 = vld [vmem:[%s6 + $0x3a8] sm:$0xff]
  %v3992 = vld [vmem:[%s6 + $0x3b0] sm:$0xff]
  %v3993 = vld [vmem:[%s6 + $0x3b8] sm:$0xff]
  %v3994 = vld [vmem:[%s6 + $0x3c0] sm:$0xff]
  %v3995 = vld [vmem:[%s6 + $0x3c8] sm:$0xff]
  %v3996 = vld [vmem:[%s6 + $0x3d0] sm:$0xff]
  %v3997 = vld [vmem:[%s6 + $0x3d8] sm:$0xff]
  %v3998 = vld [vmem:[%s6 + $0x3e0] sm:$0xff]
  %v3999 = vld [vmem:[%s6 + $0x3e8] sm:$0xff]
  %v4000 = vld [vmem:[%s6 + $0x3f0] sm:$0xff]
  %v4001 = vld [vmem:[%s6 + $0x3f8] sm:$0xff]
  %v4002 = vld [vmem:[#allocation2] sm:$0xfe]
  %v4003 = vld [vmem:[#allocation2 + $0x8] sm:$0xfe]
  %v4004 = vld [vmem:[#allocation2 + $0x10] sm:$0xfe]
  %v4005 = vld [vmem:[#allocation2 + $0x18] sm:$0xfe]
  %v4006 = vld [vmem:[#allocation2 + $0x20] sm:$0xff]
  %v4007 = vld [vmem:[#allocation2 + $0x28] sm:$0xff]
  %v4008 = vld [vmem:[#allocation2 + $0x30] sm:$0xff]
  %v4009 = vld [vmem:[#allocation2 + $0x38] sm:$0xff]
  %v4010 = vld [vmem:[#allocation2 + $0x40] sm:$0xff]
  %v4011 = vld [vmem:[#allocation2 + $0x48] sm:$0xff]
  %v4012 = vld [vmem:[#allocation2 + $0x50] sm:$0xff]
  %v4013 = vld [vmem:[#allocation2 + $0x58] sm:$0xff]
  %v4014 = vld [vmem:[#allocation2 + $0x60] sm:$0xff]
  %v4015 = vld [vmem:[#allocation2 + $0x68] sm:$0xff]
  %v4016 = vld [vmem:[#allocation2 + $0x70] sm:$0xff]
  %v4017 = vld [vmem:[#allocation2 + $0x78] sm:$0xff]
  %v4018 = vld [vmem:[#allocation2 + $0x80] sm:$0xff]
  %v4019 = vld [vmem:[#allocation2 + $0x88] sm:$0xff]
  %v4020 = vld [vmem:[#allocation2 + $0x90] sm:$0xff]
  %v4021 = vld [vmem:[#allocation2 + $0x98] sm:$0xff]
  %v4022 = vld [vmem:[#allocation2 + $0xa0] sm:$0x1]
  %v4023 = vld [vmem:[#allocation2 + $0xa8] sm:$0x1]
  %v4024 = vld [vmem:[#allocation2 + $0xb0] sm:$0x1]
  %v4025 = vld [vmem:[#allocation2 + $0xb8] sm:$0x1]
  %v4026 = vpack.c.bf16 %v4006, %v4002
  %v4027 = vpack.c.bf16 %v4007, %v4003
  %v4028 = vpack.c.bf16 %v4008, %v4004
  %v4029 = vpack.c.bf16 %v4009, %v4005
  %v4030 = vpack.c.bf16 %v4014, %v4010
  %v4031 = vpack.c.bf16 %v4015, %v4011
  %v4032 = vpack.c.bf16 %v4016, %v4012
  %v4033 = vpack.c.bf16 %v4017, %v4013
  %v4034 = vpack.c.bf16 %v4022, %v4018
  %v4035 = vpack.c.bf16 %v4023, %v4019
  %v4036 = vpack.c.bf16 %v4024, %v4020
  %v4037 = vpack.c.bf16 %v4025, %v4021
  %s4038 = scalar_lea.vmem %s6, 1024
  %v4039 = vld [vmem:[%s4038] sm:$0xff]
  %v4040 = vld [vmem:[%s4038 + $0x8] sm:$0xff]
  %v4041 = vld [vmem:[%s4038 + $0x10] sm:$0xff]
  %v4042 = vld [vmem:[%s4038 + $0x18] sm:$0xff]
  %v4043 = vld [vmem:[%s4038 + $0x20] sm:$0xff]
  %v4044 = vld [vmem:[%s4038 + $0x28] sm:$0xff]
  %v4045 = vld [vmem:[%s4038 + $0x30] sm:$0xff]
  %v4046 = vld [vmem:[%s4038 + $0x38] sm:$0xff]
  %v4047 = vld [vmem:[%s4038 + $0x40] sm:$0xff]
  %v4048 = vld [vmem:[%s4038 + $0x48] sm:$0xff]
  %v4049 = vld [vmem:[%s4038 + $0x50] sm:$0xff]
  %v4050 = vld [vmem:[%s4038 + $0x58] sm:$0xff]
  %v4051 = vld [vmem:[%s4038 + $0x60] sm:$0xff]
  %v4052 = vld [vmem:[%s4038 + $0x68] sm:$0xff]
  %v4053 = vld [vmem:[%s4038 + $0x70] sm:$0xff]
  %v4054 = vld [vmem:[%s4038 + $0x78] sm:$0xff]
  %v4055 = vld [vmem:[%s4038 + $0x80] sm:$0xff]
  %v4056 = vld [vmem:[%s4038 + $0x88] sm:$0xff]
  %v4057 = vld [vmem:[%s4038 + $0x90] sm:$0xff]
  %v4058 = vld [vmem:[%s4038 + $0x98] sm:$0xff]
  %v4059 = vld [vmem:[%s4038 + $0xa0] sm:$0xff]
  %v4060 = vld [vmem:[%s4038 + $0xa8] sm:$0xff]
  %v4061 = vld [vmem:[%s4038 + $0xb0] sm:$0xff]
  %v4062 = vld [vmem:[%s4038 + $0xb8] sm:$0xff]
  %v4063 = vld [vmem:[%s4038 + $0xc0] sm:$0xff]
  %v4064 = vld [vmem:[%s4038 + $0xc8] sm:$0xff]
  %v4065 = vld [vmem:[%s4038 + $0xd0] sm:$0xff]
  %v4066 = vld [vmem:[%s4038 + $0xd8] sm:$0xff]
  %v4067 = vld [vmem:[%s4038 + $0xe0] sm:$0xff]
  %v4068 = vld [vmem:[%s4038 + $0xe8] sm:$0xff]
  %v4069 = vld [vmem:[%s4038 + $0xf0] sm:$0xff]
  %v4070 = vld [vmem:[%s4038 + $0xf8] sm:$0xff]
  %v4071 = vld [vmem:[%s4038 + $0x100] sm:$0xff]
  %v4072 = vld [vmem:[%s4038 + $0x108] sm:$0xff]
  %v4073 = vld [vmem:[%s4038 + $0x110] sm:$0xff]
  %v4074 = vld [vmem:[%s4038 + $0x118] sm:$0xff]
  %v4075 = vld [vmem:[%s4038 + $0x120] sm:$0xff]
  %v4076 = vld [vmem:[%s4038 + $0x128] sm:$0xff]
  %v4077 = vld [vmem:[%s4038 + $0x130] sm:$0xff]
  %v4078 = vld [vmem:[%s4038 + $0x138] sm:$0xff]
  %v4079 = vld [vmem:[%s4038 + $0x140] sm:$0xff]
  %v4080 = vld [vmem:[%s4038 + $0x148] sm:$0xff]
  %v4081 = vld [vmem:[%s4038 + $0x150] sm:$0xff]
  %v4082 = vld [vmem:[%s4038 + $0x158] sm:$0xff]
  %v4083 = vld [vmem:[%s4038 + $0x160] sm:$0xff]
  %v4084 = vld [vmem:[%s4038 + $0x168] sm:$0xff]
  %v4085 = vld [vmem:[%s4038 + $0x170] sm:$0xff]
  %v4086 = vld [vmem:[%s4038 + $0x178] sm:$0xff]
  %v4087 = vld [vmem:[%s4038 + $0x180] sm:$0xff]
  %v4088 = vld [vmem:[%s4038 + $0x188] sm:$0xff]
  %v4089 = vld [vmem:[%s4038 + $0x190] sm:$0xff]
  %v4090 = vld [vmem:[%s4038 + $0x198] sm:$0xff]
  %v4091 = vld [vmem:[%s4038 + $0x1a0] sm:$0xff]
  %v4092 = vld [vmem:[%s4038 + $0x1a8] sm:$0xff]
  %v4093 = vld [vmem:[%s4038 + $0x1b0] sm:$0xff]
  %v4094 = vld [vmem:[%s4038 + $0x1b8] sm:$0xff]
  %v4095 = vld [vmem:[%s4038 + $0x1c0] sm:$0xff]
  %v4096 = vld [vmem:[%s4038 + $0x1c8] sm:$0xff]
  %v4097 = vld [vmem:[%s4038 + $0x1d0] sm:$0xff]
  %v4098 = vld [vmem:[%s4038 + $0x1d8] sm:$0xff]
  %v4099 = vld [vmem:[%s4038 + $0x1e0] sm:$0xff]
  %v4100 = vld [vmem:[%s4038 + $0x1e8] sm:$0xff]
  %v4101 = vld [vmem:[%s4038 + $0x1f0] sm:$0xff]
  %v4102 = vld [vmem:[%s4038 + $0x1f8] sm:$0xff]
  %v4103 = vld [vmem:[%s4038 + $0x200] sm:$0xff]
  %v4104 = vld [vmem:[%s4038 + $0x208] sm:$0xff]
  %v4105 = vld [vmem:[%s4038 + $0x210] sm:$0xff]
  %v4106 = vld [vmem:[%s4038 + $0x218] sm:$0xff]
  %v4107 = vld [vmem:[%s4038 + $0x220] sm:$0xff]
  %v4108 = vld [vmem:[%s4038 + $0x228] sm:$0xff]
  %v4109 = vld [vmem:[%s4038 + $0x230] sm:$0xff]
  %v4110 = vld [vmem:[%s4038 + $0x238] sm:$0xff]
  %v4111 = vld [vmem:[%s4038 + $0x240] sm:$0xff]
  %v4112 = vld [vmem:[%s4038 + $0x248] sm:$0xff]
  %v4113 = vld [vmem:[%s4038 + $0x250] sm:$0xff]
  %v4114 = vld [vmem:[%s4038 + $0x258] sm:$0xff]
  %v4115 = vld [vmem:[%s4038 + $0x260] sm:$0xff]
  %v4116 = vld [vmem:[%s4038 + $0x268] sm:$0xff]
  %v4117 = vld [vmem:[%s4038 + $0x270] sm:$0xff]
  %v4118 = vld [vmem:[%s4038 + $0x278] sm:$0xff]
  %v4119 = vld [vmem:[%s4038 + $0x280] sm:$0xff]
  %v4120 = vld [vmem:[%s4038 + $0x288] sm:$0xff]
  %v4121 = vld [vmem:[%s4038 + $0x290] sm:$0xff]
  %v4122 = vld [vmem:[%s4038 + $0x298] sm:$0xff]
  %v4123 = vld [vmem:[%s4038 + $0x2a0] sm:$0xff]
  %v4124 = vld [vmem:[%s4038 + $0x2a8] sm:$0xff]
  %v4125 = vld [vmem:[%s4038 + $0x2b0] sm:$0xff]
  %v4126 = vld [vmem:[%s4038 + $0x2b8] sm:$0xff]
  %v4127 = vld [vmem:[%s4038 + $0x2c0] sm:$0xff]
  %v4128 = vld [vmem:[%s4038 + $0x2c8] sm:$0xff]
  %v4129 = vld [vmem:[%s4038 + $0x2d0] sm:$0xff]
  %v4130 = vld [vmem:[%s4038 + $0x2d8] sm:$0xff]
  %v4131 = vld [vmem:[%s4038 + $0x2e0] sm:$0xff]
  %v4132 = vld [vmem:[%s4038 + $0x2e8] sm:$0xff]
  %v4133 = vld [vmem:[%s4038 + $0x2f0] sm:$0xff]
  %v4134 = vld [vmem:[%s4038 + $0x2f8] sm:$0xff]
  %v4135 = vld [vmem:[%s4038 + $0x300] sm:$0xff]
  %v4136 = vld [vmem:[%s4038 + $0x308] sm:$0xff]
  %v4137 = vld [vmem:[%s4038 + $0x310] sm:$0xff]
  %v4138 = vld [vmem:[%s4038 + $0x318] sm:$0xff]
  %v4139 = vld [vmem:[%s4038 + $0x320] sm:$0xff]
  %v4140 = vld [vmem:[%s4038 + $0x328] sm:$0xff]
  %v4141 = vld [vmem:[%s4038 + $0x330] sm:$0xff]
  %v4142 = vld [vmem:[%s4038 + $0x338] sm:$0xff]
  %v4143 = vld [vmem:[%s4038 + $0x340] sm:$0xff]
  %v4144 = vld [vmem:[%s4038 + $0x348] sm:$0xff]
  %v4145 = vld [vmem:[%s4038 + $0x350] sm:$0xff]
  %v4146 = vld [vmem:[%s4038 + $0x358] sm:$0xff]
  %v4147 = vld [vmem:[%s4038 + $0x360] sm:$0xff]
  %v4148 = vld [vmem:[%s4038 + $0x368] sm:$0xff]
  %v4149 = vld [vmem:[%s4038 + $0x370] sm:$0xff]
  %v4150 = vld [vmem:[%s4038 + $0x378] sm:$0xff]
  %v4151 = vld [vmem:[%s4038 + $0x380] sm:$0xff]
  %v4152 = vld [vmem:[%s4038 + $0x388] sm:$0xff]
  %v4153 = vld [vmem:[%s4038 + $0x390] sm:$0xff]
  %v4154 = vld [vmem:[%s4038 + $0x398] sm:$0xff]
  %v4155 = vld [vmem:[%s4038 + $0x3a0] sm:$0xff]
  %v4156 = vld [vmem:[%s4038 + $0x3a8] sm:$0xff]
  %v4157 = vld [vmem:[%s4038 + $0x3b0] sm:$0xff]
  %v4158 = vld [vmem:[%s4038 + $0x3b8] sm:$0xff]
  %v4159 = vld [vmem:[%s4038 + $0x3c0] sm:$0xff]
  %v4160 = vld [vmem:[%s4038 + $0x3c8] sm:$0xff]
  %v4161 = vld [vmem:[%s4038 + $0x3d0] sm:$0xff]
  %v4162 = vld [vmem:[%s4038 + $0x3d8] sm:$0xff]
  %v4163 = vld [vmem:[%s4038 + $0x3e0] sm:$0xff]
  %v4164 = vld [vmem:[%s4038 + $0x3e8] sm:$0xff]
  %v4165 = vld [vmem:[%s4038 + $0x3f0] sm:$0xff]
  %v4166 = vld [vmem:[%s4038 + $0x3f8] sm:$0xff]
  %v4168 = vshrl.u32 %v4026, 16
  %v4170 = vshll.u32 %v4026, 16
  %v4172 = vrot.slane %v4170, 1
  %v4173 = vor.u32 %v4168, %v4172
  %v4175 = vshll.u32 %v4030, 16
  %v4177 = vrot.slane %v4175, 1
  %v4178 = vsel %vm611, %v4173, %v4177
  %v4180 = vshrl.u32 %v4027, 16
  %v4182 = vshll.u32 %v4027, 16
  %v4184 = vrot.slane %v4182, 1
  %v4185 = vor.u32 %v4180, %v4184
  %v4187 = vshll.u32 %v4031, 16
  %v4189 = vrot.slane %v4187, 1
  %v4190 = vsel %vm611, %v4185, %v4189
  %v4192 = vshrl.u32 %v4028, 16
  %v4194 = vshll.u32 %v4028, 16
  %v4196 = vrot.slane %v4194, 1
  %v4197 = vor.u32 %v4192, %v4196
  %v4199 = vshll.u32 %v4032, 16
  %v4201 = vrot.slane %v4199, 1
  %v4202 = vsel %vm611, %v4197, %v4201
  %v4204 = vshrl.u32 %v4029, 16
  %v4206 = vshll.u32 %v4029, 16
  %v4208 = vrot.slane %v4206, 1
  %v4209 = vor.u32 %v4204, %v4208
  %v4211 = vshll.u32 %v4033, 16
  %v4213 = vrot.slane %v4211, 1
  %v4214 = vsel %vm611, %v4209, %v4213
  %v4215 = vshrl.u32 %v4030, 16
  %v4217 = vor.u32 %v4215, %v4177
  %v4219 = vshll.u32 %v4034, 16
  %v4221 = vrot.slane %v4219, 1
  %v4222 = vsel %vm611, %v4217, %v4221
  %v4223 = vshrl.u32 %v4031, 16
  %v4225 = vor.u32 %v4223, %v4189
  %v4227 = vshll.u32 %v4035, 16
  %v4229 = vrot.slane %v4227, 1
  %v4230 = vsel %vm611, %v4225, %v4229
  %v4231 = vshrl.u32 %v4032, 16
  %v4233 = vor.u32 %v4231, %v4201
  %v4235 = vshll.u32 %v4036, 16
  %v4237 = vrot.slane %v4235, 1
  %v4238 = vsel %vm611, %v4233, %v4237
  %v4239 = vshrl.u32 %v4033, 16
  %v4241 = vor.u32 %v4239, %v4213
  %v4243 = vshll.u32 %v4037, 16
  %v4245 = vrot.slane %v4243, 1
  %v4246 = vsel %vm611, %v4241, %v4245
  %v4247 = vshrl.u32 %v4034, 16
  %v4249 = vor.u32 %v4247, %v4221
  %v4250 = vshrl.u32 %v4035, 16
  %v4252 = vor.u32 %v4250, %v4229
  %v4253 = vshrl.u32 %v4036, 16
  %v4255 = vor.u32 %v4253, %v4237
  %v4256 = vshrl.u32 %v4037, 16
  %v4258 = vor.u32 %v4256, %v4245
  %v4399 = vunpack.c.l.b16 %v4039
  %v4400 = vunpack.c.h.b16 %v4039
  %v4401 = vunpack.c.l.b16 %v4040
  %v4402 = vunpack.c.h.b16 %v4040
  %v4403 = vunpack.c.l.b16 %v4041
  %v4404 = vunpack.c.h.b16 %v4041
  %v4405 = vunpack.c.l.b16 %v4042
  %v4406 = vunpack.c.h.b16 %v4042
  %v4407 = vunpack.c.l.b16 %v4043
  %v4408 = vunpack.c.h.b16 %v4043
  %v4409 = vunpack.c.l.b16 %v4044
  %v4410 = vunpack.c.h.b16 %v4044
  %v4411 = vunpack.c.l.b16 %v4045
  %v4412 = vunpack.c.h.b16 %v4045
  %v4413 = vunpack.c.l.b16 %v4046
  %v4414 = vunpack.c.h.b16 %v4046
  %v4415 = vunpack.c.l.b16 %v4047
  %v4416 = vunpack.c.h.b16 %v4047
  %v4417 = vunpack.c.l.b16 %v4048
  %v4418 = vunpack.c.h.b16 %v4048
  %v4419 = vunpack.c.l.b16 %v4049
  %v4420 = vunpack.c.h.b16 %v4049
  %v4421 = vunpack.c.l.b16 %v4050
  %v4422 = vunpack.c.h.b16 %v4050
  %v4423 = vunpack.c.l.b16 %v4051
  %v4424 = vunpack.c.h.b16 %v4051
  %v4425 = vunpack.c.l.b16 %v4052
  %v4426 = vunpack.c.h.b16 %v4052
  %v4427 = vunpack.c.l.b16 %v4053
  %v4428 = vunpack.c.h.b16 %v4053
  %v4429 = vunpack.c.l.b16 %v4054
  %v4430 = vunpack.c.h.b16 %v4054
  %v4431 = vunpack.c.l.b16 %v4055
  %v4432 = vunpack.c.h.b16 %v4055
  %v4433 = vunpack.c.l.b16 %v4056
  %v4434 = vunpack.c.h.b16 %v4056
  %v4435 = vunpack.c.l.b16 %v4057
  %v4436 = vunpack.c.h.b16 %v4057
  %v4437 = vunpack.c.l.b16 %v4058
  %v4438 = vunpack.c.h.b16 %v4058
  %v4439 = vunpack.c.l.b16 %v4059
  %v4440 = vunpack.c.h.b16 %v4059
  %v4441 = vunpack.c.l.b16 %v4060
  %v4442 = vunpack.c.h.b16 %v4060
  %v4443 = vunpack.c.l.b16 %v4061
  %v4444 = vunpack.c.h.b16 %v4061
  %v4445 = vunpack.c.l.b16 %v4062
  %v4446 = vunpack.c.h.b16 %v4062
  %v4447 = vunpack.c.l.b16 %v4063
  %v4448 = vunpack.c.h.b16 %v4063
  %v4449 = vunpack.c.l.b16 %v4064
  %v4450 = vunpack.c.h.b16 %v4064
  %v4451 = vunpack.c.l.b16 %v4065
  %v4452 = vunpack.c.h.b16 %v4065
  %v4453 = vunpack.c.l.b16 %v4066
  %v4454 = vunpack.c.h.b16 %v4066
  %v4455 = vunpack.c.l.b16 %v4067
  %v4456 = vunpack.c.h.b16 %v4067
  %v4457 = vunpack.c.l.b16 %v4068
  %v4458 = vunpack.c.h.b16 %v4068
  %v4459 = vunpack.c.l.b16 %v4069
  %v4460 = vunpack.c.h.b16 %v4069
  %v4461 = vunpack.c.l.b16 %v4070
  %v4462 = vunpack.c.h.b16 %v4070
  %v4463 = vunpack.c.l.b16 %v4071
  %v4464 = vunpack.c.h.b16 %v4071
  %v4465 = vunpack.c.l.b16 %v4072
  %v4466 = vunpack.c.h.b16 %v4072
  %v4467 = vunpack.c.l.b16 %v4073
  %v4468 = vunpack.c.h.b16 %v4073
  %v4469 = vunpack.c.l.b16 %v4074
  %v4470 = vunpack.c.h.b16 %v4074
  %v4471 = vunpack.c.l.b16 %v4075
  %v4472 = vunpack.c.h.b16 %v4075
  %v4473 = vunpack.c.l.b16 %v4076
  %v4474 = vunpack.c.h.b16 %v4076
  %v4475 = vunpack.c.l.b16 %v4077
  %v4476 = vunpack.c.h.b16 %v4077
  %v4477 = vunpack.c.l.b16 %v4078
  %v4478 = vunpack.c.h.b16 %v4078
  %v4479 = vunpack.c.l.b16 %v4079
  %v4480 = vunpack.c.h.b16 %v4079
  %v4481 = vunpack.c.l.b16 %v4080
  %v4482 = vunpack.c.h.b16 %v4080
  %v4483 = vunpack.c.l.b16 %v4081
  %v4484 = vunpack.c.h.b16 %v4081
  %v4485 = vunpack.c.l.b16 %v4082
  %v4486 = vunpack.c.h.b16 %v4082
  %v4487 = vunpack.c.l.b16 %v4083
  %v4488 = vunpack.c.h.b16 %v4083
  %v4489 = vunpack.c.l.b16 %v4084
  %v4490 = vunpack.c.h.b16 %v4084
  %v4491 = vunpack.c.l.b16 %v4085
  %v4492 = vunpack.c.h.b16 %v4085
  %v4493 = vunpack.c.l.b16 %v4086
  %v4494 = vunpack.c.h.b16 %v4086
  %v4495 = vunpack.c.l.b16 %v4087
  %v4496 = vunpack.c.h.b16 %v4087
  %v4497 = vunpack.c.l.b16 %v4088
  %v4498 = vunpack.c.h.b16 %v4088
  %v4499 = vunpack.c.l.b16 %v4089
  %v4500 = vunpack.c.h.b16 %v4089
  %v4501 = vunpack.c.l.b16 %v4090
  %v4502 = vunpack.c.h.b16 %v4090
  %v4503 = vunpack.c.l.b16 %v4091
  %v4504 = vunpack.c.h.b16 %v4091
  %v4505 = vunpack.c.l.b16 %v4092
  %v4506 = vunpack.c.h.b16 %v4092
  %v4507 = vunpack.c.l.b16 %v4093
  %v4508 = vunpack.c.h.b16 %v4093
  %v4509 = vunpack.c.l.b16 %v4094
  %v4510 = vunpack.c.h.b16 %v4094
  %v4511 = vunpack.c.l.b16 %v4095
  %v4512 = vunpack.c.h.b16 %v4095
  %v4513 = vunpack.c.l.b16 %v4096
  %v4514 = vunpack.c.h.b16 %v4096
  %v4515 = vunpack.c.l.b16 %v4097
  %v4516 = vunpack.c.h.b16 %v4097
  %v4517 = vunpack.c.l.b16 %v4098
  %v4518 = vunpack.c.h.b16 %v4098
  %v4519 = vunpack.c.l.b16 %v4099
  %v4520 = vunpack.c.h.b16 %v4099
  %v4521 = vunpack.c.l.b16 %v4100
  %v4522 = vunpack.c.h.b16 %v4100
  %v4523 = vunpack.c.l.b16 %v4101
  %v4524 = vunpack.c.h.b16 %v4101
  %v4525 = vunpack.c.l.b16 %v4102
  %v4526 = vunpack.c.h.b16 %v4102
  %v4527 = vunpack.c.l.b16 %v4103
  %v4528 = vunpack.c.h.b16 %v4103
  %v4529 = vunpack.c.l.b16 %v4104
  %v4530 = vunpack.c.h.b16 %v4104
  %v4531 = vunpack.c.l.b16 %v4105
  %v4532 = vunpack.c.h.b16 %v4105
  %v4533 = vunpack.c.l.b16 %v4106
  %v4534 = vunpack.c.h.b16 %v4106
  %v4535 = vunpack.c.l.b16 %v4107
  %v4536 = vunpack.c.h.b16 %v4107
  %v4537 = vunpack.c.l.b16 %v4108
  %v4538 = vunpack.c.h.b16 %v4108
  %v4539 = vunpack.c.l.b16 %v4109
  %v4540 = vunpack.c.h.b16 %v4109
  %v4541 = vunpack.c.l.b16 %v4110
  %v4542 = vunpack.c.h.b16 %v4110
  %v4543 = vunpack.c.l.b16 %v4111
  %v4544 = vunpack.c.h.b16 %v4111
  %v4545 = vunpack.c.l.b16 %v4112
  %v4546 = vunpack.c.h.b16 %v4112
  %v4547 = vunpack.c.l.b16 %v4113
  %v4548 = vunpack.c.h.b16 %v4113
  %v4549 = vunpack.c.l.b16 %v4114
  %v4550 = vunpack.c.h.b16 %v4114
  %v4551 = vunpack.c.l.b16 %v4115
  %v4552 = vunpack.c.h.b16 %v4115
  %v4553 = vunpack.c.l.b16 %v4116
  %v4554 = vunpack.c.h.b16 %v4116
  %v4555 = vunpack.c.l.b16 %v4117
  %v4556 = vunpack.c.h.b16 %v4117
  %v4557 = vunpack.c.l.b16 %v4118
  %v4558 = vunpack.c.h.b16 %v4118
  %v4559 = vunpack.c.l.b16 %v4119
  %v4560 = vunpack.c.h.b16 %v4119
  %v4561 = vunpack.c.l.b16 %v4120
  %v4562 = vunpack.c.h.b16 %v4120
  %v4563 = vunpack.c.l.b16 %v4121
  %v4564 = vunpack.c.h.b16 %v4121
  %v4565 = vunpack.c.l.b16 %v4122
  %v4566 = vunpack.c.h.b16 %v4122
  %v4567 = vunpack.c.l.b16 %v4123
  %v4568 = vunpack.c.h.b16 %v4123
  %v4569 = vunpack.c.l.b16 %v4124
  %v4570 = vunpack.c.h.b16 %v4124
  %v4571 = vunpack.c.l.b16 %v4125
  %v4572 = vunpack.c.h.b16 %v4125
  %v4573 = vunpack.c.l.b16 %v4126
  %v4574 = vunpack.c.h.b16 %v4126
  %v4575 = vunpack.c.l.b16 %v4127
  %v4576 = vunpack.c.h.b16 %v4127
  %v4577 = vunpack.c.l.b16 %v4128
  %v4578 = vunpack.c.h.b16 %v4128
  %v4579 = vunpack.c.l.b16 %v4129
  %v4580 = vunpack.c.h.b16 %v4129
  %v4581 = vunpack.c.l.b16 %v4130
  %v4582 = vunpack.c.h.b16 %v4130
  %v4583 = vunpack.c.l.b16 %v4131
  %v4584 = vunpack.c.h.b16 %v4131
  %v4585 = vunpack.c.l.b16 %v4132
  %v4586 = vunpack.c.h.b16 %v4132
  %v4587 = vunpack.c.l.b16 %v4133
  %v4588 = vunpack.c.h.b16 %v4133
  %v4589 = vunpack.c.l.b16 %v4134
  %v4590 = vunpack.c.h.b16 %v4134
  %v4591 = vunpack.c.l.b16 %v4135
  %v4592 = vunpack.c.h.b16 %v4135
  %v4593 = vunpack.c.l.b16 %v4136
  %v4594 = vunpack.c.h.b16 %v4136
  %v4595 = vunpack.c.l.b16 %v4137
  %v4596 = vunpack.c.h.b16 %v4137
  %v4597 = vunpack.c.l.b16 %v4138
  %v4598 = vunpack.c.h.b16 %v4138
  %v4599 = vunpack.c.l.b16 %v4139
  %v4600 = vunpack.c.h.b16 %v4139
  %v4601 = vunpack.c.l.b16 %v4140
  %v4602 = vunpack.c.h.b16 %v4140
  %v4603 = vunpack.c.l.b16 %v4141
  %v4604 = vunpack.c.h.b16 %v4141
  %v4605 = vunpack.c.l.b16 %v4142
  %v4606 = vunpack.c.h.b16 %v4142
  %v4607 = vunpack.c.l.b16 %v4143
  %v4608 = vunpack.c.h.b16 %v4143
  %v4609 = vunpack.c.l.b16 %v4144
  %v4610 = vunpack.c.h.b16 %v4144
  %v4611 = vunpack.c.l.b16 %v4145
  %v4612 = vunpack.c.h.b16 %v4145
  %v4613 = vunpack.c.l.b16 %v4146
  %v4614 = vunpack.c.h.b16 %v4146
  %v4615 = vunpack.c.l.b16 %v4147
  %v4616 = vunpack.c.h.b16 %v4147
  %v4617 = vunpack.c.l.b16 %v4148
  %v4618 = vunpack.c.h.b16 %v4148
  %v4619 = vunpack.c.l.b16 %v4149
  %v4620 = vunpack.c.h.b16 %v4149
  %v4621 = vunpack.c.l.b16 %v4150
  %v4622 = vunpack.c.h.b16 %v4150
  %v4623 = vunpack.c.l.b16 %v4151
  %v4624 = vunpack.c.h.b16 %v4151
  %v4625 = vunpack.c.l.b16 %v4152
  %v4626 = vunpack.c.h.b16 %v4152
  %v4627 = vunpack.c.l.b16 %v4153
  %v4628 = vunpack.c.h.b16 %v4153
  %v4629 = vunpack.c.l.b16 %v4154
  %v4630 = vunpack.c.h.b16 %v4154
  %v4631 = vunpack.c.l.b16 %v4155
  %v4632 = vunpack.c.h.b16 %v4155
  %v4633 = vunpack.c.l.b16 %v4156
  %v4634 = vunpack.c.h.b16 %v4156
  %v4635 = vunpack.c.l.b16 %v4157
  %v4636 = vunpack.c.h.b16 %v4157
  %v4637 = vunpack.c.l.b16 %v4158
  %v4638 = vunpack.c.h.b16 %v4158
  %v4639 = vunpack.c.l.b16 %v4159
  %v4640 = vunpack.c.h.b16 %v4159
  %v4641 = vunpack.c.l.b16 %v4160
  %v4642 = vunpack.c.h.b16 %v4160
  %v4643 = vunpack.c.l.b16 %v4161
  %v4644 = vunpack.c.h.b16 %v4161
  %v4645 = vunpack.c.l.b16 %v4162
  %v4646 = vunpack.c.h.b16 %v4162
  %v4647 = vunpack.c.l.b16 %v4163
  %v4648 = vunpack.c.h.b16 %v4163
  %v4649 = vunpack.c.l.b16 %v4164
  %v4650 = vunpack.c.h.b16 %v4164
  %v4651 = vunpack.c.l.b16 %v4165
  %v4652 = vunpack.c.h.b16 %v4165
  %v4653 = vunpack.c.l.b16 %v4166
  %v4654 = vunpack.c.h.b16 %v4166
  %v4655 = vpack.c.b16 %v4403, %v4399
  %v4656 = vpack.c.b16 %v4404, %v4400
  %v4657 = vpack.c.b16 %v4405, %v4401
  %v4658 = vpack.c.b16 %v4406, %v4402
  %v4659 = vpack.c.b16 %v4411, %v4407
  %v4660 = vpack.c.b16 %v4412, %v4408
  %v4661 = vpack.c.b16 %v4413, %v4409
  %v4662 = vpack.c.b16 %v4414, %v4410
  %v4663 = vpack.c.b16 %v4419, %v4415
  %v4664 = vpack.c.b16 %v4420, %v4416
  %v4665 = vpack.c.b16 %v4421, %v4417
  %v4666 = vpack.c.b16 %v4422, %v4418
  %v4667 = vpack.c.b16 %v4427, %v4423
  %v4668 = vpack.c.b16 %v4428, %v4424
  %v4669 = vpack.c.b16 %v4429, %v4425
  %v4670 = vpack.c.b16 %v4430, %v4426
  %v4671 = vpack.c.b16 %v4435, %v4431
  %v4672 = vpack.c.b16 %v4436, %v4432
  %v4673 = vpack.c.b16 %v4437, %v4433
  %v4674 = vpack.c.b16 %v4438, %v4434
  %v4675 = vpack.c.b16 %v4443, %v4439
  %v4676 = vpack.c.b16 %v4444, %v4440
  %v4677 = vpack.c.b16 %v4445, %v4441
  %v4678 = vpack.c.b16 %v4446, %v4442
  %v4679 = vpack.c.b16 %v4451, %v4447
  %v4680 = vpack.c.b16 %v4452, %v4448
  %v4681 = vpack.c.b16 %v4453, %v4449
  %v4682 = vpack.c.b16 %v4454, %v4450
  %v4683 = vpack.c.b16 %v4459, %v4455
  %v4684 = vpack.c.b16 %v4460, %v4456
  %v4685 = vpack.c.b16 %v4461, %v4457
  %v4686 = vpack.c.b16 %v4462, %v4458
  %v4687 = vpack.c.b16 %v4467, %v4463
  %v4688 = vpack.c.b16 %v4468, %v4464
  %v4689 = vpack.c.b16 %v4469, %v4465
  %v4690 = vpack.c.b16 %v4470, %v4466
  %v4691 = vpack.c.b16 %v4475, %v4471
  %v4692 = vpack.c.b16 %v4476, %v4472
  %v4693 = vpack.c.b16 %v4477, %v4473
  %v4694 = vpack.c.b16 %v4478, %v4474
  %v4695 = vpack.c.b16 %v4483, %v4479
  %v4696 = vpack.c.b16 %v4484, %v4480
  %v4697 = vpack.c.b16 %v4485, %v4481
  %v4698 = vpack.c.b16 %v4486, %v4482
  %v4699 = vpack.c.b16 %v4491, %v4487
  %v4700 = vpack.c.b16 %v4492, %v4488
  %v4701 = vpack.c.b16 %v4493, %v4489
  %v4702 = vpack.c.b16 %v4494, %v4490
  %v4703 = vpack.c.b16 %v4499, %v4495
  %v4704 = vpack.c.b16 %v4500, %v4496
  %v4705 = vpack.c.b16 %v4501, %v4497
  %v4706 = vpack.c.b16 %v4502, %v4498
  %v4707 = vpack.c.b16 %v4507, %v4503
  %v4708 = vpack.c.b16 %v4508, %v4504
  %v4709 = vpack.c.b16 %v4509, %v4505
  %v4710 = vpack.c.b16 %v4510, %v4506
  %v4711 = vpack.c.b16 %v4515, %v4511
  %v4712 = vpack.c.b16 %v4516, %v4512
  %v4713 = vpack.c.b16 %v4517, %v4513
  %v4714 = vpack.c.b16 %v4518, %v4514
  %v4715 = vpack.c.b16 %v4523, %v4519
  %v4716 = vpack.c.b16 %v4524, %v4520
  %v4717 = vpack.c.b16 %v4525, %v4521
  %v4718 = vpack.c.b16 %v4526, %v4522
  %v4719 = vpack.c.b16 %v4531, %v4527
  %v4720 = vpack.c.b16 %v4532, %v4528
  %v4721 = vpack.c.b16 %v4533, %v4529
  %v4722 = vpack.c.b16 %v4534, %v4530
  %v4723 = vpack.c.b16 %v4539, %v4535
  %v4724 = vpack.c.b16 %v4540, %v4536
  %v4725 = vpack.c.b16 %v4541, %v4537
  %v4726 = vpack.c.b16 %v4542, %v4538
  %v4727 = vpack.c.b16 %v4547, %v4543
  %v4728 = vpack.c.b16 %v4548, %v4544
  %v4729 = vpack.c.b16 %v4549, %v4545
  %v4730 = vpack.c.b16 %v4550, %v4546
  %v4731 = vpack.c.b16 %v4555, %v4551
  %v4732 = vpack.c.b16 %v4556, %v4552
  %v4733 = vpack.c.b16 %v4557, %v4553
  %v4734 = vpack.c.b16 %v4558, %v4554
  %v4735 = vpack.c.b16 %v4563, %v4559
  %v4736 = vpack.c.b16 %v4564, %v4560
  %v4737 = vpack.c.b16 %v4565, %v4561
  %v4738 = vpack.c.b16 %v4566, %v4562
  %v4739 = vpack.c.b16 %v4571, %v4567
  %v4740 = vpack.c.b16 %v4572, %v4568
  %v4741 = vpack.c.b16 %v4573, %v4569
  %v4742 = vpack.c.b16 %v4574, %v4570
  %v4743 = vpack.c.b16 %v4579, %v4575
  %v4744 = vpack.c.b16 %v4580, %v4576
  %v4745 = vpack.c.b16 %v4581, %v4577
  %v4746 = vpack.c.b16 %v4582, %v4578
  %v4747 = vpack.c.b16 %v4587, %v4583
  %v4748 = vpack.c.b16 %v4588, %v4584
  %v4749 = vpack.c.b16 %v4589, %v4585
  %v4750 = vpack.c.b16 %v4590, %v4586
  %v4751 = vpack.c.b16 %v4595, %v4591
  %v4752 = vpack.c.b16 %v4596, %v4592
  %v4753 = vpack.c.b16 %v4597, %v4593
  %v4754 = vpack.c.b16 %v4598, %v4594
  %v4755 = vpack.c.b16 %v4603, %v4599
  %v4756 = vpack.c.b16 %v4604, %v4600
  %v4757 = vpack.c.b16 %v4605, %v4601
  %v4758 = vpack.c.b16 %v4606, %v4602
  %v4759 = vpack.c.b16 %v4611, %v4607
  %v4760 = vpack.c.b16 %v4612, %v4608
  %v4761 = vpack.c.b16 %v4613, %v4609
  %v4762 = vpack.c.b16 %v4614, %v4610
  %v4763 = vpack.c.b16 %v4619, %v4615
  %v4764 = vpack.c.b16 %v4620, %v4616
  %v4765 = vpack.c.b16 %v4621, %v4617
  %v4766 = vpack.c.b16 %v4622, %v4618
  %v4767 = vpack.c.b16 %v4627, %v4623
  %v4768 = vpack.c.b16 %v4628, %v4624
  %v4769 = vpack.c.b16 %v4629, %v4625
  %v4770 = vpack.c.b16 %v4630, %v4626
  %v4771 = vpack.c.b16 %v4635, %v4631
  %v4772 = vpack.c.b16 %v4636, %v4632
  %v4773 = vpack.c.b16 %v4637, %v4633
  %v4774 = vpack.c.b16 %v4638, %v4634
  %v4775 = vpack.c.b16 %v4643, %v4639
  %v4776 = vpack.c.b16 %v4644, %v4640
  %v4777 = vpack.c.b16 %v4645, %v4641
  %v4778 = vpack.c.b16 %v4646, %v4642
  %v4779 = vpack.c.b16 %v4651, %v4647
  %v4780 = vpack.c.b16 %v4652, %v4648
  %v4781 = vpack.c.b16 %v4653, %v4649
  %v4782 = vpack.c.b16 %v4654, %v4650
  %4911 = vmatprep.subr.bf16.mxu0 %v4656
  %4912 = vmatpush1.bf16.msra.mxu0 %v4655
  %4913 = vmatprep.subr.bf16.mxu0 %v4660
  %4914 = vmatpush1.bf16.msra.mxu0 %v4659
  %4915 = vmatprep.subr.bf16.mxu0 %v4664
  %4916 = vmatpush1.bf16.msra.mxu0 %v4663
  %4917 = vmatprep.subr.bf16.mxu0 %v4668
  %4918 = vmatpush1.bf16.msra.mxu0 %v4667
  %4919 = vmatprep.subr.bf16.mxu0 %v4672
  %4920 = vmatpush1.bf16.msra.mxu0 %v4671
  %4921 = vmatprep.subr.bf16.mxu0 %v4676
  %4922 = vmatpush1.bf16.msra.mxu0 %v4675
  %4923 = vmatprep.subr.bf16.mxu0 %v4680
  %4924 = vmatpush1.bf16.msra.mxu0 %v4679
  %4925 = vmatprep.subr.bf16.mxu0 %v4684
  %4926 = vmatpush1.bf16.msra.mxu0 %v4683
  %4927 = vmatprep.subr.bf16.mxu0 %v4688
  %4928 = vmatpush1.bf16.msra.mxu0 %v4687
  %4929 = vmatprep.subr.bf16.mxu0 %v4692
  %4930 = vmatpush1.bf16.msra.mxu0 %v4691
  %4931 = vmatprep.subr.bf16.mxu0 %v4696
  %4932 = vmatpush1.bf16.msra.mxu0 %v4695
  %4933 = vmatprep.subr.bf16.mxu0 %v4700
  %4934 = vmatpush1.bf16.msra.mxu0 %v4699
  %4935 = vmatprep.subr.bf16.mxu0 %v4704
  %4936 = vmatpush1.bf16.msra.mxu0 %v4703
  %4937 = vmatprep.subr.bf16.mxu0 %v4708
  %4938 = vmatpush1.bf16.msra.mxu0 %v4707
  %4939 = vmatprep.subr.bf16.mxu0 %v4712
  %4940 = vmatpush1.bf16.msra.mxu0 %v4711
  %4941 = vmatprep.subr.bf16.mxu0 %v4716
  %4942 = vmatpush1.bf16.msra.mxu0 %v4715
  %4943 = vmatprep.mubr.bf16.mxu0 %v4190
  %4944 = vmatmul.mubr.bf16.gmra.mrb[0].mxu0 %v4178
  %v4945 = vpop.f32.mrb[0].mxu0
  %v4946 = vadd.f32 0.0, %v4945
  %v4947 = vpop.f32.mrb[0].mxu0
  %v4948 = vadd.f32 0.0, %v4947
  %v4949 = vpop.f32.mrb[0].mxu0
  %v4950 = vadd.f32 0.0, %v4949
  %v4951 = vpop.f32.mrb[0].mxu0
  %v4952 = vadd.f32 0.0, %v4951
  %4953 = vmatprep.mubr.bf16.mxu0 %v4230
  %4954 = vmatmul.mubr.bf16.gmra.mrb[0].mxu0 %v4222
  %v4955 = vpop.f32.mrb[0].mxu0
  %v4956 = vpop.f32.mrb[0].mxu0
  %v4957 = vpop.f32.mrb[0].mxu0
  %v4958 = vadd.f32 0.0, %v4957
  %v4959 = vpop.f32.mrb[0].mxu0
  %v4960 = vadd.f32 0.0, %v4959
  %4961 = vmatprep.mubr.bf16.mxu0 %v4252
  %4962 = vmatmul.mubr.bf16.gmra.mrb[0].mxu0 %v4249
  %v4963 = vpop.f32.mrb[0].mxu0
  %v4964 = vadd.f32 0.0, %v4963
  %v4965 = vpop.f32.mrb[0].mxu0
  %v4966 = vadd.f32 0.0, %v4965
  %v4967 = vpop.f32.mrb[0].mxu0
  %v4968 = vpop.f32.mrb[0].mxu0
  %4969 = vdwg.mxu0
  %4970 = vmatprep.subr.bf16.mxu0 %v4720
  %4971 = vmatpush1.bf16.msra.mxu0 %v4719
  %4972 = vmatprep.subr.bf16.mxu0 %v4724
  %4973 = vmatpush1.bf16.msra.mxu0 %v4723
  %4974 = vmatprep.subr.bf16.mxu0 %v4728
  %4975 = vmatpush1.bf16.msra.mxu0 %v4727
  %4976 = vmatprep.subr.bf16.mxu0 %v4732
  %4977 = vmatpush1.bf16.msra.mxu0 %v4731
  %4978 = vmatprep.subr.bf16.mxu0 %v4736
  %4979 = vmatpush1.bf16.msra.mxu0 %v4735
  %4980 = vmatprep.subr.bf16.mxu0 %v4740
  %4981 = vmatpush1.bf16.msra.mxu0 %v4739
  %4982 = vmatprep.subr.bf16.mxu0 %v4744
  %4983 = vmatpush1.bf16.msra.mxu0 %v4743
  %4984 = vmatprep.subr.bf16.mxu0 %v4748
  %4985 = vmatpush1.bf16.msra.mxu0 %v4747
  %4986 = vmatprep.subr.bf16.mxu0 %v4752
  %4987 = vmatpush1.bf16.msra.mxu0 %v4751
  %4988 = vmatprep.subr.bf16.mxu0 %v4756
  %4989 = vmatpush1.bf16.msra.mxu0 %v4755
  %4990 = vmatprep.subr.bf16.mxu0 %v4760
  %4991 = vmatpush1.bf16.msra.mxu0 %v4759
  %4992 = vmatprep.subr.bf16.mxu0 %v4764
  %4993 = vmatpush1.bf16.msra.mxu0 %v4763
  %4994 = vmatprep.subr.bf16.mxu0 %v4768
  %4995 = vmatpush1.bf16.msra.mxu0 %v4767
  %4996 = vmatprep.subr.bf16.mxu0 %v4772
  %4997 = vmatpush1.bf16.msra.mxu0 %v4771
  %4998 = vmatprep.subr.bf16.mxu0 %v4776
  %4999 = vmatpush1.bf16.msra.mxu0 %v4775
  %5000 = vmatprep.subr.bf16.mxu0 %v4780
  %5001 = vmatpush1.bf16.msra.mxu0 %v4779
  %5002 = vmatprep.mubr.bf16.mxu0 %v4214
  %5003 = vmatmul.mubr.bf16.gmra.mrb[0].mxu0 %v4202
  %v5004 = vpop.f32.mrb[0].mxu0
  %v5005 = vadd.f32 %v4946, %v5004
  %v5006 = vpop.f32.mrb[0].mxu0
  %v5007 = vadd.f32 %v4948, %v5006
  %v5008 = vpop.f32.mrb[0].mxu0
  %v5009 = vadd.f32 %v4950, %v5008
  %v5010 = vpop.f32.mrb[0].mxu0
  %v5011 = vadd.f32 %v4952, %v5010
  %5012 = vmatprep.mubr.bf16.mxu0 %v4246
  %5013 = vmatmul.mubr.bf16.gmra.mrb[0].mxu0 %v4238
  %v5014 = vpop.f32.mrb[0].mxu0
  %v5015 = vpop.f32.mrb[0].mxu0
  %v5016 = vpop.f32.mrb[0].mxu0
  %v5017 = vadd.f32 %v4958, %v5016
  %v5018 = vpop.f32.mrb[0].mxu0
  %v5019 = vadd.f32 %v4960, %v5018
  %5020 = vmatprep.mubr.bf16.mxu0 %v4258
  %5021 = vmatmul.mubr.bf16.gmra.mrb[0].mxu0 %v4255
  %v5022 = vpop.f32.mrb[0].mxu0
  %v5023 = vadd.f32 %v4964, %v5022
  %v5024 = vpop.f32.mrb[0].mxu0
  %v5025 = vadd.f32 %v4966, %v5024
  %v5026 = vpop.f32.mrb[0].mxu0
  %v5027 = vpop.f32.mrb[0].mxu0
  %5028 = vdwg.mxu0
  %5029 = vmatprep.subr.bf16.mxu0 %v4658
  %5030 = vmatpush1.bf16.msra.mxu0 %v4657
  %5031 = vmatprep.subr.bf16.mxu0 %v4662
  %5032 = vmatpush1.bf16.msra.mxu0 %v4661
  %5033 = vmatprep.subr.bf16.mxu0 %v4666
  %5034 = vmatpush1.bf16.msra.mxu0 %v4665
  %5035 = vmatprep.subr.bf16.mxu0 %v4670
  %5036 = vmatpush1.bf16.msra.mxu0 %v4669
  %5037 = vmatprep.subr.bf16.mxu0 %v4674
  %5038 = vmatpush1.bf16.msra.mxu0 %v4673
  %5039 = vmatprep.subr.bf16.mxu0 %v4678
  %5040 = vmatpush1.bf16.msra.mxu0 %v4677
  %5041 = vmatprep.subr.bf16.mxu0 %v4682
  %5042 = vmatpush1.bf16.msra.mxu0 %v4681
  %5043 = vmatprep.subr.bf16.mxu0 %v4686
  %5044 = vmatpush1.bf16.msra.mxu0 %v4685
  %5045 = vmatprep.subr.bf16.mxu0 %v4690
  %5046 = vmatpush1.bf16.msra.mxu0 %v4689
  %5047 = vmatprep.subr.bf16.mxu0 %v4694
  %5048 = vmatpush1.bf16.msra.mxu0 %v4693
  %5049 = vmatprep.subr.bf16.mxu0 %v4698
  %5050 = vmatpush1.bf16.msra.mxu0 %v4697
  %5051 = vmatprep.subr.bf16.mxu0 %v4702
  %5052 = vmatpush1.bf16.msra.mxu0 %v4701
  %5053 = vmatprep.subr.bf16.mxu0 %v4706
  %5054 = vmatpush1.bf16.msra.mxu0 %v4705
  %5055 = vmatprep.subr.bf16.mxu0 %v4710
  %5056 = vmatpush1.bf16.msra.mxu0 %v4709
  %5057 = vmatprep.subr.bf16.mxu0 %v4714
  %5058 = vmatpush1.bf16.msra.mxu0 %v4713
  %5059 = vmatprep.subr.bf16.mxu0 %v4718
  %5060 = vmatpush1.bf16.msra.mxu0 %v4717
  %5061 = vmatprep.mubr.bf16.mxu0 %v4190
  %5062 = vmatmul.mubr.bf16.gmra.mrb[0].mxu0 %v4178
  %v5063 = vpop.f32.mrb[0].mxu0
  %v5064 = vadd.f32 0.0, %v5063
  %v5065 = vpop.f32.mrb[0].mxu0
  %v5066 = vadd.f32 0.0, %v5065
  %v5067 = vpop.f32.mrb[0].mxu0
  %v5068 = vadd.f32 0.0, %v5067
  %v5069 = vpop.f32.mrb[0].mxu0
  %v5070 = vadd.f32 0.0, %v5069
  %5071 = vmatprep.mubr.bf16.mxu0 %v4230
  %5072 = vmatmul.mubr.bf16.gmra.mrb[0].mxu0 %v4222
  %v5073 = vpop.f32.mrb[0].mxu0
  %v5074 = vpop.f32.mrb[0].mxu0
  %v5075 = vpop.f32.mrb[0].mxu0
  %v5076 = vadd.f32 0.0, %v5075
  %v5077 = vpop.f32.mrb[0].mxu0
  %v5078 = vadd.f32 0.0, %v5077
  %5079 = vmatprep.mubr.bf16.mxu0 %v4252
  %5080 = vmatmul.mubr.bf16.gmra.mrb[0].mxu0 %v4249
  %v5081 = vpop.f32.mrb[0].mxu0
  %v5082 = vadd.f32 0.0, %v5081
  %v5083 = vpop.f32.mrb[0].mxu0
  %v5084 = vadd.f32 0.0, %v5083
  %v5085 = vpop.f32.mrb[0].mxu0
  %v5086 = vpop.f32.mrb[0].mxu0
  %5087 = vdwg.mxu0
  %5088 = vmatprep.subr.bf16.mxu0 %v4722
  %5089 = vmatpush1.bf16.msra.mxu0 %v4721
  %5090 = vmatprep.subr.bf16.mxu0 %v4726
  %5091 = vmatpush1.bf16.msra.mxu0 %v4725
  %5092 = vmatprep.subr.bf16.mxu0 %v4730
  %5093 = vmatpush1.bf16.msra.mxu0 %v4729
  %5094 = vmatprep.subr.bf16.mxu0 %v4734
  %5095 = vmatpush1.bf16.msra.mxu0 %v4733
  %5096 = vmatprep.subr.bf16.mxu0 %v4738
  %5097 = vmatpush1.bf16.msra.mxu0 %v4737
  %5098 = vmatprep.subr.bf16.mxu0 %v4742
  %5099 = vmatpush1.bf16.msra.mxu0 %v4741
  %5100 = vmatprep.subr.bf16.mxu0 %v4746
  %5101 = vmatpush1.bf16.msra.mxu0 %v4745
  %5102 = vmatprep.subr.bf16.mxu0 %v4750
  %5103 = vmatpush1.bf16.msra.mxu0 %v4749
  %5104 = vmatprep.subr.bf16.mxu0 %v4754
  %5105 = vmatpush1.bf16.msra.mxu0 %v4753
  %5106 = vmatprep.subr.bf16.mxu0 %v4758
  %5107 = vmatpush1.bf16.msra.mxu0 %v4757
  %5108 = vmatprep.subr.bf16.mxu0 %v4762
  %5109 = vmatpush1.bf16.msra.mxu0 %v4761
  %5110 = vmatprep.subr.bf16.mxu0 %v4766
  %5111 = vmatpush1.bf16.msra.mxu0 %v4765
  %5112 = vmatprep.subr.bf16.mxu0 %v4770
  %5113 = vmatpush1.bf16.msra.mxu0 %v4769
  %5114 = vmatprep.subr.bf16.mxu0 %v4774
  %5115 = vmatpush1.bf16.msra.mxu0 %v4773
  %5116 = vmatprep.subr.bf16.mxu0 %v4778
  %5117 = vmatpush1.bf16.msra.mxu0 %v4777
  %5118 = vmatprep.subr.bf16.mxu0 %v4782
  %5119 = vmatpush1.bf16.msra.mxu0 %v4781
  %5120 = vmatprep.mubr.bf16.mxu0 %v4214
  %5121 = vmatmul.mubr.bf16.gmra.mrb[0].mxu0 %v4202
  %v5122 = vpop.f32.mrb[0].mxu0
  %v5123 = vadd.f32 %v5064, %v5122
  %v5124 = vpop.f32.mrb[0].mxu0
  %v5125 = vadd.f32 %v5066, %v5124
  %v5126 = vpop.f32.mrb[0].mxu0
  %v5127 = vadd.f32 %v5068, %v5126
  %v5128 = vpop.f32.mrb[0].mxu0
  %v5129 = vadd.f32 %v5070, %v5128
  %5130 = vmatprep.mubr.bf16.mxu0 %v4246
  %5131 = vmatmul.mubr.bf16.gmra.mrb[0].mxu0 %v4238
  %v5132 = vpop.f32.mrb[0].mxu0
  %v5133 = vpop.f32.mrb[0].mxu0
  %v5134 = vpop.f32.mrb[0].mxu0
  %v5135 = vadd.f32 %v5076, %v5134
  %v5136 = vpop.f32.mrb[0].mxu0
  %v5137 = vadd.f32 %v5078, %v5136
  %5138 = vmatprep.mubr.bf16.mxu0 %v4258
  %5139 = vmatmul.mubr.bf16.gmra.mrb[0].mxu0 %v4255
  %v5140 = vpop.f32.mrb[0].mxu0
  %v5141 = vadd.f32 %v5082, %v5140
  %v5142 = vpop.f32.mrb[0].mxu0
  %v5143 = vadd.f32 %v5084, %v5142
  %v5144 = vpop.f32.mrb[0].mxu0
  %v5145 = vpop.f32.mrb[0].mxu0
  %5146 = vdwg.mxu0
  %v5275 = vunpack.c.l.b16 %v3874
  %v5276 = vunpack.c.h.b16 %v3874
  %v5277 = vunpack.c.l.b16 %v3875
  %v5278 = vunpack.c.h.b16 %v3875
  %v5279 = vunpack.c.l.b16 %v3876
  %v5280 = vunpack.c.h.b16 %v3876
  %v5281 = vunpack.c.l.b16 %v3877
  %v5282 = vunpack.c.h.b16 %v3877
  %v5283 = vunpack.c.l.b16 %v3878
  %v5284 = vunpack.c.h.b16 %v3878
  %v5285 = vunpack.c.l.b16 %v3879
  %v5286 = vunpack.c.h.b16 %v3879
  %v5287 = vunpack.c.l.b16 %v3880
  %v5288 = vunpack.c.h.b16 %v3880
  %v5289 = vunpack.c.l.b16 %v3881
  %v5290 = vunpack.c.h.b16 %v3881
  %v5291 = vunpack.c.l.b16 %v3882
  %v5292 = vunpack.c.h.b16 %v3882
  %v5293 = vunpack.c.l.b16 %v3883
  %v5294 = vunpack.c.h.b16 %v3883
  %v5295 = vunpack.c.l.b16 %v3884
  %v5296 = vunpack.c.h.b16 %v3884
  %v5297 = vunpack.c.l.b16 %v3885
  %v5298 = vunpack.c.h.b16 %v3885
  %v5299 = vunpack.c.l.b16 %v3886
  %v5300 = vunpack.c.h.b16 %v3886
  %v5301 = vunpack.c.l.b16 %v3887
  %v5302 = vunpack.c.h.b16 %v3887
  %v5303 = vunpack.c.l.b16 %v3888
  %v5304 = vunpack.c.h.b16 %v3888
  %v5305 = vunpack.c.l.b16 %v3889
  %v5306 = vunpack.c.h.b16 %v3889
  %v5307 = vunpack.c.l.b16 %v3890
  %v5308 = vunpack.c.h.b16 %v3890
  %v5309 = vunpack.c.l.b16 %v3891
  %v5310 = vunpack.c.h.b16 %v3891
  %v5311 = vunpack.c.l.b16 %v3892
  %v5312 = vunpack.c.h.b16 %v3892
  %v5313 = vunpack.c.l.b16 %v3893
  %v5314 = vunpack.c.h.b16 %v3893
  %v5315 = vunpack.c.l.b16 %v3894
  %v5316 = vunpack.c.h.b16 %v3894
  %v5317 = vunpack.c.l.b16 %v3895
  %v5318 = vunpack.c.h.b16 %v3895
  %v5319 = vunpack.c.l.b16 %v3896
  %v5320 = vunpack.c.h.b16 %v3896
  %v5321 = vunpack.c.l.b16 %v3897
  %v5322 = vunpack.c.h.b16 %v3897
  %v5323 = vunpack.c.l.b16 %v3898
  %v5324 = vunpack.c.h.b16 %v3898
  %v5325 = vunpack.c.l.b16 %v3899
  %v5326 = vunpack.c.h.b16 %v3899
  %v5327 = vunpack.c.l.b16 %v3900
  %v5328 = vunpack.c.h.b16 %v3900
  %v5329 = vunpack.c.l.b16 %v3901
  %v5330 = vunpack.c.h.b16 %v3901
  %v5331 = vunpack.c.l.b16 %v3902
  %v5332 = vunpack.c.h.b16 %v3902
  %v5333 = vunpack.c.l.b16 %v3903
  %v5334 = vunpack.c.h.b16 %v3903
  %v5335 = vunpack.c.l.b16 %v3904
  %v5336 = vunpack.c.h.b16 %v3904
  %v5337 = vunpack.c.l.b16 %v3905
  %v5338 = vunpack.c.h.b16 %v3905
  %v5339 = vunpack.c.l.b16 %v3906
  %v5340 = vunpack.c.h.b16 %v3906
  %v5341 = vunpack.c.l.b16 %v3907
  %v5342 = vunpack.c.h.b16 %v3907
  %v5343 = vunpack.c.l.b16 %v3908
  %v5344 = vunpack.c.h.b16 %v3908
  %v5345 = vunpack.c.l.b16 %v3909
  %v5346 = vunpack.c.h.b16 %v3909
  %v5347 = vunpack.c.l.b16 %v3910
  %v5348 = vunpack.c.h.b16 %v3910
  %v5349 = vunpack.c.l.b16 %v3911
  %v5350 = vunpack.c.h.b16 %v3911
  %v5351 = vunpack.c.l.b16 %v3912
  %v5352 = vunpack.c.h.b16 %v3912
  %v5353 = vunpack.c.l.b16 %v3913
  %v5354 = vunpack.c.h.b16 %v3913
  %v5355 = vunpack.c.l.b16 %v3914
  %v5356 = vunpack.c.h.b16 %v3914
  %v5357 = vunpack.c.l.b16 %v3915
  %v5358 = vunpack.c.h.b16 %v3915
  %v5359 = vunpack.c.l.b16 %v3916
  %v5360 = vunpack.c.h.b16 %v3916
  %v5361 = vunpack.c.l.b16 %v3917
  %v5362 = vunpack.c.h.b16 %v3917
  %v5363 = vunpack.c.l.b16 %v3918
  %v5364 = vunpack.c.h.b16 %v3918
  %v5365 = vunpack.c.l.b16 %v3919
  %v5366 = vunpack.c.h.b16 %v3919
  %v5367 = vunpack.c.l.b16 %v3920
  %v5368 = vunpack.c.h.b16 %v3920
  %v5369 = vunpack.c.l.b16 %v3921
  %v5370 = vunpack.c.h.b16 %v3921
  %v5371 = vunpack.c.l.b16 %v3922
  %v5372 = vunpack.c.h.b16 %v3922
  %v5373 = vunpack.c.l.b16 %v3923
  %v5374 = vunpack.c.h.b16 %v3923
  %v5375 = vunpack.c.l.b16 %v3924
  %v5376 = vunpack.c.h.b16 %v3924
  %v5377 = vunpack.c.l.b16 %v3925
  %v5378 = vunpack.c.h.b16 %v3925
  %v5379 = vunpack.c.l.b16 %v3926
  %v5380 = vunpack.c.h.b16 %v3926
  %v5381 = vunpack.c.l.b16 %v3927
  %v5382 = vunpack.c.h.b16 %v3927
  %v5383 = vunpack.c.l.b16 %v3928
  %v5384 = vunpack.c.h.b16 %v3928
  %v5385 = vunpack.c.l.b16 %v3929
  %v5386 = vunpack.c.h.b16 %v3929
  %v5387 = vunpack.c.l.b16 %v3930
  %v5388 = vunpack.c.h.b16 %v3930
  %v5389 = vunpack.c.l.b16 %v3931
  %v5390 = vunpack.c.h.b16 %v3931
  %v5391 = vunpack.c.l.b16 %v3932
  %v5392 = vunpack.c.h.b16 %v3932
  %v5393 = vunpack.c.l.b16 %v3933
  %v5394 = vunpack.c.h.b16 %v3933
  %v5395 = vunpack.c.l.b16 %v3934
  %v5396 = vunpack.c.h.b16 %v3934
  %v5397 = vunpack.c.l.b16 %v3935
  %v5398 = vunpack.c.h.b16 %v3935
  %v5399 = vunpack.c.l.b16 %v3936
  %v5400 = vunpack.c.h.b16 %v3936
  %v5401 = vunpack.c.l.b16 %v3937
  %v5402 = vunpack.c.h.b16 %v3937
  %v5403 = vunpack.c.l.b16 %v3938
  %v5404 = vunpack.c.h.b16 %v3938
  %v5405 = vunpack.c.l.b16 %v3939
  %v5406 = vunpack.c.h.b16 %v3939
  %v5407 = vunpack.c.l.b16 %v3940
  %v5408 = vunpack.c.h.b16 %v3940
  %v5409 = vunpack.c.l.b16 %v3941
  %v5410 = vunpack.c.h.b16 %v3941
  %v5411 = vunpack.c.l.b16 %v3942
  %v5412 = vunpack.c.h.b16 %v3942
  %v5413 = vunpack.c.l.b16 %v3943
  %v5414 = vunpack.c.h.b16 %v3943
  %v5415 = vunpack.c.l.b16 %v3944
  %v5416 = vunpack.c.h.b16 %v3944
  %v5417 = vunpack.c.l.b16 %v3945
  %v5418 = vunpack.c.h.b16 %v3945
  %v5419 = vunpack.c.l.b16 %v3946
  %v5420 = vunpack.c.h.b16 %v3946
  %v5421 = vunpack.c.l.b16 %v3947
  %v5422 = vunpack.c.h.b16 %v3947
  %v5423 = vunpack.c.l.b16 %v3948
  %v5424 = vunpack.c.h.b16 %v3948
  %v5425 = vunpack.c.l.b16 %v3949
  %v5426 = vunpack.c.h.b16 %v3949
  %v5427 = vunpack.c.l.b16 %v3950
  %v5428 = vunpack.c.h.b16 %v3950
  %v5429 = vunpack.c.l.b16 %v3951
  %v5430 = vunpack.c.h.b16 %v3951
  %v5431 = vunpack.c.l.b16 %v3952
  %v5432 = vunpack.c.h.b16 %v3952
  %v5433 = vunpack.c.l.b16 %v3953
  %v5434 = vunpack.c.h.b16 %v3953
  %v5435 = vunpack.c.l.b16 %v3954
  %v5436 = vunpack.c.h.b16 %v3954
  %v5437 = vunpack.c.l.b16 %v3955
  %v5438 = vunpack.c.h.b16 %v3955
  %v5439 = vunpack.c.l.b16 %v3956
  %v5440 = vunpack.c.h.b16 %v3956
  %v5441 = vunpack.c.l.b16 %v3957
  %v5442 = vunpack.c.h.b16 %v3957
  %v5443 = vunpack.c.l.b16 %v3958
  %v5444 = vunpack.c.h.b16 %v3958
  %v5445 = vunpack.c.l.b16 %v3959
  %v5446 = vunpack.c.h.b16 %v3959
  %v5447 = vunpack.c.l.b16 %v3960
  %v5448 = vunpack.c.h.b16 %v3960
  %v5449 = vunpack.c.l.b16 %v3961
  %v5450 = vunpack.c.h.b16 %v3961
  %v5451 = vunpack.c.l.b16 %v3962
  %v5452 = vunpack.c.h.b16 %v3962
  %v5453 = vunpack.c.l.b16 %v3963
  %v5454 = vunpack.c.h.b16 %v3963
  %v5455 = vunpack.c.l.b16 %v3964
  %v5456 = vunpack.c.h.b16 %v3964
  %v5457 = vunpack.c.l.b16 %v3965
  %v5458 = vunpack.c.h.b16 %v3965
  %v5459 = vunpack.c.l.b16 %v3966
  %v5460 = vunpack.c.h.b16 %v3966
  %v5461 = vunpack.c.l.b16 %v3967
  %v5462 = vunpack.c.h.b16 %v3967
  %v5463 = vunpack.c.l.b16 %v3968
  %v5464 = vunpack.c.h.b16 %v3968
  %v5465 = vunpack.c.l.b16 %v3969
  %v5466 = vunpack.c.h.b16 %v3969
  %v5467 = vunpack.c.l.b16 %v3970
  %v5468 = vunpack.c.h.b16 %v3970
  %v5469 = vunpack.c.l.b16 %v3971
  %v5470 = vunpack.c.h.b16 %v3971
  %v5471 = vunpack.c.l.b16 %v3972
  %v5472 = vunpack.c.h.b16 %v3972
  %v5473 = vunpack.c.l.b16 %v3973
  %v5474 = vunpack.c.h.b16 %v3973
  %v5475 = vunpack.c.l.b16 %v3974
  %v5476 = vunpack.c.h.b16 %v3974
  %v5477 = vunpack.c.l.b16 %v3975
  %v5478 = vunpack.c.h.b16 %v3975
  %v5479 = vunpack.c.l.b16 %v3976
  %v5480 = vunpack.c.h.b16 %v3976
  %v5481 = vunpack.c.l.b16 %v3977
  %v5482 = vunpack.c.h.b16 %v3977
  %v5483 = vunpack.c.l.b16 %v3978
  %v5484 = vunpack.c.h.b16 %v3978
  %v5485 = vunpack.c.l.b16 %v3979
  %v5486 = vunpack.c.h.b16 %v3979
  %v5487 = vunpack.c.l.b16 %v3980
  %v5488 = vunpack.c.h.b16 %v3980
  %v5489 = vunpack.c.l.b16 %v3981
  %v5490 = vunpack.c.h.b16 %v3981
  %v5491 = vunpack.c.l.b16 %v3982
  %v5492 = vunpack.c.h.b16 %v3982
  %v5493 = vunpack.c.l.b16 %v3983
  %v5494 = vunpack.c.h.b16 %v3983
  %v5495 = vunpack.c.l.b16 %v3984
  %v5496 = vunpack.c.h.b16 %v3984
  %v5497 = vunpack.c.l.b16 %v3985
  %v5498 = vunpack.c.h.b16 %v3985
  %v5499 = vunpack.c.l.b16 %v3986
  %v5500 = vunpack.c.h.b16 %v3986
  %v5501 = vunpack.c.l.b16 %v3987
  %v5502 = vunpack.c.h.b16 %v3987
  %v5503 = vunpack.c.l.b16 %v3988
  %v5504 = vunpack.c.h.b16 %v3988
  %v5505 = vunpack.c.l.b16 %v3989
  %v5506 = vunpack.c.h.b16 %v3989
  %v5507 = vunpack.c.l.b16 %v3990
  %v5508 = vunpack.c.h.b16 %v3990
  %v5509 = vunpack.c.l.b16 %v3991
  %v5510 = vunpack.c.h.b16 %v3991
  %v5511 = vunpack.c.l.b16 %v3992
  %v5512 = vunpack.c.h.b16 %v3992
  %v5513 = vunpack.c.l.b16 %v3993
  %v5514 = vunpack.c.h.b16 %v3993
  %v5515 = vunpack.c.l.b16 %v3994
  %v5516 = vunpack.c.h.b16 %v3994
  %v5517 = vunpack.c.l.b16 %v3995
  %v5518 = vunpack.c.h.b16 %v3995
  %v5519 = vunpack.c.l.b16 %v3996
  %v5520 = vunpack.c.h.b16 %v3996
  %v5521 = vunpack.c.l.b16 %v3997
  %v5522 = vunpack.c.h.b16 %v3997
  %v5523 = vunpack.c.l.b16 %v3998
  %v5524 = vunpack.c.h.b16 %v3998
  %v5525 = vunpack.c.l.b16 %v3999
  %v5526 = vunpack.c.h.b16 %v3999
  %v5527 = vunpack.c.l.b16 %v4000
  %v5528 = vunpack.c.h.b16 %v4000
  %v5529 = vunpack.c.l.b16 %v4001
  %v5530 = vunpack.c.h.b16 %v4001
  %v5531 = vpack.c.b16 %v5279, %v5275
  %v5532 = vpack.c.b16 %v5280, %v5276
  %v5533 = vpack.c.b16 %v5281, %v5277
  %v5534 = vpack.c.b16 %v5282, %v5278
  %v5535 = vpack.c.b16 %v5287, %v5283
  %v5536 = vpack.c.b16 %v5288, %v5284
  %v5537 = vpack.c.b16 %v5289, %v5285
  %v5538 = vpack.c.b16 %v5290, %v5286
  %v5539 = vpack.c.b16 %v5295, %v5291
  %v5540 = vpack.c.b16 %v5296, %v5292
  %v5541 = vpack.c.b16 %v5297, %v5293
  %v5542 = vpack.c.b16 %v5298, %v5294
  %v5543 = vpack.c.b16 %v5303, %v5299
  %v5544 = vpack.c.b16 %v5304, %v5300
  %v5545 = vpack.c.b16 %v5305, %v5301
  %v5546 = vpack.c.b16 %v5306, %v5302
  %v5547 = vpack.c.b16 %v5311, %v5307
  %v5548 = vpack.c.b16 %v5312, %v5308
  %v5549 = vpack.c.b16 %v5313, %v5309
  %v5550 = vpack.c.b16 %v5314, %v5310
  %v5551 = vpack.c.b16 %v5319, %v5315
  %v5552 = vpack.c.b16 %v5320, %v5316
  %v5553 = vpack.c.b16 %v5321, %v5317
  %v5554 = vpack.c.b16 %v5322, %v5318
  %v5555 = vpack.c.b16 %v5327, %v5323
  %v5556 = vpack.c.b16 %v5328, %v5324
  %v5557 = vpack.c.b16 %v5329, %v5325
  %v5558 = vpack.c.b16 %v5330, %v5326
  %v5559 = vpack.c.b16 %v5335, %v5331
  %v5560 = vpack.c.b16 %v5336, %v5332
  %v5561 = vpack.c.b16 %v5337, %v5333
  %v5562 = vpack.c.b16 %v5338, %v5334
  %v5563 = vpack.c.b16 %v5343, %v5339
  %v5564 = vpack.c.b16 %v5344, %v5340
  %v5565 = vpack.c.b16 %v5345, %v5341
  %v5566 = vpack.c.b16 %v5346, %v5342
  %v5567 = vpack.c.b16 %v5351, %v5347
  %v5568 = vpack.c.b16 %v5352, %v5348
  %v5569 = vpack.c.b16 %v5353, %v5349
  %v5570 = vpack.c.b16 %v5354, %v5350
  %v5571 = vpack.c.b16 %v5359, %v5355
  %v5572 = vpack.c.b16 %v5360, %v5356
  %v5573 = vpack.c.b16 %v5361, %v5357
  %v5574 = vpack.c.b16 %v5362, %v5358
  %v5575 = vpack.c.b16 %v5367, %v5363
  %v5576 = vpack.c.b16 %v5368, %v5364
  %v5577 = vpack.c.b16 %v5369, %v5365
  %v5578 = vpack.c.b16 %v5370, %v5366
  %v5579 = vpack.c.b16 %v5375, %v5371
  %v5580 = vpack.c.b16 %v5376, %v5372
  %v5581 = vpack.c.b16 %v5377, %v5373
  %v5582 = vpack.c.b16 %v5378, %v5374
  %v5583 = vpack.c.b16 %v5383, %v5379
  %v5584 = vpack.c.b16 %v5384, %v5380
  %v5585 = vpack.c.b16 %v5385, %v5381
  %v5586 = vpack.c.b16 %v5386, %v5382
  %v5587 = vpack.c.b16 %v5391, %v5387
  %v5588 = vpack.c.b16 %v5392, %v5388
  %v5589 = vpack.c.b16 %v5393, %v5389
  %v5590 = vpack.c.b16 %v5394, %v5390
  %v5591 = vpack.c.b16 %v5399, %v5395
  %v5592 = vpack.c.b16 %v5400, %v5396
  %v5593 = vpack.c.b16 %v5401, %v5397
  %v5594 = vpack.c.b16 %v5402, %v5398
  %v5595 = vpack.c.b16 %v5407, %v5403
  %v5596 = vpack.c.b16 %v5408, %v5404
  %v5597 = vpack.c.b16 %v5409, %v5405
  %v5598 = vpack.c.b16 %v5410, %v5406
  %v5599 = vpack.c.b16 %v5415, %v5411
  %v5600 = vpack.c.b16 %v5416, %v5412
  %v5601 = vpack.c.b16 %v5417, %v5413
  %v5602 = vpack.c.b16 %v5418, %v5414
  %v5603 = vpack.c.b16 %v5423, %v5419
  %v5604 = vpack.c.b16 %v5424, %v5420
  %v5605 = vpack.c.b16 %v5425, %v5421
  %v5606 = vpack.c.b16 %v5426, %v5422
  %v5607 = vpack.c.b16 %v5431, %v5427
  %v5608 = vpack.c.b16 %v5432, %v5428
  %v5609 = vpack.c.b16 %v5433, %v5429
  %v5610 = vpack.c.b16 %v5434, %v5430
  %v5611 = vpack.c.b16 %v5439, %v5435
  %v5612 = vpack.c.b16 %v5440, %v5436
  %v5613 = vpack.c.b16 %v5441, %v5437
  %v5614 = vpack.c.b16 %v5442, %v5438
  %v5615 = vpack.c.b16 %v5447, %v5443
  %v5616 = vpack.c.b16 %v5448, %v5444
  %v5617 = vpack.c.b16 %v5449, %v5445
  %v5618 = vpack.c.b16 %v5450, %v5446
  %v5619 = vpack.c.b16 %v5455, %v5451
  %v5620 = vpack.c.b16 %v5456, %v5452
  %v5621 = vpack.c.b16 %v5457, %v5453
  %v5622 = vpack.c.b16 %v5458, %v5454
  %v5623 = vpack.c.b16 %v5463, %v5459
  %v5624 = vpack.c.b16 %v5464, %v5460
  %v5625 = vpack.c.b16 %v5465, %v5461
  %v5626 = vpack.c.b16 %v5466, %v5462
  %v5627 = vpack.c.b16 %v5471, %v5467
  %v5628 = vpack.c.b16 %v5472, %v5468
  %v5629 = vpack.c.b16 %v5473, %v5469
  %v5630 = vpack.c.b16 %v5474, %v5470
  %v5631 = vpack.c.b16 %v5479, %v5475
  %v5632 = vpack.c.b16 %v5480, %v5476
  %v5633 = vpack.c.b16 %v5481, %v5477
  %v5634 = vpack.c.b16 %v5482, %v5478
  %v5635 = vpack.c.b16 %v5487, %v5483
  %v5636 = vpack.c.b16 %v5488, %v5484
  %v5637 = vpack.c.b16 %v5489, %v5485
  %v5638 = vpack.c.b16 %v5490, %v5486
  %v5639 = vpack.c.b16 %v5495, %v5491
  %v5640 = vpack.c.b16 %v5496, %v5492
  %v5641 = vpack.c.b16 %v5497, %v5493
  %v5642 = vpack.c.b16 %v5498, %v5494
  %v5643 = vpack.c.b16 %v5503, %v5499
  %v5644 = vpack.c.b16 %v5504, %v5500
  %v5645 = vpack.c.b16 %v5505, %v5501
  %v5646 = vpack.c.b16 %v5506, %v5502
  %v5647 = vpack.c.b16 %v5511, %v5507
  %v5648 = vpack.c.b16 %v5512, %v5508
  %v5649 = vpack.c.b16 %v5513, %v5509
  %v5650 = vpack.c.b16 %v5514, %v5510
  %v5651 = vpack.c.b16 %v5519, %v5515
  %v5652 = vpack.c.b16 %v5520, %v5516
  %v5653 = vpack.c.b16 %v5521, %v5517
  %v5654 = vpack.c.b16 %v5522, %v5518
  %v5655 = vpack.c.b16 %v5527, %v5523
  %v5656 = vpack.c.b16 %v5528, %v5524
  %v5657 = vpack.c.b16 %v5529, %v5525
  %v5658 = vpack.c.b16 %v5530, %v5526
  %5787 = vmatprep.subr.bf16.mxu0 %v5532
  %5788 = vmatpush1.bf16.msra.mxu0 %v5531
  %5789 = vmatprep.subr.bf16.mxu0 %v5536
  %5790 = vmatpush1.bf16.msra.mxu0 %v5535
  %5791 = vmatprep.subr.bf16.mxu0 %v5540
  %5792 = vmatpush1.bf16.msra.mxu0 %v5539
  %5793 = vmatprep.subr.bf16.mxu0 %v5544
  %5794 = vmatpush1.bf16.msra.mxu0 %v5543
  %5795 = vmatprep.subr.bf16.mxu0 %v5548
  %5796 = vmatpush1.bf16.msra.mxu0 %v5547
  %5797 = vmatprep.subr.bf16.mxu0 %v5552
  %5798 = vmatpush1.bf16.msra.mxu0 %v5551
  %5799 = vmatprep.subr.bf16.mxu0 %v5556
  %5800 = vmatpush1.bf16.msra.mxu0 %v5555
  %5801 = vmatprep.subr.bf16.mxu0 %v5560
  %5802 = vmatpush1.bf16.msra.mxu0 %v5559
  %5803 = vmatprep.subr.bf16.mxu0 %v5564
  %5804 = vmatpush1.bf16.msra.mxu0 %v5563
  %5805 = vmatprep.subr.bf16.mxu0 %v5568
  %5806 = vmatpush1.bf16.msra.mxu0 %v5567
  %5807 = vmatprep.subr.bf16.mxu0 %v5572
  %5808 = vmatpush1.bf16.msra.mxu0 %v5571
  %5809 = vmatprep.subr.bf16.mxu0 %v5576
  %5810 = vmatpush1.bf16.msra.mxu0 %v5575
  %5811 = vmatprep.subr.bf16.mxu0 %v5580
  %5812 = vmatpush1.bf16.msra.mxu0 %v5579
  %5813 = vmatprep.subr.bf16.mxu0 %v5584
  %5814 = vmatpush1.bf16.msra.mxu0 %v5583
  %5815 = vmatprep.subr.bf16.mxu0 %v5588
  %5816 = vmatpush1.bf16.msra.mxu0 %v5587
  %5817 = vmatprep.subr.bf16.mxu0 %v5592
  %5818 = vmatpush1.bf16.msra.mxu0 %v5591
  %5819 = vmatprep.mubr.bf16.mxu0 %v3863
  %5820 = vmatmul.mubr.bf16.gmra.mrb[0].mxu0 %v3862
  %v5821 = vpop.f32.mrb[0].mxu0
  %v5822 = vadd.f32 %v5005, %v5821
  %v5823 = vpop.f32.mrb[0].mxu0
  %v5824 = vadd.f32 %v5007, %v5823
  %v5825 = vpop.f32.mrb[0].mxu0
  %v5826 = vadd.f32 %v5009, %v5825
  %v5827 = vpop.f32.mrb[0].mxu0
  %v5828 = vadd.f32 %v5011, %v5827
  %5829 = vmatprep.mubr.bf16.mxu0 %v3867
  %5830 = vmatmul.mubr.bf16.gmra.mrb[0].mxu0 %v3866
  %v5831 = vpop.f32.mrb[0].mxu0
  %v5832 = vpop.f32.mrb[0].mxu0
  %v5833 = vpop.f32.mrb[0].mxu0
  %v5834 = vadd.f32 %v5017, %v5833
  %v5835 = vpop.f32.mrb[0].mxu0
  %v5836 = vadd.f32 %v5019, %v5835
  %5837 = vmatprep.mubr.bf16.mxu0 %v3871
  %5838 = vmatmul.mubr.bf16.gmra.mrb[0].mxu0 %v3870
  %v5839 = vpop.f32.mrb[0].mxu0
  %v5840 = vadd.f32 %v5023, %v5839
  %v5841 = vpop.f32.mrb[0].mxu0
  %v5842 = vadd.f32 %v5025, %v5841
  %v5843 = vpop.f32.mrb[0].mxu0
  %v5844 = vpop.f32.mrb[0].mxu0
  %5845 = vdwg.mxu0
  %5846 = vmatprep.subr.bf16.mxu0 %v5596
  %5847 = vmatpush1.bf16.msra.mxu0 %v5595
  %5848 = vmatprep.subr.bf16.mxu0 %v5600
  %5849 = vmatpush1.bf16.msra.mxu0 %v5599
  %5850 = vmatprep.subr.bf16.mxu0 %v5604
  %5851 = vmatpush1.bf16.msra.mxu0 %v5603
  %5852 = vmatprep.subr.bf16.mxu0 %v5608
  %5853 = vmatpush1.bf16.msra.mxu0 %v5607
  %5854 = vmatprep.subr.bf16.mxu0 %v5612
  %5855 = vmatpush1.bf16.msra.mxu0 %v5611
  %5856 = vmatprep.subr.bf16.mxu0 %v5616
  %5857 = vmatpush1.bf16.msra.mxu0 %v5615
  %5858 = vmatprep.subr.bf16.mxu0 %v5620
  %5859 = vmatpush1.bf16.msra.mxu0 %v5619
  %5860 = vmatprep.subr.bf16.mxu0 %v5624
  %5861 = vmatpush1.bf16.msra.mxu0 %v5623
  %5862 = vmatprep.subr.bf16.mxu0 %v5628
  %5863 = vmatpush1.bf16.msra.mxu0 %v5627
  %5864 = vmatprep.subr.bf16.mxu0 %v5632
  %5865 = vmatpush1.bf16.msra.mxu0 %v5631
  %5866 = vmatprep.subr.bf16.mxu0 %v5636
  %5867 = vmatpush1.bf16.msra.mxu0 %v5635
  %5868 = vmatprep.subr.bf16.mxu0 %v5640
  %5869 = vmatpush1.bf16.msra.mxu0 %v5639
  %5870 = vmatprep.subr.bf16.mxu0 %v5644
  %5871 = vmatpush1.bf16.msra.mxu0 %v5643
  %5872 = vmatprep.subr.bf16.mxu0 %v5648
  %5873 = vmatpush1.bf16.msra.mxu0 %v5647
  %5874 = vmatprep.subr.bf16.mxu0 %v5652
  %5875 = vmatpush1.bf16.msra.mxu0 %v5651
  %5876 = vmatprep.subr.bf16.mxu0 %v5656
  %5877 = vmatpush1.bf16.msra.mxu0 %v5655
  %5878 = vmatprep.mubr.bf16.mxu0 %v3865
  %5879 = vmatmul.mubr.bf16.gmra.mrb[0].mxu0 %v3864
  %v5880 = vpop.f32.mrb[0].mxu0
  %v5881 = vadd.f32 %v5822, %v5880
  %v5882 = vpop.f32.mrb[0].mxu0
  %v5883 = vadd.f32 %v5824, %v5882
  %v5884 = vpop.f32.mrb[0].mxu0
  %v5885 = vadd.f32 %v5826, %v5884
  %v5886 = vpop.f32.mrb[0].mxu0
  %v5887 = vadd.f32 %v5828, %v5886
  %5888 = vmatprep.mubr.bf16.mxu0 %v3869
  %5889 = vmatmul.mubr.bf16.gmra.mrb[0].mxu0 %v3868
  %v5890 = vpop.f32.mrb[0].mxu0
  %v5891 = vpop.f32.mrb[0].mxu0
  %v5892 = vpop.f32.mrb[0].mxu0
  %v5893 = vadd.f32 %v5834, %v5892
  %v5894 = vpop.f32.mrb[0].mxu0
  %v5895 = vadd.f32 %v5836, %v5894
  %5896 = vmatprep.mubr.bf16.mxu0 %v3873
  %5897 = vmatmul.mubr.bf16.gmra.mrb[0].mxu0 %v3872
  %v5898 = vpop.f32.mrb[0].mxu0
  %v5899 = vadd.f32 %v5840, %v5898
  %v5900 = vpop.f32.mrb[0].mxu0
  %v5901 = vadd.f32 %v5842, %v5900
  %v5902 = vpop.f32.mrb[0].mxu0
  %v5903 = vpop.f32.mrb[0].mxu0
  %5904 = vdwg.mxu0
  %5905 = vmatprep.subr.bf16.mxu0 %v5534
  %5906 = vmatpush1.bf16.msra.mxu0 %v5533
  %5907 = vmatprep.subr.bf16.mxu0 %v5538
  %5908 = vmatpush1.bf16.msra.mxu0 %v5537
  %5909 = vmatprep.subr.bf16.mxu0 %v5542
  %5910 = vmatpush1.bf16.msra.mxu0 %v5541
  %5911 = vmatprep.subr.bf16.mxu0 %v5546
  %5912 = vmatpush1.bf16.msra.mxu0 %v5545
  %5913 = vmatprep.subr.bf16.mxu0 %v5550
  %5914 = vmatpush1.bf16.msra.mxu0 %v5549
  %5915 = vmatprep.subr.bf16.mxu0 %v5554
  %5916 = vmatpush1.bf16.msra.mxu0 %v5553
  %5917 = vmatprep.subr.bf16.mxu0 %v5558
  %5918 = vmatpush1.bf16.msra.mxu0 %v5557
  %5919 = vmatprep.subr.bf16.mxu0 %v5562
  %5920 = vmatpush1.bf16.msra.mxu0 %v5561
  %5921 = vmatprep.subr.bf16.mxu0 %v5566
  %5922 = vmatpush1.bf16.msra.mxu0 %v5565
  %5923 = vmatprep.subr.bf16.mxu0 %v5570
  %5924 = vmatpush1.bf16.msra.mxu0 %v5569
  %5925 = vmatprep.subr.bf16.mxu0 %v5574
  %5926 = vmatpush1.bf16.msra.mxu0 %v5573
  %5927 = vmatprep.subr.bf16.mxu0 %v5578
  %5928 = vmatpush1.bf16.msra.mxu0 %v5577
  %5929 = vmatprep.subr.bf16.mxu0 %v5582
  %5930 = vmatpush1.bf16.msra.mxu0 %v5581
  %5931 = vmatprep.subr.bf16.mxu0 %v5586
  %5932 = vmatpush1.bf16.msra.mxu0 %v5585
  %5933 = vmatprep.subr.bf16.mxu0 %v5590
  %5934 = vmatpush1.bf16.msra.mxu0 %v5589
  %5935 = vmatprep.subr.bf16.mxu0 %v5594
  %5936 = vmatpush1.bf16.msra.mxu0 %v5593
  %5937 = vmatprep.mubr.bf16.mxu0 %v3863
  %5938 = vmatmul.mubr.bf16.gmra.mrb[0].mxu0 %v3862
  %v5939 = vpop.f32.mrb[0].mxu0
  %v5940 = vadd.f32 %v5123, %v5939
  %v5941 = vpop.f32.mrb[0].mxu0
  %v5942 = vadd.f32 %v5125, %v5941
  %v5943 = vpop.f32.mrb[0].mxu0
  %v5944 = vadd.f32 %v5127, %v5943
  %v5945 = vpop.f32.mrb[0].mxu0
  %v5946 = vadd.f32 %v5129, %v5945
  %5947 = vmatprep.mubr.bf16.mxu0 %v3867
  %5948 = vmatmul.mubr.bf16.gmra.mrb[0].mxu0 %v3866
  %v5949 = vpop.f32.mrb[0].mxu0
  %v5950 = vpop.f32.mrb[0].mxu0
  %v5951 = vpop.f32.mrb[0].mxu0
  %v5952 = vadd.f32 %v5135, %v5951
  %v5953 = vpop.f32.mrb[0].mxu0
  %v5954 = vadd.f32 %v5137, %v5953
  %5955 = vmatprep.mubr.bf16.mxu0 %v3871
  %5956 = vmatmul.mubr.bf16.gmra.mrb[0].mxu0 %v3870
  %v5957 = vpop.f32.mrb[0].mxu0
  %v5958 = vadd.f32 %v5141, %v5957
  %v5959 = vpop.f32.mrb[0].mxu0
  %v5960 = vadd.f32 %v5143, %v5959
  %v5961 = vpop.f32.mrb[0].mxu0
  %v5962 = vpop.f32.mrb[0].mxu0
  %5963 = vdwg.mxu0
  %5964 = vmatprep.subr.bf16.mxu0 %v5598
  %5965 = vmatpush1.bf16.msra.mxu0 %v5597
  %5966 = vmatprep.subr.bf16.mxu0 %v5602
  %5967 = vmatpush1.bf16.msra.mxu0 %v5601
  %5968 = vmatprep.subr.bf16.mxu0 %v5606
  %5969 = vmatpush1.bf16.msra.mxu0 %v5605
  %5970 = vmatprep.subr.bf16.mxu0 %v5610
  %5971 = vmatpush1.bf16.msra.mxu0 %v5609
  %5972 = vmatprep.subr.bf16.mxu0 %v5614
  %5973 = vmatpush1.bf16.msra.mxu0 %v5613
  %5974 = vmatprep.subr.bf16.mxu0 %v5618
  %5975 = vmatpush1.bf16.msra.mxu0 %v5617
  %5976 = vmatprep.subr.bf16.mxu0 %v5622
  %5977 = vmatpush1.bf16.msra.mxu0 %v5621
  %5978 = vmatprep.subr.bf16.mxu0 %v5626
  %5979 = vmatpush1.bf16.msra.mxu0 %v5625
  %5980 = vmatprep.subr.bf16.mxu0 %v5630
  %5981 = vmatpush1.bf16.msra.mxu0 %v5629
  %5982 = vmatprep.subr.bf16.mxu0 %v5634
  %5983 = vmatpush1.bf16.msra.mxu0 %v5633
  %5984 = vmatprep.subr.bf16.mxu0 %v5638
  %5985 = vmatpush1.bf16.msra.mxu0 %v5637
  %5986 = vmatprep.subr.bf16.mxu0 %v5642
  %5987 = vmatpush1.bf16.msra.mxu0 %v5641
  %5988 = vmatprep.subr.bf16.mxu0 %v5646
  %5989 = vmatpush1.bf16.msra.mxu0 %v5645
  %5990 = vmatprep.subr.bf16.mxu0 %v5650
  %5991 = vmatpush1.bf16.msra.mxu0 %v5649
  %5992 = vmatprep.subr.bf16.mxu0 %v5654
  %5993 = vmatpush1.bf16.msra.mxu0 %v5653
  %5994 = vmatprep.subr.bf16.mxu0 %v5658
  %5995 = vmatpush1.bf16.msra.mxu0 %v5657
  %5996 = vmatprep.mubr.bf16.mxu0 %v3865
  %5997 = vmatmul.mubr.bf16.gmra.mrb[0].mxu0 %v3864
  %v5998 = vpop.f32.mrb[0].mxu0
  %v5999 = vadd.f32 %v5940, %v5998
  %v6000 = vpop.f32.mrb[0].mxu0
  %v6001 = vadd.f32 %v5942, %v6000
  %v6002 = vpop.f32.mrb[0].mxu0
  %v6003 = vadd.f32 %v5944, %v6002
  %v6004 = vpop.f32.mrb[0].mxu0
  %v6005 = vadd.f32 %v5946, %v6004
  %6006 = vmatprep.mubr.bf16.mxu0 %v3869
  %6007 = vmatmul.mubr.bf16.gmra.mrb[0].mxu0 %v3868
  %v6008 = vpop.f32.mrb[0].mxu0
  %v6009 = vpop.f32.mrb[0].mxu0
  %v6010 = vpop.f32.mrb[0].mxu0
  %v6011 = vadd.f32 %v5952, %v6010
  %v6012 = vpop.f32.mrb[0].mxu0
  %v6013 = vadd.f32 %v5954, %v6012
  %6014 = vmatprep.mubr.bf16.mxu0 %v3873
  %6015 = vmatmul.mubr.bf16.gmra.mrb[0].mxu0 %v3872
  %v6016 = vpop.f32.mrb[0].mxu0
  %v6017 = vadd.f32 %v5958, %v6016
  %v6018 = vpop.f32.mrb[0].mxu0
  %v6019 = vadd.f32 %v5960, %v6018
  %v6020 = vpop.f32.mrb[0].mxu0
  %v6021 = vpop.f32.mrb[0].mxu0
  %6022 = vdwg.mxu0
  %v6023 = vld [vmem:[#allocation2] sm:$0xfc]
  %v6024 = vld [vmem:[#allocation2 + $0x8] sm:$0xfc]
  %v6025 = vld [vmem:[#allocation2 + $0x10] sm:$0xfc]
  %v6026 = vld [vmem:[#allocation2 + $0x18] sm:$0xfc]
  %v6027 = vld [vmem:[#allocation2 + $0xa0] sm:$0x3]
  %v6028 = vld [vmem:[#allocation2 + $0xa8] sm:$0x3]
  %v6029 = vld [vmem:[#allocation2 + $0xb0] sm:$0x3]
  %v6030 = vld [vmem:[#allocation2 + $0xb8] sm:$0x3]
  %v6031 = vpack.c.bf16 %v4006, %v6023
  %v6032 = vpack.c.bf16 %v4007, %v6024
  %v6033 = vpack.c.bf16 %v4008, %v6025
  %v6034 = vpack.c.bf16 %v4009, %v6026
  %v6035 = vpack.c.bf16 %v6027, %v4018
  %v6036 = vpack.c.bf16 %v6028, %v4019
  %v6037 = vpack.c.bf16 %v6029, %v4020
  %v6038 = vpack.c.bf16 %v6030, %v4021
  %s6039 = scalar_lea.vmem %s6, 2048
  %v6040 = vld [vmem:[%s6039] sm:$0xff]
  %v6041 = vld [vmem:[%s6039 + $0x8] sm:$0xff]
  %v6042 = vld [vmem:[%s6039 + $0x10] sm:$0xff]
  %v6043 = vld [vmem:[%s6039 + $0x18] sm:$0xff]
  %v6044 = vld [vmem:[%s6039 + $0x20] sm:$0xff]
  %v6045 = vld [vmem:[%s6039 + $0x28] sm:$0xff]
  %v6046 = vld [vmem:[%s6039 + $0x30] sm:$0xff]
  %v6047 = vld [vmem:[%s6039 + $0x38] sm:$0xff]
  %v6048 = vld [vmem:[%s6039 + $0x40] sm:$0xff]
  %v6049 = vld [vmem:[%s6039 + $0x48] sm:$0xff]
  %v6050 = vld [vmem:[%s6039 + $0x50] sm:$0xff]
  %v6051 = vld [vmem:[%s6039 + $0x58] sm:$0xff]
  %v6052 = vld [vmem:[%s6039 + $0x60] sm:$0xff]
  %v6053 = vld [vmem:[%s6039 + $0x68] sm:$0xff]
  %v6054 = vld [vmem:[%s6039 + $0x70] sm:$0xff]
  %v6055 = vld [vmem:[%s6039 + $0x78] sm:$0xff]
  %v6056 = vld [vmem:[%s6039 + $0x80] sm:$0xff]
  %v6057 = vld [vmem:[%s6039 + $0x88] sm:$0xff]
  %v6058 = vld [vmem:[%s6039 + $0x90] sm:$0xff]
  %v6059 = vld [vmem:[%s6039 + $0x98] sm:$0xff]
  %v6060 = vld [vmem:[%s6039 + $0xa0] sm:$0xff]
  %v6061 = vld [vmem:[%s6039 + $0xa8] sm:$0xff]
  %v6062 = vld [vmem:[%s6039 + $0xb0] sm:$0xff]
  %v6063 = vld [vmem:[%s6039 + $0xb8] sm:$0xff]
  %v6064 = vld [vmem:[%s6039 + $0xc0] sm:$0xff]
  %v6065 = vld [vmem:[%s6039 + $0xc8] sm:$0xff]
  %v6066 = vld [vmem:[%s6039 + $0xd0] sm:$0xff]
  %v6067 = vld [vmem:[%s6039 + $0xd8] sm:$0xff]
  %v6068 = vld [vmem:[%s6039 + $0xe0] sm:$0xff]
  %v6069 = vld [vmem:[%s6039 + $0xe8] sm:$0xff]
  %v6070 = vld [vmem:[%s6039 + $0xf0] sm:$0xff]
  %v6071 = vld [vmem:[%s6039 + $0xf8] sm:$0xff]
  %v6072 = vld [vmem:[%s6039 + $0x100] sm:$0xff]
  %v6073 = vld [vmem:[%s6039 + $0x108] sm:$0xff]
  %v6074 = vld [vmem:[%s6039 + $0x110] sm:$0xff]
  %v6075 = vld [vmem:[%s6039 + $0x118] sm:$0xff]
  %v6076 = vld [vmem:[%s6039 + $0x120] sm:$0xff]
  %v6077 = vld [vmem:[%s6039 + $0x128] sm:$0xff]
  %v6078 = vld [vmem:[%s6039 + $0x130] sm:$0xff]
  %v6079 = vld [vmem:[%s6039 + $0x138] sm:$0xff]
  %v6080 = vld [vmem:[%s6039 + $0x140] sm:$0xff]
  %v6081 = vld [vmem:[%s6039 + $0x148] sm:$0xff]
  %v6082 = vld [vmem:[%s6039 + $0x150] sm:$0xff]
  %v6083 = vld [vmem:[%s6039 + $0x158] sm:$0xff]
  %v6084 = vld [vmem:[%s6039 + $0x160] sm:$0xff]
  %v6085 = vld [vmem:[%s6039 + $0x168] sm:$0xff]
  %v6086 = vld [vmem:[%s6039 + $0x170] sm:$0xff]
  %v6087 = vld [vmem:[%s6039 + $0x178] sm:$0xff]
  %v6088 = vld [vmem:[%s6039 + $0x180] sm:$0xff]
  %v6089 = vld [vmem:[%s6039 + $0x188] sm:$0xff]
  %v6090 = vld [vmem:[%s6039 + $0x190] sm:$0xff]
  %v6091 = vld [vmem:[%s6039 + $0x198] sm:$0xff]
  %v6092 = vld [vmem:[%s6039 + $0x1a0] sm:$0xff]
  %v6093 = vld [vmem:[%s6039 + $0x1a8] sm:$0xff]
  %v6094 = vld [vmem:[%s6039 + $0x1b0] sm:$0xff]
  %v6095 = vld [vmem:[%s6039 + $0x1b8] sm:$0xff]
  %v6096 = vld [vmem:[%s6039 + $0x1c0] sm:$0xff]
  %v6097 = vld [vmem:[%s6039 + $0x1c8] sm:$0xff]
  %v6098 = vld [vmem:[%s6039 + $0x1d0] sm:$0xff]
  %v6099 = vld [vmem:[%s6039 + $0x1d8] sm:$0xff]
  %v6100 = vld [vmem:[%s6039 + $0x1e0] sm:$0xff]
  %v6101 = vld [vmem:[%s6039 + $0x1e8] sm:$0xff]
  %v6102 = vld [vmem:[%s6039 + $0x1f0] sm:$0xff]
  %v6103 = vld [vmem:[%s6039 + $0x1f8] sm:$0xff]
  %v6104 = vld [vmem:[%s6039 + $0x200] sm:$0xff]
  %v6105 = vld [vmem:[%s6039 + $0x208] sm:$0xff]
  %v6106 = vld [vmem:[%s6039 + $0x210] sm:$0xff]
  %v6107 = vld [vmem:[%s6039 + $0x218] sm:$0xff]
  %v6108 = vld [vmem:[%s6039 + $0x220] sm:$0xff]
  %v6109 = vld [vmem:[%s6039 + $0x228] sm:$0xff]
  %v6110 = vld [vmem:[%s6039 + $0x230] sm:$0xff]
  %v6111 = vld [vmem:[%s6039 + $0x238] sm:$0xff]
  %v6112 = vld [vmem:[%s6039 + $0x240] sm:$0xff]
  %v6113 = vld [vmem:[%s6039 + $0x248] sm:$0xff]
  %v6114 = vld [vmem:[%s6039 + $0x250] sm:$0xff]
  %v6115 = vld [vmem:[%s6039 + $0x258] sm:$0xff]
  %v6116 = vld [vmem:[%s6039 + $0x260] sm:$0xff]
  %v6117 = vld [vmem:[%s6039 + $0x268] sm:$0xff]
  %v6118 = vld [vmem:[%s6039 + $0x270] sm:$0xff]
  %v6119 = vld [vmem:[%s6039 + $0x278] sm:$0xff]
  %v6120 = vld [vmem:[%s6039 + $0x280] sm:$0xff]
  %v6121 = vld [vmem:[%s6039 + $0x288] sm:$0xff]
  %v6122 = vld [vmem:[%s6039 + $0x290] sm:$0xff]
  %v6123 = vld [vmem:[%s6039 + $0x298] sm:$0xff]
  %v6124 = vld [vmem:[%s6039 + $0x2a0] sm:$0xff]
  %v6125 = vld [vmem:[%s6039 + $0x2a8] sm:$0xff]
  %v6126 = vld [vmem:[%s6039 + $0x2b0] sm:$0xff]
  %v6127 = vld [vmem:[%s6039 + $0x2b8] sm:$0xff]
  %v6128 = vld [vmem:[%s6039 + $0x2c0] sm:$0xff]
  %v6129 = vld [vmem:[%s6039 + $0x2c8] sm:$0xff]
  %v6130 = vld [vmem:[%s6039 + $0x2d0] sm:$0xff]
  %v6131 = vld [vmem:[%s6039 + $0x2d8] sm:$0xff]
  %v6132 = vld [vmem:[%s6039 + $0x2e0] sm:$0xff]
  %v6133 = vld [vmem:[%s6039 + $0x2e8] sm:$0xff]
  %v6134 = vld [vmem:[%s6039 + $0x2f0] sm:$0xff]
  %v6135 = vld [vmem:[%s6039 + $0x2f8] sm:$0xff]
  %v6136 = vld [vmem:[%s6039 + $0x300] sm:$0xff]
  %v6137 = vld [vmem:[%s6039 + $0x308] sm:$0xff]
  %v6138 = vld [vmem:[%s6039 + $0x310] sm:$0xff]
  %v6139 = vld [vmem:[%s6039 + $0x318] sm:$0xff]
  %v6140 = vld [vmem:[%s6039 + $0x320] sm:$0xff]
  %v6141 = vld [vmem:[%s6039 + $0x328] sm:$0xff]
  %v6142 = vld [vmem:[%s6039 + $0x330] sm:$0xff]
  %v6143 = vld [vmem:[%s6039 + $0x338] sm:$0xff]
  %v6144 = vld [vmem:[%s6039 + $0x340] sm:$0xff]
  %v6145 = vld [vmem:[%s6039 + $0x348] sm:$0xff]
  %v6146 = vld [vmem:[%s6039 + $0x350] sm:$0xff]
  %v6147 = vld [vmem:[%s6039 + $0x358] sm:$0xff]
  %v6148 = vld [vmem:[%s6039 + $0x360] sm:$0xff]
  %v6149 = vld [vmem:[%s6039 + $0x368] sm:$0xff]
  %v6150 = vld [vmem:[%s6039 + $0x370] sm:$0xff]
  %v6151 = vld [vmem:[%s6039 + $0x378] sm:$0xff]
  %v6152 = vld [vmem:[%s6039 + $0x380] sm:$0xff]
  %v6153 = vld [vmem:[%s6039 + $0x388] sm:$0xff]
  %v6154 = vld [vmem:[%s6039 + $0x390] sm:$0xff]
  %v6155 = vld [vmem:[%s6039 + $0x398] sm:$0xff]
  %v6156 = vld [vmem:[%s6039 + $0x3a0] sm:$0xff]
  %v6157 = vld [vmem:[%s6039 + $0x3a8] sm:$0xff]
  %v6158 = vld [vmem:[%s6039 + $0x3b0] sm:$0xff]
  %v6159 = vld [vmem:[%s6039 + $0x3b8] sm:$0xff]
  %v6160 = vld [vmem:[%s6039 + $0x3c0] sm:$0xff]
  %v6161 = vld [vmem:[%s6039 + $0x3c8] sm:$0xff]
  %v6162 = vld [vmem:[%s6039 + $0x3d0] sm:$0xff]
  %v6163 = vld [vmem:[%s6039 + $0x3d8] sm:$0xff]
  %v6164 = vld [vmem:[%s6039 + $0x3e0] sm:$0xff]
  %v6165 = vld [vmem:[%s6039 + $0x3e8] sm:$0xff]
  %v6166 = vld [vmem:[%s6039 + $0x3f0] sm:$0xff]
  %v6167 = vld [vmem:[%s6039 + $0x3f8] sm:$0xff]
  %v6180 = vrot.slane %v6031, 1
  %v6181 = vrot.slane %v4030, 1
  %v6182 = vsel %vm2625, %v6180, %v6181
  %v6183 = vrot.slane %v6032, 1
  %v6184 = vrot.slane %v4031, 1
  %v6185 = vsel %vm2625, %v6183, %v6184
  %v6186 = vrot.slane %v6033, 1
  %v6187 = vrot.slane %v4032, 1
  %v6188 = vsel %vm2625, %v6186, %v6187
  %v6189 = vrot.slane %v6034, 1
  %v6190 = vrot.slane %v4033, 1
  %v6191 = vsel %vm2625, %v6189, %v6190
  %v6192 = vrot.slane %v6035, 1
  %v6193 = vsel %vm2625, %v6181, %v6192
  %v6194 = vrot.slane %v6036, 1
  %v6195 = vsel %vm2625, %v6184, %v6194
  %v6196 = vrot.slane %v6037, 1
  %v6197 = vsel %vm2625, %v6187, %v6196
  %v6198 = vrot.slane %v6038, 1
  %v6199 = vsel %vm2625, %v6190, %v6198
  %v6340 = vunpack.c.l.b16 %v6040
  %v6341 = vunpack.c.h.b16 %v6040
  %v6342 = vunpack.c.l.b16 %v6041
  %v6343 = vunpack.c.h.b16 %v6041
  %v6344 = vunpack.c.l.b16 %v6042
  %v6345 = vunpack.c.h.b16 %v6042
  %v6346 = vunpack.c.l.b16 %v6043
  %v6347 = vunpack.c.h.b16 %v6043
  %v6348 = vunpack.c.l.b16 %v6044
  %v6349 = vunpack.c.h.b16 %v6044
  %v6350 = vunpack.c.l.b16 %v6045
  %v6351 = vunpack.c.h.b16 %v6045
  %v6352 = vunpack.c.l.b16 %v6046
  %v6353 = vunpack.c.h.b16 %v6046
  %v6354 = vunpack.c.l.b16 %v6047
  %v6355 = vunpack.c.h.b16 %v6047
  %v6356 = vunpack.c.l.b16 %v6048
  %v6357 = vunpack.c.h.b16 %v6048
  %v6358 = vunpack.c.l.b16 %v6049
  %v6359 = vunpack.c.h.b16 %v6049
  %v6360 = vunpack.c.l.b16 %v6050
  %v6361 = vunpack.c.h.b16 %v6050
  %v6362 = vunpack.c.l.b16 %v6051
  %v6363 = vunpack.c.h.b16 %v6051
  %v6364 = vunpack.c.l.b16 %v6052
  %v6365 = vunpack.c.h.b16 %v6052
  %v6366 = vunpack.c.l.b16 %v6053
  %v6367 = vunpack.c.h.b16 %v6053
  %v6368 = vunpack.c.l.b16 %v6054
  %v6369 = vunpack.c.h.b16 %v6054
  %v6370 = vunpack.c.l.b16 %v6055
  %v6371 = vunpack.c.h.b16 %v6055
  %v6372 = vunpack.c.l.b16 %v6056
  %v6373 = vunpack.c.h.b16 %v6056
  %v6374 = vunpack.c.l.b16 %v6057
  %v6375 = vunpack.c.h.b16 %v6057
  %v6376 = vunpack.c.l.b16 %v6058
  %v6377 = vunpack.c.h.b16 %v6058
  %v6378 = vunpack.c.l.b16 %v6059
  %v6379 = vunpack.c.h.b16 %v6059
  %v6380 = vunpack.c.l.b16 %v6060
  %v6381 = vunpack.c.h.b16 %v6060
  %v6382 = vunpack.c.l.b16 %v6061
  %v6383 = vunpack.c.h.b16 %v6061
  %v6384 = vunpack.c.l.b16 %v6062
  %v6385 = vunpack.c.h.b16 %v6062
  %v6386 = vunpack.c.l.b16 %v6063
  %v6387 = vunpack.c.h.b16 %v6063
  %v6388 = vunpack.c.l.b16 %v6064
  %v6389 = vunpack.c.h.b16 %v6064
  %v6390 = vunpack.c.l.b16 %v6065
  %v6391 = vunpack.c.h.b16 %v6065
  %v6392 = vunpack.c.l.b16 %v6066
  %v6393 = vunpack.c.h.b16 %v6066
  %v6394 = vunpack.c.l.b16 %v6067
  %v6395 = vunpack.c.h.b16 %v6067
  %v6396 = vunpack.c.l.b16 %v6068
  %v6397 = vunpack.c.h.b16 %v6068
  %v6398 = vunpack.c.l.b16 %v6069
  %v6399 = vunpack.c.h.b16 %v6069
  %v6400 = vunpack.c.l.b16 %v6070
  %v6401 = vunpack.c.h.b16 %v6070
  %v6402 = vunpack.c.l.b16 %v6071
  %v6403 = vunpack.c.h.b16 %v6071
  %v6404 = vunpack.c.l.b16 %v6072
  %v6405 = vunpack.c.h.b16 %v6072
  %v6406 = vunpack.c.l.b16 %v6073
  %v6407 = vunpack.c.h.b16 %v6073
  %v6408 = vunpack.c.l.b16 %v6074
  %v6409 = vunpack.c.h.b16 %v6074
  %v6410 = vunpack.c.l.b16 %v6075
  %v6411 = vunpack.c.h.b16 %v6075
  %v6412 = vunpack.c.l.b16 %v6076
  %v6413 = vunpack.c.h.b16 %v6076
  %v6414 = vunpack.c.l.b16 %v6077
  %v6415 = vunpack.c.h.b16 %v6077
  %v6416 = vunpack.c.l.b16 %v6078
  %v6417 = vunpack.c.h.b16 %v6078
  %v6418 = vunpack.c.l.b16 %v6079
  %v6419 = vunpack.c.h.b16 %v6079
  %v6420 = vunpack.c.l.b16 %v6080
  %v6421 = vunpack.c.h.b16 %v6080
  %v6422 = vunpack.c.l.b16 %v6081
  %v6423 = vunpack.c.h.b16 %v6081
  %v6424 = vunpack.c.l.b16 %v6082
  %v6425 = vunpack.c.h.b16 %v6082
  %v6426 = vunpack.c.l.b16 %v6083
  %v6427 = vunpack.c.h.b16 %v6083
  %v6428 = vunpack.c.l.b16 %v6084
  %v6429 = vunpack.c.h.b16 %v6084
  %v6430 = vunpack.c.l.b16 %v6085
  %v6431 = vunpack.c.h.b16 %v6085
  %v6432 = vunpack.c.l.b16 %v6086
  %v6433 = vunpack.c.h.b16 %v6086
  %v6434 = vunpack.c.l.b16 %v6087
  %v6435 = vunpack.c.h.b16 %v6087
  %v6436 = vunpack.c.l.b16 %v6088
  %v6437 = vunpack.c.h.b16 %v6088
  %v6438 = vunpack.c.l.b16 %v6089
  %v6439 = vunpack.c.h.b16 %v6089
  %v6440 = vunpack.c.l.b16 %v6090
  %v6441 = vunpack.c.h.b16 %v6090
  %v6442 = vunpack.c.l.b16 %v6091
  %v6443 = vunpack.c.h.b16 %v6091
  %v6444 = vunpack.c.l.b16 %v6092
  %v6445 = vunpack.c.h.b16 %v6092
  %v6446 = vunpack.c.l.b16 %v6093
  %v6447 = vunpack.c.h.b16 %v6093
  %v6448 = vunpack.c.l.b16 %v6094
  %v6449 = vunpack.c.h.b16 %v6094
  %v6450 = vunpack.c.l.b16 %v6095
  %v6451 = vunpack.c.h.b16 %v6095
  %v6452 = vunpack.c.l.b16 %v6096
  %v6453 = vunpack.c.h.b16 %v6096
  %v6454 = vunpack.c.l.b16 %v6097
  %v6455 = vunpack.c.h.b16 %v6097
  %v6456 = vunpack.c.l.b16 %v6098
  %v6457 = vunpack.c.h.b16 %v6098
  %v6458 = vunpack.c.l.b16 %v6099
  %v6459 = vunpack.c.h.b16 %v6099
  %v6460 = vunpack.c.l.b16 %v6100
  %v6461 = vunpack.c.h.b16 %v6100
  %v6462 = vunpack.c.l.b16 %v6101
  %v6463 = vunpack.c.h.b16 %v6101
  %v6464 = vunpack.c.l.b16 %v6102
  %v6465 = vunpack.c.h.b16 %v6102
  %v6466 = vunpack.c.l.b16 %v6103
  %v6467 = vunpack.c.h.b16 %v6103
  %v6468 = vunpack.c.l.b16 %v6104
  %v6469 = vunpack.c.h.b16 %v6104
  %v6470 = vunpack.c.l.b16 %v6105
  %v6471 = vunpack.c.h.b16 %v6105
  %v6472 = vunpack.c.l.b16 %v6106
  %v6473 = vunpack.c.h.b16 %v6106
  %v6474 = vunpack.c.l.b16 %v6107
  %v6475 = vunpack.c.h.b16 %v6107
  %v6476 = vunpack.c.l.b16 %v6108
  %v6477 = vunpack.c.h.b16 %v6108
  %v6478 = vunpack.c.l.b16 %v6109
  %v6479 = vunpack.c.h.b16 %v6109
  %v6480 = vunpack.c.l.b16 %v6110
  %v6481 = vunpack.c.h.b16 %v6110
  %v6482 = vunpack.c.l.b16 %v6111
  %v6483 = vunpack.c.h.b16 %v6111
  %v6484 = vunpack.c.l.b16 %v6112
  %v6485 = vunpack.c.h.b16 %v6112
  %v6486 = vunpack.c.l.b16 %v6113
  %v6487 = vunpack.c.h.b16 %v6113
  %v6488 = vunpack.c.l.b16 %v6114
  %v6489 = vunpack.c.h.b16 %v6114
  %v6490 = vunpack.c.l.b16 %v6115
  %v6491 = vunpack.c.h.b16 %v6115
  %v6492 = vunpack.c.l.b16 %v6116
  %v6493 = vunpack.c.h.b16 %v6116
  %v6494 = vunpack.c.l.b16 %v6117
  %v6495 = vunpack.c.h.b16 %v6117
  %v6496 = vunpack.c.l.b16 %v6118
  %v6497 = vunpack.c.h.b16 %v6118
  %v6498 = vunpack.c.l.b16 %v6119
  %v6499 = vunpack.c.h.b16 %v6119
  %v6500 = vunpack.c.l.b16 %v6120
  %v6501 = vunpack.c.h.b16 %v6120
  %v6502 = vunpack.c.l.b16 %v6121
  %v6503 = vunpack.c.h.b16 %v6121
  %v6504 = vunpack.c.l.b16 %v6122
  %v6505 = vunpack.c.h.b16 %v6122
  %v6506 = vunpack.c.l.b16 %v6123
  %v6507 = vunpack.c.h.b16 %v6123
  %v6508 = vunpack.c.l.b16 %v6124
  %v6509 = vunpack.c.h.b16 %v6124
  %v6510 = vunpack.c.l.b16 %v6125
  %v6511 = vunpack.c.h.b16 %v6125
  %v6512 = vunpack.c.l.b16 %v6126
  %v6513 = vunpack.c.h.b16 %v6126
  %v6514 = vunpack.c.l.b16 %v6127
  %v6515 = vunpack.c.h.b16 %v6127
  %v6516 = vunpack.c.l.b16 %v6128
  %v6517 = vunpack.c.h.b16 %v6128
  %v6518 = vunpack.c.l.b16 %v6129
  %v6519 = vunpack.c.h.b16 %v6129
  %v6520 = vunpack.c.l.b16 %v6130
  %v6521 = vunpack.c.h.b16 %v6130
  %v6522 = vunpack.c.l.b16 %v6131
  %v6523 = vunpack.c.h.b16 %v6131
  %v6524 = vunpack.c.l.b16 %v6132
  %v6525 = vunpack.c.h.b16 %v6132
  %v6526 = vunpack.c.l.b16 %v6133
  %v6527 = vunpack.c.h.b16 %v6133
  %v6528 = vunpack.c.l.b16 %v6134
  %v6529 = vunpack.c.h.b16 %v6134
  %v6530 = vunpack.c.l.b16 %v6135
  %v6531 = vunpack.c.h.b16 %v6135
  %v6532 = vunpack.c.l.b16 %v6136
  %v6533 = vunpack.c.h.b16 %v6136
  %v6534 = vunpack.c.l.b16 %v6137
  %v6535 = vunpack.c.h.b16 %v6137
  %v6536 = vunpack.c.l.b16 %v6138
  %v6537 = vunpack.c.h.b16 %v6138
  %v6538 = vunpack.c.l.b16 %v6139
  %v6539 = vunpack.c.h.b16 %v6139
  %v6540 = vunpack.c.l.b16 %v6140
  %v6541 = vunpack.c.h.b16 %v6140
  %v6542 = vunpack.c.l.b16 %v6141
  %v6543 = vunpack.c.h.b16 %v6141
  %v6544 = vunpack.c.l.b16 %v6142
  %v6545 = vunpack.c.h.b16 %v6142
  %v6546 = vunpack.c.l.b16 %v6143
  %v6547 = vunpack.c.h.b16 %v6143
  %v6548 = vunpack.c.l.b16 %v6144
  %v6549 = vunpack.c.h.b16 %v6144
  %v6550 = vunpack.c.l.b16 %v6145
  %v6551 = vunpack.c.h.b16 %v6145
  %v6552 = vunpack.c.l.b16 %v6146
  %v6553 = vunpack.c.h.b16 %v6146
  %v6554 = vunpack.c.l.b16 %v6147
  %v6555 = vunpack.c.h.b16 %v6147
  %v6556 = vunpack.c.l.b16 %v6148
  %v6557 = vunpack.c.h.b16 %v6148
  %v6558 = vunpack.c.l.b16 %v6149
  %v6559 = vunpack.c.h.b16 %v6149
  %v6560 = vunpack.c.l.b16 %v6150
  %v6561 = vunpack.c.h.b16 %v6150
  %v6562 = vunpack.c.l.b16 %v6151
  %v6563 = vunpack.c.h.b16 %v6151
  %v6564 = vunpack.c.l.b16 %v6152
  %v6565 = vunpack.c.h.b16 %v6152
  %v6566 = vunpack.c.l.b16 %v6153
  %v6567 = vunpack.c.h.b16 %v6153
  %v6568 = vunpack.c.l.b16 %v6154
  %v6569 = vunpack.c.h.b16 %v6154
  %v6570 = vunpack.c.l.b16 %v6155
  %v6571 = vunpack.c.h.b16 %v6155
  %v6572 = vunpack.c.l.b16 %v6156
  %v6573 = vunpack.c.h.b16 %v6156
  %v6574 = vunpack.c.l.b16 %v6157
  %v6575 = vunpack.c.h.b16 %v6157
  %v6576 = vunpack.c.l.b16 %v6158
  %v6577 = vunpack.c.h.b16 %v6158
  %v6578 = vunpack.c.l.b16 %v6159
  %v6579 = vunpack.c.h.b16 %v6159
  %v6580 = vunpack.c.l.b16 %v6160
  %v6581 = vunpack.c.h.b16 %v6160
  %v6582 = vunpack.c.l.b16 %v6161
  %v6583 = vunpack.c.h.b16 %v6161
  %v6584 = vunpack.c.l.b16 %v6162
  %v6585 = vunpack.c.h.b16 %v6162
  %v6586 = vunpack.c.l.b16 %v6163
  %v6587 = vunpack.c.h.b16 %v6163
  %v6588 = vunpack.c.l.b16 %v6164
  %v6589 = vunpack.c.h.b16 %v6164
  %v6590 = vunpack.c.l.b16 %v6165
  %v6591 = vunpack.c.h.b16 %v6165
  %v6592 = vunpack.c.l.b16 %v6166
  %v6593 = vunpack.c.h.b16 %v6166
  %v6594 = vunpack.c.l.b16 %v6167
  %v6595 = vunpack.c.h.b16 %v6167
  %v6596 = vpack.c.b16 %v6344, %v6340
  %v6597 = vpack.c.b16 %v6345, %v6341
  %v6598 = vpack.c.b16 %v6346, %v6342
  %v6599 = vpack.c.b16 %v6347, %v6343
  %v6600 = vpack.c.b16 %v6352, %v6348
  %v6601 = vpack.c.b16 %v6353, %v6349
  %v6602 = vpack.c.b16 %v6354, %v6350
  %v6603 = vpack.c.b16 %v6355, %v6351
  %v6604 = vpack.c.b16 %v6360, %v6356
  %v6605 = vpack.c.b16 %v6361, %v6357
  %v6606 = vpack.c.b16 %v6362, %v6358
  %v6607 = vpack.c.b16 %v6363, %v6359
  %v6608 = vpack.c.b16 %v6368, %v6364
  %v6609 = vpack.c.b16 %v6369, %v6365
  %v6610 = vpack.c.b16 %v6370, %v6366
  %v6611 = vpack.c.b16 %v6371, %v6367
  %v6612 = vpack.c.b16 %v6376, %v6372
  %v6613 = vpack.c.b16 %v6377, %v6373
  %v6614 = vpack.c.b16 %v6378, %v6374
  %v6615 = vpack.c.b16 %v6379, %v6375
  %v6616 = vpack.c.b16 %v6384, %v6380
  %v6617 = vpack.c.b16 %v6385, %v6381
  %v6618 = vpack.c.b16 %v6386, %v6382
  %v6619 = vpack.c.b16 %v6387, %v6383
  %v6620 = vpack.c.b16 %v6392, %v6388
  %v6621 = vpack.c.b16 %v6393, %v6389
  %v6622 = vpack.c.b16 %v6394, %v6390
  %v6623 = vpack.c.b16 %v6395, %v6391
  %v6624 = vpack.c.b16 %v6400, %v6396
  %v6625 = vpack.c.b16 %v6401, %v6397
  %v6626 = vpack.c.b16 %v6402, %v6398
  %v6627 = vpack.c.b16 %v6403, %v6399
  %v6628 = vpack.c.b16 %v6408, %v6404
  %v6629 = vpack.c.b16 %v6409, %v6405
  %v6630 = vpack.c.b16 %v6410, %v6406
  %v6631 = vpack.c.b16 %v6411, %v6407
  %v6632 = vpack.c.b16 %v6416, %v6412
  %v6633 = vpack.c.b16 %v6417, %v6413
  %v6634 = vpack.c.b16 %v6418, %v6414
  %v6635 = vpack.c.b16 %v6419, %v6415
  %v6636 = vpack.c.b16 %v6424, %v6420
  %v6637 = vpack.c.b16 %v6425, %v6421
  %v6638 = vpack.c.b16 %v6426, %v6422
  %v6639 = vpack.c.b16 %v6427, %v6423
  %v6640 = vpack.c.b16 %v6432, %v6428
  %v6641 = vpack.c.b16 %v6433, %v6429
  %v6642 = vpack.c.b16 %v6434, %v6430
  %v6643 = vpack.c.b16 %v6435, %v6431
  %v6644 = vpack.c.b16 %v6440, %v6436
  %v6645 = vpack.c.b16 %v6441, %v6437
  %v6646 = vpack.c.b16 %v6442, %v6438
  %v6647 = vpack.c.b16 %v6443, %v6439
  %v6648 = vpack.c.b16 %v6448, %v6444
  %v6649 = vpack.c.b16 %v6449, %v6445
  %v6650 = vpack.c.b16 %v6450, %v6446
  %v6651 = vpack.c.b16 %v6451, %v6447
  %v6652 = vpack.c.b16 %v6456, %v6452
  %v6653 = vpack.c.b16 %v6457, %v6453
  %v6654 = vpack.c.b16 %v6458, %v6454
  %v6655 = vpack.c.b16 %v6459, %v6455
  %v6656 = vpack.c.b16 %v6464, %v6460
  %v6657 = vpack.c.b16 %v6465, %v6461
  %v6658 = vpack.c.b16 %v6466, %v6462
  %v6659 = vpack.c.b16 %v6467, %v6463
  %v6660 = vpack.c.b16 %v6472, %v6468
  %v6661 = vpack.c.b16 %v6473, %v6469
  %v6662 = vpack.c.b16 %v6474, %v6470
  %v6663 = vpack.c.b16 %v6475, %v6471
  %v6664 = vpack.c.b16 %v6480, %v6476
  %v6665 = vpack.c.b16 %v6481, %v6477
  %v6666 = vpack.c.b16 %v6482, %v6478
  %v6667 = vpack.c.b16 %v6483, %v6479
  %v6668 = vpack.c.b16 %v6488, %v6484
  %v6669 = vpack.c.b16 %v6489, %v6485
  %v6670 = vpack.c.b16 %v6490, %v6486
  %v6671 = vpack.c.b16 %v6491, %v6487
  %v6672 = vpack.c.b16 %v6496, %v6492
  %v6673 = vpack.c.b16 %v6497, %v6493
  %v6674 = vpack.c.b16 %v6498, %v6494
  %v6675 = vpack.c.b16 %v6499, %v6495
  %v6676 = vpack.c.b16 %v6504, %v6500
  %v6677 = vpack.c.b16 %v6505, %v6501
  %v6678 = vpack.c.b16 %v6506, %v6502
  %v6679 = vpack.c.b16 %v6507, %v6503
  %v6680 = vpack.c.b16 %v6512, %v6508
  %v6681 = vpack.c.b16 %v6513, %v6509
  %v6682 = vpack.c.b16 %v6514, %v6510
  %v6683 = vpack.c.b16 %v6515, %v6511
  %v6684 = vpack.c.b16 %v6520, %v6516
  %v6685 = vpack.c.b16 %v6521, %v6517
  %v6686 = vpack.c.b16 %v6522, %v6518
  %v6687 = vpack.c.b16 %v6523, %v6519
  %v6688 = vpack.c.b16 %v6528, %v6524
  %v6689 = vpack.c.b16 %v6529, %v6525
  %v6690 = vpack.c.b16 %v6530, %v6526
  %v6691 = vpack.c.b16 %v6531, %v6527
  %v6692 = vpack.c.b16 %v6536, %v6532
  %v6693 = vpack.c.b16 %v6537, %v6533
  %v6694 = vpack.c.b16 %v6538, %v6534
  %v6695 = vpack.c.b16 %v6539, %v6535
  %v6696 = vpack.c.b16 %v6544, %v6540
  %v6697 = vpack.c.b16 %v6545, %v6541
  %v6698 = vpack.c.b16 %v6546, %v6542
  %v6699 = vpack.c.b16 %v6547, %v6543
  %v6700 = vpack.c.b16 %v6552, %v6548
  %v6701 = vpack.c.b16 %v6553, %v6549
  %v6702 = vpack.c.b16 %v6554, %v6550
  %v6703 = vpack.c.b16 %v6555, %v6551
  %v6704 = vpack.c.b16 %v6560, %v6556
  %v6705 = vpack.c.b16 %v6561, %v6557
  %v6706 = vpack.c.b16 %v6562, %v6558
  %v6707 = vpack.c.b16 %v6563, %v6559
  %v6708 = vpack.c.b16 %v6568, %v6564
  %v6709 = vpack.c.b16 %v6569, %v6565
  %v6710 = vpack.c.b16 %v6570, %v6566
  %v6711 = vpack.c.b16 %v6571, %v6567
  %v6712 = vpack.c.b16 %v6576, %v6572
  %v6713 = vpack.c.b16 %v6577, %v6573
  %v6714 = vpack.c.b16 %v6578, %v6574
  %v6715 = vpack.c.b16 %v6579, %v6575
  %v6716 = vpack.c.b16 %v6584, %v6580
  %v6717 = vpack.c.b16 %v6585, %v6581
  %v6718 = vpack.c.b16 %v6586, %v6582
  %v6719 = vpack.c.b16 %v6587, %v6583
  %v6720 = vpack.c.b16 %v6592, %v6588
  %v6721 = vpack.c.b16 %v6593, %v6589
  %v6722 = vpack.c.b16 %v6594, %v6590
  %v6723 = vpack.c.b16 %v6595, %v6591
  %6852 = vmatprep.subr.bf16.mxu0 %v6597
  %6853 = vmatpush1.bf16.msra.mxu0 %v6596
  %6854 = vmatprep.subr.bf16.mxu0 %v6601
  %6855 = vmatpush1.bf16.msra.mxu0 %v6600
  %6856 = vmatprep.subr.bf16.mxu0 %v6605
  %6857 = vmatpush1.bf16.msra.mxu0 %v6604
  %6858 = vmatprep.subr.bf16.mxu0 %v6609
  %6859 = vmatpush1.bf16.msra.mxu0 %v6608
  %6860 = vmatprep.subr.bf16.mxu0 %v6613
  %6861 = vmatpush1.bf16.msra.mxu0 %v6612
  %6862 = vmatprep.subr.bf16.mxu0 %v6617
  %6863 = vmatpush1.bf16.msra.mxu0 %v6616
  %6864 = vmatprep.subr.bf16.mxu0 %v6621
  %6865 = vmatpush1.bf16.msra.mxu0 %v6620
  %6866 = vmatprep.subr.bf16.mxu0 %v6625
  %6867 = vmatpush1.bf16.msra.mxu0 %v6624
  %6868 = vmatprep.subr.bf16.mxu0 %v6629
  %6869 = vmatpush1.bf16.msra.mxu0 %v6628
  %6870 = vmatprep.subr.bf16.mxu0 %v6633
  %6871 = vmatpush1.bf16.msra.mxu0 %v6632
  %6872 = vmatprep.subr.bf16.mxu0 %v6637
  %6873 = vmatpush1.bf16.msra.mxu0 %v6636
  %6874 = vmatprep.subr.bf16.mxu0 %v6641
  %6875 = vmatpush1.bf16.msra.mxu0 %v6640
  %6876 = vmatprep.subr.bf16.mxu0 %v6645
  %6877 = vmatpush1.bf16.msra.mxu0 %v6644
  %6878 = vmatprep.subr.bf16.mxu0 %v6649
  %6879 = vmatpush1.bf16.msra.mxu0 %v6648
  %6880 = vmatprep.subr.bf16.mxu0 %v6653
  %6881 = vmatpush1.bf16.msra.mxu0 %v6652
  %6882 = vmatprep.subr.bf16.mxu0 %v6657
  %6883 = vmatpush1.bf16.msra.mxu0 %v6656
  %6884 = vmatprep.mubr.bf16.mxu0 %v6185
  %6885 = vmatmul.mubr.bf16.gmra.mrb[0].mxu0 %v6182
  %v6886 = vpop.f32.mrb[0].mxu0
  %v6887 = vadd.f32 0.0, %v6886
  %v6888 = vpop.f32.mrb[0].mxu0
  %v6889 = vadd.f32 0.0, %v6888
  %v6890 = vpop.f32.mrb[0].mxu0
  %v6891 = vadd.f32 0.0, %v6890
  %v6892 = vpop.f32.mrb[0].mxu0
  %v6893 = vadd.f32 0.0, %v6892
  %6894 = vmatprep.mubr.bf16.mxu0 %v6195
  %6895 = vmatmul.mubr.bf16.gmra.mrb[0].mxu0 %v6193
  %v6896 = vpop.f32.mrb[0].mxu0
  %v6897 = vpop.f32.mrb[0].mxu0
  %v6898 = vpop.f32.mrb[0].mxu0
  %v6899 = vadd.f32 0.0, %v6898
  %v6900 = vpop.f32.mrb[0].mxu0
  %v6901 = vadd.f32 0.0, %v6900
  %6902 = vmatprep.mubr.bf16.mxu0 %v6194
  %6903 = vmatmul.mubr.bf16.gmra.mrb[0].mxu0 %v6192
  %v6904 = vpop.f32.mrb[0].mxu0
  %v6905 = vadd.f32 0.0, %v6904
  %v6906 = vpop.f32.mrb[0].mxu0
  %v6907 = vadd.f32 0.0, %v6906
  %v6908 = vpop.f32.mrb[0].mxu0
  %v6909 = vpop.f32.mrb[0].mxu0
  %6910 = vdwg.mxu0
  %6911 = vmatprep.subr.bf16.mxu0 %v6661
  %6912 = vmatpush1.bf16.msra.mxu0 %v6660
  %6913 = vmatprep.subr.bf16.mxu0 %v6665
  %6914 = vmatpush1.bf16.msra.mxu0 %v6664
  %6915 = vmatprep.subr.bf16.mxu0 %v6669
  %6916 = vmatpush1.bf16.msra.mxu0 %v6668
  %6917 = vmatprep.subr.bf16.mxu0 %v6673
  %6918 = vmatpush1.bf16.msra.mxu0 %v6672
  %6919 = vmatprep.subr.bf16.mxu0 %v6677
  %6920 = vmatpush1.bf16.msra.mxu0 %v6676
  %6921 = vmatprep.subr.bf16.mxu0 %v6681
  %6922 = vmatpush1.bf16.msra.mxu0 %v6680
  %6923 = vmatprep.subr.bf16.mxu0 %v6685
  %6924 = vmatpush1.bf16.msra.mxu0 %v6684
  %6925 = vmatprep.subr.bf16.mxu0 %v6689
  %6926 = vmatpush1.bf16.msra.mxu0 %v6688
  %6927 = vmatprep.subr.bf16.mxu0 %v6693
  %6928 = vmatpush1.bf16.msra.mxu0 %v6692
  %6929 = vmatprep.subr.bf16.mxu0 %v6697
  %6930 = vmatpush1.bf16.msra.mxu0 %v6696
  %6931 = vmatprep.subr.bf16.mxu0 %v6701
  %6932 = vmatpush1.bf16.msra.mxu0 %v6700
  %6933 = vmatprep.subr.bf16.mxu0 %v6705
  %6934 = vmatpush1.bf16.msra.mxu0 %v6704
  %6935 = vmatprep.subr.bf16.mxu0 %v6709
  %6936 = vmatpush1.bf16.msra.mxu0 %v6708
  %6937 = vmatprep.subr.bf16.mxu0 %v6713
  %6938 = vmatpush1.bf16.msra.mxu0 %v6712
  %6939 = vmatprep.subr.bf16.mxu0 %v6717
  %6940 = vmatpush1.bf16.msra.mxu0 %v6716
  %6941 = vmatprep.subr.bf16.mxu0 %v6721
  %6942 = vmatpush1.bf16.msra.mxu0 %v6720
  %6943 = vmatprep.mubr.bf16.mxu0 %v6191
  %6944 = vmatmul.mubr.bf16.gmra.mrb[0].mxu0 %v6188
  %v6945 = vpop.f32.mrb[0].mxu0
  %v6946 = vadd.f32 %v6887, %v6945
  %v6947 = vpop.f32.mrb[0].mxu0
  %v6948 = vadd.f32 %v6889, %v6947
  %v6949 = vpop.f32.mrb[0].mxu0
  %v6950 = vadd.f32 %v6891, %v6949
  %v6951 = vpop.f32.mrb[0].mxu0
  %v6952 = vadd.f32 %v6893, %v6951
  %6953 = vmatprep.mubr.bf16.mxu0 %v6199
  %6954 = vmatmul.mubr.bf16.gmra.mrb[0].mxu0 %v6197
  %v6955 = vpop.f32.mrb[0].mxu0
  %v6956 = vpop.f32.mrb[0].mxu0
  %v6957 = vpop.f32.mrb[0].mxu0
  %v6958 = vadd.f32 %v6899, %v6957
  %v6959 = vpop.f32.mrb[0].mxu0
  %v6960 = vadd.f32 %v6901, %v6959
  %6961 = vmatprep.mubr.bf16.mxu0 %v6198
  %6962 = vmatmul.mubr.bf16.gmra.mrb[0].mxu0 %v6196
  %v6963 = vpop.f32.mrb[0].mxu0
  %v6964 = vadd.f32 %v6905, %v6963
  %v6965 = vpop.f32.mrb[0].mxu0
  %v6966 = vadd.f32 %v6907, %v6965
  %v6967 = vpop.f32.mrb[0].mxu0
  %v6968 = vpop.f32.mrb[0].mxu0
  %6969 = vdwg.mxu0
  %6970 = vmatprep.subr.bf16.mxu0 %v6599
  %6971 = vmatpush1.bf16.msra.mxu0 %v6598
  %6972 = vmatprep.subr.bf16.mxu0 %v6603
  %6973 = vmatpush1.bf16.msra.mxu0 %v6602
  %6974 = vmatprep.subr.bf16.mxu0 %v6607
  %6975 = vmatpush1.bf16.msra.mxu0 %v6606
  %6976 = vmatprep.subr.bf16.mxu0 %v6611
  %6977 = vmatpush1.bf16.msra.mxu0 %v6610
  %6978 = vmatprep.subr.bf16.mxu0 %v6615
  %6979 = vmatpush1.bf16.msra.mxu0 %v6614
  %6980 = vmatprep.subr.bf16.mxu0 %v6619
  %6981 = vmatpush1.bf16.msra.mxu0 %v6618
  %6982 = vmatprep.subr.bf16.mxu0 %v6623
  %6983 = vmatpush1.bf16.msra.mxu0 %v6622
  %6984 = vmatprep.subr.bf16.mxu0 %v6627
  %6985 = vmatpush1.bf16.msra.mxu0 %v6626
  %6986 = vmatprep.subr.bf16.mxu0 %v6631
  %6987 = vmatpush1.bf16.msra.mxu0 %v6630
  %6988 = vmatprep.subr.bf16.mxu0 %v6635
  %6989 = vmatpush1.bf16.msra.mxu0 %v6634
  %6990 = vmatprep.subr.bf16.mxu0 %v6639
  %6991 = vmatpush1.bf16.msra.mxu0 %v6638
  %6992 = vmatprep.subr.bf16.mxu0 %v6643
  %6993 = vmatpush1.bf16.msra.mxu0 %v6642
  %6994 = vmatprep.subr.bf16.mxu0 %v6647
  %6995 = vmatpush1.bf16.msra.mxu0 %v6646
  %6996 = vmatprep.subr.bf16.mxu0 %v6651
  %6997 = vmatpush1.bf16.msra.mxu0 %v6650
  %6998 = vmatprep.subr.bf16.mxu0 %v6655
  %6999 = vmatpush1.bf16.msra.mxu0 %v6654
  %7000 = vmatprep.subr.bf16.mxu0 %v6659
  %7001 = vmatpush1.bf16.msra.mxu0 %v6658
  %7002 = vmatprep.mubr.bf16.mxu0 %v6185
  %7003 = vmatmul.mubr.bf16.gmra.mrb[0].mxu0 %v6182
  %v7004 = vpop.f32.mrb[0].mxu0
  %v7005 = vadd.f32 0.0, %v7004
  %v7006 = vpop.f32.mrb[0].mxu0
  %v7007 = vadd.f32 0.0, %v7006
  %v7008 = vpop.f32.mrb[0].mxu0
  %v7009 = vadd.f32 0.0, %v7008
  %v7010 = vpop.f32.mrb[0].mxu0
  %v7011 = vadd.f32 0.0, %v7010
  %7012 = vmatprep.mubr.bf16.mxu0 %v6195
  %7013 = vmatmul.mubr.bf16.gmra.mrb[0].mxu0 %v6193
  %v7014 = vpop.f32.mrb[0].mxu0
  %v7015 = vpop.f32.mrb[0].mxu0
  %v7016 = vpop.f32.mrb[0].mxu0
  %v7017 = vadd.f32 0.0, %v7016
  %v7018 = vpop.f32.mrb[0].mxu0
  %v7019 = vadd.f32 0.0, %v7018
  %7020 = vmatprep.mubr.bf16.mxu0 %v6194
  %7021 = vmatmul.mubr.bf16.gmra.mrb[0].mxu0 %v6192
  %v7022 = vpop.f32.mrb[0].mxu0
  %v7023 = vadd.f32 0.0, %v7022
  %v7024 = vpop.f32.mrb[0].mxu0
  %v7025 = vadd.f32 0.0, %v7024
  %v7026 = vpop.f32.mrb[0].mxu0
  %v7027 = vpop.f32.mrb[0].mxu0
  %7028 = vdwg.mxu0
  %7029 = vmatprep.subr.bf16.mxu0 %v6663
  %7030 = vmatpush1.bf16.msra.mxu0 %v6662
  %7031 = vmatprep.subr.bf16.mxu0 %v6667
  %7032 = vmatpush1.bf16.msra.mxu0 %v6666
  %7033 = vmatprep.subr.bf16.mxu0 %v6671
  %7034 = vmatpush1.bf16.msra.mxu0 %v6670
  %7035 = vmatprep.subr.bf16.mxu0 %v6675
  %7036 = vmatpush1.bf16.msra.mxu0 %v6674
  %7037 = vmatprep.subr.bf16.mxu0 %v6679
  %7038 = vmatpush1.bf16.msra.mxu0 %v6678
  %7039 = vmatprep.subr.bf16.mxu0 %v6683
  %7040 = vmatpush1.bf16.msra.mxu0 %v6682
  %7041 = vmatprep.subr.bf16.mxu0 %v6687
  %7042 = vmatpush1.bf16.msra.mxu0 %v6686
  %7043 = vmatprep.subr.bf16.mxu0 %v6691
  %7044 = vmatpush1.bf16.msra.mxu0 %v6690
  %7045 = vmatprep.subr.bf16.mxu0 %v6695
  %7046 = vmatpush1.bf16.msra.mxu0 %v6694
  %7047 = vmatprep.subr.bf16.mxu0 %v6699
  %7048 = vmatpush1.bf16.msra.mxu0 %v6698
  %7049 = vmatprep.subr.bf16.mxu0 %v6703
  %7050 = vmatpush1.bf16.msra.mxu0 %v6702
  %7051 = vmatprep.subr.bf16.mxu0 %v6707
  %7052 = vmatpush1.bf16.msra.mxu0 %v6706
  %7053 = vmatprep.subr.bf16.mxu0 %v6711
  %7054 = vmatpush1.bf16.msra.mxu0 %v6710
  %7055 = vmatprep.subr.bf16.mxu0 %v6715
  %7056 = vmatpush1.bf16.msra.mxu0 %v6714
  %7057 = vmatprep.subr.bf16.mxu0 %v6719
  %7058 = vmatpush1.bf16.msra.mxu0 %v6718
  %7059 = vmatprep.subr.bf16.mxu0 %v6723
  %7060 = vmatpush1.bf16.msra.mxu0 %v6722
  %7061 = vmatprep.mubr.bf16.mxu0 %v6191
  %7062 = vmatmul.mubr.bf16.gmra.mrb[0].mxu0 %v6188
  %v7063 = vpop.f32.mrb[0].mxu0
  %v7064 = vadd.f32 %v7005, %v7063
  %v7065 = vpop.f32.mrb[0].mxu0
  %v7066 = vadd.f32 %v7007, %v7065
  %v7067 = vpop.f32.mrb[0].mxu0
  %v7068 = vadd.f32 %v7009, %v7067
  %v7069 = vpop.f32.mrb[0].mxu0
  %v7070 = vadd.f32 %v7011, %v7069
  %7071 = vmatprep.mubr.bf16.mxu0 %v6199
  %7072 = vmatmul.mubr.bf16.gmra.mrb[0].mxu0 %v6197
  %v7073 = vpop.f32.mrb[0].mxu0
  %v7074 = vpop.f32.mrb[0].mxu0
  %v7075 = vpop.f32.mrb[0].mxu0
  %v7076 = vadd.f32 %v7017, %v7075
  %v7077 = vpop.f32.mrb[0].mxu0
  %v7078 = vadd.f32 %v7019, %v7077
  %7079 = vmatprep.mubr.bf16.mxu0 %v6198
  %7080 = vmatmul.mubr.bf16.gmra.mrb[0].mxu0 %v6196
  %v7081 = vpop.f32.mrb[0].mxu0
  %v7082 = vadd.f32 %v7023, %v7081
  %v7083 = vpop.f32.mrb[0].mxu0
  %v7084 = vadd.f32 %v7025, %v7083
  %v7085 = vpop.f32.mrb[0].mxu0
  %v7086 = vpop.f32.mrb[0].mxu0
  %7087 = vdwg.mxu0
  %v7088 = vadd.f32 %v5881, %v6946
  %v7089 = vadd.f32 %v5883, %v6948
  %v7090 = vadd.f32 %v5999, %v7064
  %v7091 = vadd.f32 %v6001, %v7066
  %v7092 = vadd.f32 %v5885, %v6950
  %v7093 = vadd.f32 %v5887, %v6952
  %v7094 = vadd.f32 %v6003, %v7068
  %v7095 = vadd.f32 %v6005, %v7070
  %v7096 = vadd.f32 %v5893, %v6958
  %v7097 = vadd.f32 %v5895, %v6960
  %v7098 = vadd.f32 %v6011, %v7076
  %v7099 = vadd.f32 %v6013, %v7078
  %v7100 = vadd.f32 %v5899, %v6964
  %v7101 = vadd.f32 %v5901, %v6966
  %v7102 = vadd.f32 %v6017, %v7082
  %v7103 = vadd.f32 %v6019, %v7084
  %v7104 = vld [vmem:[%s0] sm:$0xff]
  %v7105 = vld [vmem:[%s0 + $0x8] sm:$0xff]
  %v7106 = vld [vmem:[%s0 + $0x10] sm:$0xff]
  %v7107 = vld [vmem:[%s0 + $0x18] sm:$0xff]
  %v7108 = vld [vmem:[%s0 + $0x20] sm:$0xff]
  %v7109 = vld [vmem:[%s0 + $0x28] sm:$0xff]
  %v7110 = vld [vmem:[%s0 + $0x30] sm:$0xff]
  %v7111 = vld [vmem:[%s0 + $0x38] sm:$0xff]
  %v7112 = vadd.f32 %v7104, %v7088
  %v7113 = vadd.f32 %v7105, %v7089
  %v7114 = vadd.f32 %v7106, %v7090
  %v7115 = vadd.f32 %v7107, %v7091
  %v7116 = vadd.f32 %v7108, %v7092
  %v7117 = vadd.f32 %v7109, %v7093
  %v7118 = vadd.f32 %v7110, %v7094
  %v7119 = vadd.f32 %v7111, %v7095
  %v7120 = vld [vmem:[%s7] sm:$0xf]
  %v7122 = vlaneseq
  %v7123 = vshrl.u32 %v7122, 7
  %v7124 = vsub.s32 0, %v7123
  %v7125 = vrot.slane %v7120, %v7124
  %v7126 = vlaneseq
  %v7127 = vshrl.u32 %v7126, 7
  %v7128 = vsub.s32 1, %v7127
  %v7129 = vrot.slane %v7120, %v7128
  %v7130 = vlaneseq
  %v7131 = vshrl.u32 %v7130, 7
  %v7132 = vsub.s32 2, %v7131
  %v7133 = vrot.slane %v7120, %v7132
  %v7134 = vlaneseq
  %v7135 = vshrl.u32 %v7134, 7
  %v7136 = vsub.s32 3, %v7135
  %v7137 = vrot.slane %v7120, %v7136
  %v7142 = vadd.f32 %v7112, %v7125
  %v7143 = vadd.f32 %v7113, %v7129
  %v7144 = vadd.f32 %v7114, %v7133
  %v7145 = vadd.f32 %v7115, %v7137
  %v7146 = vadd.f32 %v7116, %v7125
  %v7147 = vadd.f32 %v7117, %v7129
  %v7148 = vadd.f32 %v7118, %v7133
  %v7149 = vadd.f32 %v7119, %v7137
  %7150 = vst [vmem:[%s8] sm:$0xff] %v7142
  %7151 = vst [vmem:[%s8 + $0x8] sm:$0xff] %v7143
  %7152 = vst [vmem:[%s8 + $0x10] sm:$0xff] %v7144
  %7153 = vst [vmem:[%s8 + $0x18] sm:$0xff] %v7145
  %7154 = vst [vmem:[%s8 + $0x20] sm:$0xff] %v7146
  %7155 = vst [vmem:[%s8 + $0x28] sm:$0xff] %v7147
  %7156 = vst [vmem:[%s8 + $0x30] sm:$0xff] %v7148
  %7157 = vst [vmem:[%s8 + $0x38] sm:$0xff] %v7149
  %v7158 = vld [vmem:[%s159] sm:$0xff]
  %v7159 = vld [vmem:[%s159 + $0x8] sm:$0xff]
  %v7160 = vld [vmem:[%s159 + $0x10] sm:$0xff]
  %v7161 = vld [vmem:[%s159 + $0x18] sm:$0xff]
  %v7162 = vld [vmem:[%s159 + $0x20] sm:$0xff]
  %v7163 = vld [vmem:[%s159 + $0x28] sm:$0xff]
  %v7164 = vld [vmem:[%s159 + $0x30] sm:$0xff]
  %v7165 = vld [vmem:[%s159 + $0x38] sm:$0xff]
  %v7166 = vadd.f32 %v7158, %v7096
  %v7167 = vadd.f32 %v7159, %v7097
  %v7168 = vadd.f32 %v7160, %v7098
  %v7169 = vadd.f32 %v7161, %v7099
  %v7170 = vadd.f32 %v7162, %v7100
  %v7171 = vadd.f32 %v7163, %v7101
  %v7172 = vadd.f32 %v7164, %v7102
  %v7173 = vadd.f32 %v7165, %v7103
  %v7174 = vld [vmem:[%s7] sm:$0xf]
  %v7176 = vlaneseq
  %v7177 = vshrl.u32 %v7176, 7
  %v7178 = vsub.s32 0, %v7177
  %v7179 = vrot.slane %v7174, %v7178
  %v7180 = vlaneseq
  %v7181 = vshrl.u32 %v7180, 7
  %v7182 = vsub.s32 1, %v7181
  %v7183 = vrot.slane %v7174, %v7182
  %v7184 = vlaneseq
  %v7185 = vshrl.u32 %v7184, 7
  %v7186 = vsub.s32 2, %v7185
  %v7187 = vrot.slane %v7174, %v7186
  %v7188 = vlaneseq
  %v7189 = vshrl.u32 %v7188, 7
  %v7190 = vsub.s32 3, %v7189
  %v7191 = vrot.slane %v7174, %v7190
  %v7196 = vadd.f32 %v7166, %v7179
  %v7197 = vadd.f32 %v7167, %v7183
  %v7198 = vadd.f32 %v7168, %v7187
  %v7199 = vadd.f32 %v7169, %v7191
  %v7200 = vadd.f32 %v7170, %v7179
  %v7201 = vadd.f32 %v7171, %v7183
  %v7202 = vadd.f32 %v7172, %v7187
  %v7203 = vadd.f32 %v7173, %v7191
  %s7204 = scalar_lea.vmem %s8, 64
  %7205 = vst [vmem:[%s7204] sm:$0xff] %v7196
  %7206 = vst [vmem:[%s7204 + $0x8] sm:$0xff] %v7197
  %7207 = vst [vmem:[%s7204 + $0x10] sm:$0xff] %v7198
  %7208 = vst [vmem:[%s7204 + $0x18] sm:$0xff] %v7199
  %7209 = vst [vmem:[%s7204 + $0x20] sm:$0xff] %v7200
  %7210 = vst [vmem:[%s7204 + $0x28] sm:$0xff] %v7201
  %7211 = vst [vmem:[%s7204 + $0x30] sm:$0xff] %v7202
  %7212 = vst [vmem:[%s7204 + $0x38] sm:$0xff] %v7203
  // Predicated region
  $region34: #{residual_block_pallas.1} parent=0 // pred_check
    _
  $region35: #{residual_block_pallas.1} parent=0 // pred_check_branch
    %7214 = sbr.rel (0) target = $region37
  $region36: #{residual_block_pallas.1} parent=0 // pred_region
    _
  $region37: #{residual_block_pallas.1} parent=0 // pred_fallthru
    _
  // Predicated region
  $region38: #{residual_block_pallas.1} parent=0 // pred_check
    _
  $region39: #{residual_block_pallas.1} parent=0 // pred_check_branch
    %7216 = sbr.rel (0) target = $region41
  $region40: #{residual_block_pallas.1} parent=0 // pred_region
    _
  $region41: #{residual_block_pallas.1} parent=0 // pred_fallthru
    _

</llo_original>
